<compile_context>
chip_gen: v7x
topology: tpu7x:2x2x1
jax: 0.10.0
libtpu: 0.0.40
codegen_flags: <defaults>
</compile_context>

<pallas_src>
import functools
import numpy as np
import jax
import jax.numpy as jnp
from jax import lax
from jax.experimental import pallas as pl
from jax.experimental.pallas import tpu as pltpu

LN_EPS = 1e-5

PARAM_ORDER = ("ln1_g", "ln1_b", "w_qkv", "b_qkv", "w_o", "b_o",
               "ln2_g", "ln2_b", "w_fc", "b_fc", "w_pj", "b_pj")


def _layernorm(v, gamma, beta):
    mu = jnp.mean(v, axis=-1, keepdims=True)
    var = jnp.mean(jnp.square(v - mu), axis=-1, keepdims=True)
    return (v - mu) * lax.rsqrt(var + LN_EPS) * gamma + beta


def resblock_stack_kernel(x_ref, ln1g_ref, ln1b_ref, wqkv_ref, bqkv_ref,
                          wo_ref, bo_ref, ln2g_ref, ln2b_ref, wfc_ref,
                          bfc_ref, wpj_ref, bpj_ref, o_ref, x_vmem,
                          *, n_head, compute_dtype):
    """Grid = (batch, layer).  x_ref/o_ref blocks: (1, L, E).  Weight refs are
    (1, ...) slices of layer-stacked arrays.  x_vmem: (L, E) f32 residual
    stream, resident across the (innermost) layer axis."""
    layer = pl.program_id(1)
    n_layers = pl.num_programs(1)
    cdt = compute_dtype

    @pl.when(layer == 0)
    def _():
        x_vmem[...] = x_ref[0].astype(jnp.float32)

    x = x_vmem[...]                                   # (L, E) float32
    L, E = x.shape
    dh = E // n_head

    # ---- ln_1 + multi-head self-attention --------------------------------
    h1 = _layernorm(x, ln1g_ref[0], ln1b_ref[0]).astype(cdt)
    qkv = jnp.dot(h1, wqkv_ref[0], preferred_element_type=jnp.float32)
    qkv = qkv + bqkv_ref[0]                           # (L, 3E); q already scaled
    q = jnp.transpose(qkv[:, :E].reshape(L, n_head, dh), (1, 0, 2)).astype(cdt)
    k = jnp.transpose(qkv[:, E:2 * E].reshape(L, n_head, dh), (1, 0, 2)).astype(cdt)
    v = jnp.transpose(qkv[:, 2 * E:].reshape(L, n_head, dh), (1, 0, 2)).astype(cdt)

    s = jnp.einsum("hqd,hkd->hqk", q, k,
                   preferred_element_type=jnp.float32)        # (H, L, L)
    # TODO(synk): attn_mask is None in this configuration; a non-None additive
    # mask would simply be added to `s` here before the softmax.
    s = s - jnp.max(s, axis=-1, keepdims=True)
    p = jnp.exp(s)
    # single reciprocal + multiply (approx=True would route to the EUP slot).
    p = p * pl.reciprocal(jnp.sum(p, axis=-1, keepdims=True))
    ctx = jnp.einsum("hqk,hkd->hqd", p.astype(cdt), v,
                     preferred_element_type=jnp.float32)      # (H, L, dh)
    att = jnp.transpose(ctx, (1, 0, 2)).reshape(L, E).astype(cdt)
    att = jnp.dot(att, wo_ref[0], preferred_element_type=jnp.float32)
    att = att + bo_ref[0]
    x = x + att                                       # residual 1 (f32)

    # ---- ln_2 + MLP (c_fc -> QuickGELU -> c_proj) -------------------------
    h2 = _layernorm(x, ln2g_ref[0], ln2b_ref[0]).astype(cdt)
    f = jnp.dot(h2, wfc_ref[0], preferred_element_type=jnp.float32)
    f = f + bfc_ref[0]
    f = f * jax.nn.sigmoid(1.702 * f)                 # QuickGELU (f32 / EUP)
    m = jnp.dot(f.astype(cdt), wpj_ref[0], preferred_element_type=jnp.float32)
    m = m + bpj_ref[0]
    x = x + m                                         # residual 2 (f32)

    x_vmem[...] = x

    @pl.when(layer == n_layers - 1)
    def _():
        o_ref[0] = x.astype(o_ref.dtype)


def prepare_params(layer_params, n_head, compute_dtype):
    """Host-side weight prep: transpose to input-major (no in-kernel .T), fold
    the 1/sqrt(dh) scale into the Q columns of the fused QKV projection, cast
    the large matrices to compute_dtype, and stack all layers along a leading
    layer axis (so one pallas_call covers the whole stack)."""
    E = layer_params[0]["w_o"].shape[0]
    dh = E // n_head
    scale = 1.0 / float(np.sqrt(dh))
    col_scale = jnp.concatenate([jnp.full((E,), scale, jnp.float32),
                                 jnp.ones((2 * E,), jnp.float32)])[None, :]

    def prep(p):
        w_qkv_t = jnp.transpose(p["w_qkv"]) * col_scale          # (E, 3E)
        b_qkv = p["b_qkv"].reshape(1, 3 * E) * col_scale
        return {
            "ln1_g": p["ln1_g"].reshape(1, E).astype(jnp.float32),
            "ln1_b": p["ln1_b"].reshape(1, E).astype(jnp.float32),
            "w_qkv": w_qkv_t.astype(compute_dtype),
            "b_qkv": b_qkv.astype(jnp.float32),
            "w_o":   jnp.transpose(p["w_o"]).astype(compute_dtype),   # (E, E)
            "b_o":   p["b_o"].reshape(1, E).astype(jnp.float32),
            "ln2_g": p["ln2_g"].reshape(1, E).astype(jnp.float32),
            "ln2_b": p["ln2_b"].reshape(1, E).astype(jnp.float32),
            "w_fc":  jnp.transpose(p["w_fc"]).astype(compute_dtype),  # (E, 4E)
            "b_fc":  p["b_fc"].reshape(1, 4 * E).astype(jnp.float32),
            "w_pj":  jnp.transpose(p["w_pj"]).astype(compute_dtype),  # (4E, E)
            "b_pj":  p["b_pj"].reshape(1, E).astype(jnp.float32),
        }

    per_layer = [prep(p) for p in layer_params]
    return {k: jnp.stack([q[k] for q in per_layer], axis=0) for k in PARAM_ORDER}


def run_transformer(x_nle, stacked, n_head, compute_dtype):
    """x_nle: (N, L, E) float32.  stacked: dict of layer-stacked params."""
    N, L, E = x_nle.shape
    n_layers = int(stacked["w_qkv"].shape[0])

    def layer_spec(arr):
        return pl.BlockSpec((1,) + tuple(arr.shape[1:]), lambda b, l: (l, 0, 0))

    in_specs = [pl.BlockSpec((1, L, E), lambda b, l: (b, 0, 0))]
    args = [x_nle]
    for name in PARAM_ORDER:
        arr = stacked[name]
        in_specs.append(layer_spec(arr))
        args.append(arr)

    # Explicit scoped-VMEM budget: double-buffered per-layer weights + blocks
    # + intermediates, with headroom; capped at 64 MiB so it also fits v7x.
    w_bytes = sum(int(np.prod(stacked[n].shape[1:])) * stacked[n].dtype.itemsize
                  for n in PARAM_ORDER)
    act_bytes = (5 * L * E * 4                 # x in/out blocks (2x buffered) + scratch
                 + L * 3 * E * 4               # fused qkv
                 + 2 * n_head * L * L * 4      # scores + probs
                 + 2 * L * 4 * E * 4)          # MLP hidden (+ gelu)
    vmem_limit = int(min(64 * 2 ** 20,
                         max(2 * w_bytes + act_bytes + (4 << 20), 32 * 2 ** 20)))

    kernel = functools.partial(resblock_stack_kernel, n_head=n_head,
                               compute_dtype=compute_dtype)
    return pl.pallas_call(
        kernel,
        out_shape=jax.ShapeDtypeStruct((N, L, E), jnp.float32),
        grid_spec=pltpu.PrefetchScalarGridSpec(
            num_scalar_prefetch=0,
            grid=(N, n_layers),                # layer axis innermost: x stays resident
            in_specs=in_specs,
            out_specs=pl.BlockSpec((1, L, E), lambda b, l: (b, 0, 0)),
            scratch_shapes=[pltpu.VMEM((L, E), jnp.float32)],
        ),
        compiler_params=pltpu.CompilerParams(
            dimension_semantics=("parallel", "arbitrary"),
            vmem_limit_bytes=vmem_limit),
    )(*args)


def transformer_forward(x_lne, layer_params, n_head, compute_dtype=jnp.float32):
    """Pallas Transformer forward.  x_lne: (L, N, E), like the PyTorch module."""
    # emb_dropout(p=0.0) -> identity; checkpoint_sequential is forward-transparent.
    stacked = prepare_params(layer_params, n_head, compute_dtype)
    x = jnp.transpose(x_lne, (1, 0, 2))        # one (L,N,E)->(N,L,E) pass for the whole stack
    y = run_transformer(x, stacked, n_head, compute_dtype)
    return jnp.transpose(y, (1, 0, 2))         # back to (L, N, E)


# ------------------------ pure-JAX reference ------------------------
def ref_forward(x_lne, layer_params, n_head):
    x = jnp.transpose(x_lne, (1, 0, 2))          # (N, L, E)
    N, L, E = x.shape
    dh = E // n_head
    for p in layer_params:
        h1 = _layernorm(x, p["ln1_g"][0], p["ln1_b"][0])
        qkv = h1 @ p["w_qkv"].T + p["b_qkv"][0]
        q, k, v = qkv[..., :E], qkv[..., E:2 * E], qkv[..., 2 * E:]
        q = q.reshape(N, L, n_head, dh) / np.sqrt(dh)
        k = k.reshape(N, L, n_head, dh)
        v = v.reshape(N, L, n_head, dh)
        s = jnp.einsum("nqhd,nkhd->nhqk", q, k)
        pr = jax.nn.softmax(s, axis=-1)
        o = jnp.einsum("nhqk,nkhd->nqhd", pr, v).reshape(N, L, E)
        x = x + (o @ p["w_o"].T + p["b_o"][0])
        h2 = _layernorm(x, p["ln2_g"][0], p["ln2_b"][0])
        f = h2 @ p["w_fc"].T + p["b_fc"][0]
        f = f * jax.nn.sigmoid(1.702 * f)
        x = x + (f @ p["w_pj"].T + p["b_pj"][0])
    return jnp.transpose(x, (1, 0, 2))


def init_layer_params(key, width):
    ks = jax.random.split(key, 8)
    s = 0.02
    return {
        "ln1_g": jnp.ones((1, width), jnp.float32),
        "ln1_b": jnp.zeros((1, width), jnp.float32),
        "w_qkv": s * jax.random.normal(ks[0], (3 * width, width), jnp.float32),
        "b_qkv": s * jax.random.normal(ks[1], (1, 3 * width), jnp.float32),
        "w_o":   s * jax.random.normal(ks[2], (width, width), jnp.float32),
        "b_o":   s * jax.random.normal(ks[3], (1, width), jnp.float32),
        "ln2_g": jnp.ones((1, width), jnp.float32),
        "ln2_b": jnp.zeros((1, width), jnp.float32),
        "w_fc":  s * jax.random.normal(ks[4], (4 * width, width), jnp.float32),
        "b_fc":  s * jax.random.normal(ks[5], (1, 4 * width), jnp.float32),
        "w_pj":  s * jax.random.normal(ks[6], (width, 4 * width), jnp.float32),
        "b_pj":  s * jax.random.normal(ks[7], (1, width), jnp.float32),
    }


if __name__ == "__main__":
    # Small but lane-friendly shapes: seq=16, batch=2, width=128, heads=4, layers=2.
    L, N, WIDTH, HEADS, LAYERS = 16, 2, 128, 4, 2
    key = jax.random.PRNGKey(0)
    kx, *kl = jax.random.split(key, 1 + LAYERS)
    x = jax.random.normal(kx, (L, N, WIDTH), jnp.float32)   # (seq, batch, d_model)
    layer_params = [init_layer_params(k, WIDTH) for k in kl]

    with jax.default_matmul_precision("highest"):
        ref = jax.block_until_ready(ref_forward(x, layer_params, HEADS))

    # Exact (float32) path -- matches the PyTorch module's numerics.
    out = jax.block_until_ready(
        transformer_forward(x, layer_params, HEADS, compute_dtype=jnp.float32))
    np.testing.assert_allclose(np.asarray(out), np.asarray(ref),
                               rtol=5e-4, atol=5e-4)

    # bf16 MXU fast path (v6e/v7x); residual stream, LN and softmax stay f32.
    out_bf16 = jax.block_until_ready(
        transformer_forward(x, layer_params, HEADS, compute_dtype=jnp.bfloat16))
    np.testing.assert_allclose(np.asarray(out_bf16), np.asarray(ref),
                               rtol=2e-2, atol=2e-2)

    print("KERNEL_OK")
</pallas_src>

<mosaic_0001>
module attributes {stable_mosaic.version = 11 : i64} {
  func.func @resblock_stack_kernel(%arg0: i32, %arg1: i32, %arg2: memref<1x16x128xf32, #tpu.memory_space<vmem>>, %arg3: memref<1x1x128xf32, #tpu.memory_space<vmem>>, %arg4: memref<1x1x128xf32, #tpu.memory_space<vmem>>, %arg5: memref<1x128x384xf32, #tpu.memory_space<vmem>>, %arg6: memref<1x1x384xf32, #tpu.memory_space<vmem>>, %arg7: memref<1x128x128xf32, #tpu.memory_space<vmem>>, %arg8: memref<1x1x128xf32, #tpu.memory_space<vmem>>, %arg9: memref<1x1x128xf32, #tpu.memory_space<vmem>>, %arg10: memref<1x1x128xf32, #tpu.memory_space<vmem>>, %arg11: memref<1x128x512xf32, #tpu.memory_space<vmem>>, %arg12: memref<1x1x512xf32, #tpu.memory_space<vmem>>, %arg13: memref<1x512x128xf32, #tpu.memory_space<vmem>>, %arg14: memref<1x1x128xf32, #tpu.memory_space<vmem>>, %arg15: memref<1x16x128xf32, #tpu.memory_space<vmem>>, %arg16: memref<16x128xf32, #tpu.memory_space<vmem>>) attributes {dimension_semantics = [#tpu.dimension_semantics<parallel>, #tpu.dimension_semantics<arbitrary>], iteration_bounds = array<i64: 2, 2>, scalar_prefetch = 0 : i64, scratch_operands = 1 : i64, tpu.core_type = #tpu.core_type<tc>, window_params = [{transform_indices = @transform_0, window_bounds = array<i64: 1, 16, 128>}, {transform_indices = @transform_1, window_bounds = array<i64: 1, 1, 128>}, {transform_indices = @transform_2, window_bounds = array<i64: 1, 1, 128>}, {transform_indices = @transform_3, window_bounds = array<i64: 1, 128, 384>}, {transform_indices = @transform_4, window_bounds = array<i64: 1, 1, 384>}, {transform_indices = @transform_5, window_bounds = array<i64: 1, 128, 128>}, {transform_indices = @transform_6, window_bounds = array<i64: 1, 1, 128>}, {transform_indices = @transform_7, window_bounds = array<i64: 1, 1, 128>}, {transform_indices = @transform_8, window_bounds = array<i64: 1, 1, 128>}, {transform_indices = @transform_9, window_bounds = array<i64: 1, 128, 512>}, {transform_indices = @transform_10, window_bounds = array<i64: 1, 1, 512>}, {transform_indices = @transform_11, window_bounds = array<i64: 1, 512, 128>}, {transform_indices = @transform_12, window_bounds = array<i64: 1, 1, 128>}, {transform_indices = @transform_13, window_bounds = array<i64: 1, 16, 128>}]} {
    %c0_i32 = arith.constant 0 : i32
    %0 = arith.cmpi eq, %arg1, %c0_i32 : i32
    %1 = arith.extui %0 : i1 to i32
    %c0_i32_0 = arith.constant 0 : i32
    %2 = arith.cmpi ne, %1, %c0_i32_0 : i32
    scf.if %2 {
      %c0_60 = arith.constant 0 : index
      %c0_61 = arith.constant 0 : index
      %c0_62 = arith.constant 0 : index
      %121 = vector.load %arg2[%c0_60, %c0_61, %c0_62] : memref<1x16x128xf32, #tpu.memory_space<vmem>>, vector<1x16x128xf32>
      %122 = vector.shape_cast %121 : vector<1x16x128xf32> to vector<16x128xf32>
      %c0_63 = arith.constant 0 : index
      %c0_64 = arith.constant 0 : index
      %123 = vector.load %arg16[%c0_63, %c0_64] : memref<16x128xf32, #tpu.memory_space<vmem>>, vector<16x128xf32>
      tpu.vector_store %arg16[%c0_63, %c0_64], %122 {strides = array<i32>} : memref<16x128xf32, #tpu.memory_space<vmem>>, vector<16x128xf32>,
    } else {
    }
    %c0 = arith.constant 0 : index
    %c0_1 = arith.constant 0 : index
    %3 = vector.load %arg16[%c0, %c0_1] : memref<16x128xf32, #tpu.memory_space<vmem>>, vector<16x128xf32>
    %c0_2 = arith.constant 0 : index
    %c0_3 = arith.constant 0 : index
    %c0_4 = arith.constant 0 : index
    %4 = vector.load %arg3[%c0_2, %c0_3, %c0_4] : memref<1x1x128xf32, #tpu.memory_space<vmem>>, vector<1x1x128xf32>
    %5 = vector.shape_cast %4 : vector<1x1x128xf32> to vector<1x128xf32>
    %c0_5 = arith.constant 0 : index
    %c0_6 = arith.constant 0 : index
    %c0_7 = arith.constant 0 : index
    %6 = vector.load %arg4[%c0_5, %c0_6, %c0_7] : memref<1x1x128xf32, #tpu.memory_space<vmem>>, vector<1x1x128xf32>
    %7 = vector.shape_cast %6 : vector<1x1x128xf32> to vector<1x128xf32>
    %cst = arith.constant dense<0.000000e+00> : vector<16xf32>
    %8 = vector.multi_reduction <add>, %3, %cst [1] : vector<16x128xf32> to vector<16xf32>
    %9 = vector.shape_cast %8 : vector<16xf32> to vector<16x1xf32>
    %cst_8 = arith.constant 1.280000e+02 : f32
    %10 = vector.broadcast %cst_8 : f32 to vector<16x1xf32>
    %11 = arith.divf %9, %10 : vector<16x1xf32>
    %12 = vector.broadcast %11 : vector<16x1xf32> to vector<16x128xf32>
    %13 = arith.subf %3, %12 : vector<16x128xf32>
    %14 = arith.mulf %13, %13 : vector<16x128xf32>
    %cst_9 = arith.constant dense<0.000000e+00> : vector<16xf32>
    %15 = vector.multi_reduction <add>, %14, %cst_9 [1] : vector<16x128xf32> to vector<16xf32>
    %16 = vector.shape_cast %15 : vector<16xf32> to vector<16x1xf32>
    %cst_10 = arith.constant 1.280000e+02 : f32
    %17 = vector.broadcast %cst_10 : f32 to vector<16x1xf32>
    %18 = arith.divf %16, %17 : vector<16x1xf32>
    %19 = vector.broadcast %11 : vector<16x1xf32> to vector<16x128xf32>
    %20 = arith.subf %3, %19 : vector<16x128xf32>
    %cst_11 = arith.constant 9.99999974E-6 : f32
    %21 = vector.broadcast %cst_11 : f32 to vector<16x1xf32>
    %22 = arith.addf %18, %21 : vector<16x1xf32>
    %23 = math.rsqrt %22 : vector<16x1xf32>
    %24 = vector.broadcast %23 : vector<16x1xf32> to vector<16x128xf32>
    %25 = arith.mulf %20, %24 : vector<16x128xf32>
    %26 = vector.broadcast %5 : vector<1x128xf32> to vector<16x128xf32>
    %27 = arith.mulf %25, %26 : vector<16x128xf32>
    %28 = vector.broadcast %7 : vector<1x128xf32> to vector<16x128xf32>
    %29 = arith.addf %27, %28 : vector<16x128xf32>
    %c0_12 = arith.constant 0 : index
    %c0_13 = arith.constant 0 : index
    %c0_14 = arith.constant 0 : index
    %30 = vector.load %arg5[%c0_12, %c0_13, %c0_14] : memref<1x128x384xf32, #tpu.memory_space<vmem>>, vector<1x128x384xf32>
    %31 = vector.shape_cast %30 : vector<1x128x384xf32> to vector<128x384xf32>
    %cst_15 = arith.constant dense<0.000000e+00> : vector<16x384xf32>
    %32 = tpu.matmul %29, %31, %cst_15 {dimension_numbers = #tpu.dot_dimension_numbers<[1], [0], [0], [1], [0, 0, 1, 1], [], []>} : vector<16x128xf32>, vector<128x384xf32>, vector<16x384xf32> -> vector<16x384xf32>
    %c0_16 = arith.constant 0 : index
    %c0_17 = arith.constant 0 : index
    %c0_18 = arith.constant 0 : index
    %33 = vector.load %arg6[%c0_16, %c0_17, %c0_18] : memref<1x1x384xf32, #tpu.memory_space<vmem>>, vector<1x1x384xf32>
    %34 = vector.shape_cast %33 : vector<1x1x384xf32> to vector<1x384xf32>
    %35 = vector.broadcast %34 : vector<1x384xf32> to vector<16x384xf32>
    %36 = arith.addf %32, %35 : vector<16x384xf32>
    %37 = vector.extract_strided_slice %36 {offsets = [0, 0], sizes = [16, 128], strides = [1, 1]} : vector<16x384xf32> to vector<16x128xf32>
    %38 = vector.shape_cast %37 : vector<16x128xf32> to vector<16x4x32xf32>
    %39 = tpu.transpose %38, [1, 0, 2] : vector<16x4x32xf32> -> vector<4x16x32xf32>
    %40 = vector.extract_strided_slice %36 {offsets = [0, 128], sizes = [16, 128], strides = [1, 1]} : vector<16x384xf32> to vector<16x128xf32>
    %41 = vector.shape_cast %40 : vector<16x128xf32> to vector<16x4x32xf32>
    %42 = tpu.transpose %41, [1, 0, 2] : vector<16x4x32xf32> -> vector<4x16x32xf32>
    %43 = vector.extract_strided_slice %36 {offsets = [0, 256], sizes = [16, 128], strides = [1, 1]} : vector<16x384xf32> to vector<16x128xf32>
    %44 = vector.shape_cast %43 : vector<16x128xf32> to vector<16x4x32xf32>
    %45 = tpu.transpose %44, [1, 0, 2] : vector<16x4x32xf32> -> vector<4x16x32xf32>
    "tpu.trace_start"() <{level = 10 : i32, message = "hqd,hkd->hqk"}> : () -> ()
    %cst_19 = arith.constant dense<0.000000e+00> : vector<4x16x16xf32>
    %46 = tpu.matmul %39, %42, %cst_19 {dimension_numbers = #tpu.dot_dimension_numbers<[2], [2], [1], [1], [0, 0, 0, 1, 1, 1], [0], [0]>} : vector<4x16x32xf32>, vector<4x16x32xf32>, vector<4x16x16xf32> -> vector<4x16x16xf32>
    "tpu.trace_stop"() : () -> ()
    %cst_20 = arith.constant dense<0xFF800000> : vector<4x16xf32>
    %47 = vector.multi_reduction <maximumf>, %46, %cst_20 [2] : vector<4x16x16xf32> to vector<4x16xf32>
    %48 = vector.shape_cast %47 : vector<4x16xf32> to vector<4x16x1xf32>
    %49 = vector.broadcast %48 : vector<4x16x1xf32> to vector<4x16x16xf32>
    %50 = arith.subf %46, %49 : vector<4x16x16xf32>
    %51 = math.exp %50 : vector<4x16x16xf32>
    %cst_21 = arith.constant dense<0.000000e+00> : vector<4x16xf32>
    %52 = vector.multi_reduction <add>, %51, %cst_21 [2] : vector<4x16x16xf32> to vector<4x16xf32>
    %53 = vector.shape_cast %52 : vector<4x16xf32> to vector<4x16x1xf32>
    %54 = tpu.reciprocal %53 : vector<4x16x1xf32> -> vector<4x16x1xf32>
    %55 = vector.broadcast %54 : vector<4x16x1xf32> to vector<4x16x16xf32>
    %56 = arith.mulf %51, %55 : vector<4x16x16xf32>
    "tpu.trace_start"() <{level = 10 : i32, message = "hqk,hkd->hqd"}> : () -> ()
    %cst_22 = arith.constant dense<0.000000e+00> : vector<4x16x32xf32>
    %57 = tpu.matmul %56, %45, %cst_22 {dimension_numbers = #tpu.dot_dimension_numbers<[2], [1], [1], [2], [0, 0, 0, 1, 1, 2], [0], [0]>} : vector<4x16x16xf32>, vector<4x16x32xf32>, vector<4x16x32xf32> -> vector<4x16x32xf32>
    "tpu.trace_stop"() : () -> ()
    %58 = tpu.transpose %57, [1, 0, 2] : vector<4x16x32xf32> -> vector<16x4x32xf32>
    %59 = vector.shape_cast %58 : vector<16x4x32xf32> to vector<16x128xf32>
    %c0_23 = arith.constant 0 : index
    %c0_24 = arith.constant 0 : index
    %c0_25 = arith.constant 0 : index
    %60 = vector.load %arg7[%c0_23, %c0_24, %c0_25] : memref<1x128x128xf32, #tpu.memory_space<vmem>>, vector<1x128x128xf32>
    %61 = vector.shape_cast %60 : vector<1x128x128xf32> to vector<128x128xf32>
    %cst_26 = arith.constant dense<0.000000e+00> : vector<16x128xf32>
    %62 = tpu.matmul %59, %61, %cst_26 {dimension_numbers = #tpu.dot_dimension_numbers<[1], [0], [0], [1], [0, 0, 1, 1], [], []>} : vector<16x128xf32>, vector<128x128xf32>, vector<16x128xf32> -> vector<16x128xf32>
    %c0_27 = arith.constant 0 : index
    %c0_28 = arith.constant 0 : index
    %c0_29 = arith.constant 0 : index
    %63 = vector.load %arg8[%c0_27, %c0_28, %c0_29] : memref<1x1x128xf32, #tpu.memory_space<vmem>>, vector<1x1x128xf32>
    %64 = vector.shape_cast %63 : vector<1x1x128xf32> to vector<1x128xf32>
    %65 = vector.broadcast %64 : vector<1x128xf32> to vector<16x128xf32>
    %66 = arith.addf %62, %65 : vector<16x128xf32>
    %67 = arith.addf %3, %66 : vector<16x128xf32>
    %c0_30 = arith.constant 0 : index
    %c0_31 = arith.constant 0 : index
    %c0_32 = arith.constant 0 : index
    %68 = vector.load %arg9[%c0_30, %c0_31, %c0_32] : memref<1x1x128xf32, #tpu.memory_space<vmem>>, vector<1x1x128xf32>
    %69 = vector.shape_cast %68 : vector<1x1x128xf32> to vector<1x128xf32>
    %c0_33 = arith.constant 0 : index
    %c0_34 = arith.constant 0 : index
    %c0_35 = arith.constant 0 : index
    %70 = vector.load %arg10[%c0_33, %c0_34, %c0_35] : memref<1x1x128xf32, #tpu.memory_space<vmem>>, vector<1x1x128xf32>
    %71 = vector.shape_cast %70 : vector<1x1x128xf32> to vector<1x128xf32>
    %cst_36 = arith.constant dense<0.000000e+00> : vector<16xf32>
    %72 = vector.multi_reduction <add>, %67, %cst_36 [1] : vector<16x128xf32> to vector<16xf32>
    %73 = vector.shape_cast %72 : vector<16xf32> to vector<16x1xf32>
    %cst_37 = arith.constant 1.280000e+02 : f32
    %74 = vector.broadcast %cst_37 : f32 to vector<16x1xf32>
    %75 = arith.divf %73, %74 : vector<16x1xf32>
    %76 = vector.broadcast %75 : vector<16x1xf32> to vector<16x128xf32>
    %77 = arith.subf %67, %76 : vector<16x128xf32>
    %78 = arith.mulf %77, %77 : vector<16x128xf32>
    %cst_38 = arith.constant dense<0.000000e+00> : vector<16xf32>
    %79 = vector.multi_reduction <add>, %78, %cst_38 [1] : vector<16x128xf32> to vector<16xf32>
    %80 = vector.shape_cast %79 : vector<16xf32> to vector<16x1xf32>
    %cst_39 = arith.constant 1.280000e+02 : f32
    %81 = vector.broadcast %cst_39 : f32 to vector<16x1xf32>
    %82 = arith.divf %80, %81 : vector<16x1xf32>
    %83 = vector.broadcast %75 : vector<16x1xf32> to vector<16x128xf32>
    %84 = arith.subf %67, %83 : vector<16x128xf32>
    %cst_40 = arith.constant 9.99999974E-6 : f32
    %85 = vector.broadcast %cst_40 : f32 to vector<16x1xf32>
    %86 = arith.addf %82, %85 : vector<16x1xf32>
    %87 = math.rsqrt %86 : vector<16x1xf32>
    %88 = vector.broadcast %87 : vector<16x1xf32> to vector<16x128xf32>
    %89 = arith.mulf %84, %88 : vector<16x128xf32>
    %90 = vector.broadcast %69 : vector<1x128xf32> to vector<16x128xf32>
    %91 = arith.mulf %89, %90 : vector<16x128xf32>
    %92 = vector.broadcast %71 : vector<1x128xf32> to vector<16x128xf32>
    %93 = arith.addf %91, %92 : vector<16x128xf32>
    %c0_41 = arith.constant 0 : index
    %c0_42 = arith.constant 0 : index
    %c0_43 = arith.constant 0 : index
    %94 = vector.load %arg11[%c0_41, %c0_42, %c0_43] : memref<1x128x512xf32, #tpu.memory_space<vmem>>, vector<1x128x512xf32>
    %95 = vector.shape_cast %94 : vector<1x128x512xf32> to vector<128x512xf32>
    %cst_44 = arith.constant dense<0.000000e+00> : vector<16x512xf32>
    %96 = tpu.matmul %93, %95, %cst_44 {dimension_numbers = #tpu.dot_dimension_numbers<[1], [0], [0], [1], [0, 0, 1, 1], [], []>} : vector<16x128xf32>, vector<128x512xf32>, vector<16x512xf32> -> vector<16x512xf32>
    %c0_45 = arith.constant 0 : index
    %c0_46 = arith.constant 0 : index
    %c0_47 = arith.constant 0 : index
    %97 = vector.load %arg12[%c0_45, %c0_46, %c0_47] : memref<1x1x512xf32, #tpu.memory_space<vmem>>, vector<1x1x512xf32>
    %98 = vector.shape_cast %97 : vector<1x1x512xf32> to vector<1x512xf32>
    %99 = vector.broadcast %98 : vector<1x512xf32> to vector<16x512xf32>
    %100 = arith.addf %96, %99 : vector<16x512xf32>
    %cst_48 = arith.constant 1.702000e+00 : f32
    %101 = vector.broadcast %cst_48 : f32 to vector<16x512xf32>
    %102 = arith.mulf %101, %100 : vector<16x512xf32>
    %103 = arith.negf %102 : vector<16x512xf32>
    %104 = math.exp %103 : vector<16x512xf32>
    %cst_49 = arith.constant 1.000000e+00 : f32
    %105 = vector.broadcast %cst_49 : f32 to vector<16x512xf32>
    %106 = arith.addf %105, %104 : vector<16x512xf32>
    %107 = arith.divf %105, %106 : vector<16x512xf32>
    %108 = arith.mulf %100, %107 : vector<16x512xf32>
    %c0_50 = arith.constant 0 : index
    %c0_51 = arith.constant 0 : index
    %c0_52 = arith.constant 0 : index
    %109 = vector.load %arg13[%c0_50, %c0_51, %c0_52] : memref<1x512x128xf32, #tpu.memory_space<vmem>>, vector<1x512x128xf32>
    %110 = vector.shape_cast %109 : vector<1x512x128xf32> to vector<512x128xf32>
    %cst_53 = arith.constant dense<0.000000e+00> : vector<16x128xf32>
    %111 = tpu.matmul %108, %110, %cst_53 {dimension_numbers = #tpu.dot_dimension_numbers<[1], [0], [0], [1], [0, 0, 1, 1], [], []>} : vector<16x512xf32>, vector<512x128xf32>, vector<16x128xf32> -> vector<16x128xf32>
    %c0_54 = arith.constant 0 : index
    %c0_55 = arith.constant 0 : index
    %c0_56 = arith.constant 0 : index
    %112 = vector.load %arg14[%c0_54, %c0_55, %c0_56] : memref<1x1x128xf32, #tpu.memory_space<vmem>>, vector<1x1x128xf32>
    %113 = vector.shape_cast %112 : vector<1x1x128xf32> to vector<1x128xf32>
    %114 = vector.broadcast %113 : vector<1x128xf32> to vector<16x128xf32>
    %115 = arith.addf %111, %114 : vector<16x128xf32>
    %116 = arith.addf %67, %115 : vector<16x128xf32>
    %c0_57 = arith.constant 0 : index
    %c0_58 = arith.constant 0 : index
    %117 = vector.load %arg16[%c0_57, %c0_58] : memref<16x128xf32, #tpu.memory_space<vmem>>, vector<16x128xf32>
    tpu.vector_store %arg16[%c0_57, %c0_58], %116 {strides = array<i32>} : memref<16x128xf32, #tpu.memory_space<vmem>>, vector<16x128xf32>,
    %c1_i32 = arith.constant 1 : i32
    %118 = arith.cmpi eq, %arg1, %c1_i32 : i32
    %119 = arith.extui %118 : i1 to i32
    %c0_i32_59 = arith.constant 0 : i32
    %120 = arith.cmpi ne, %119, %c0_i32_59 : i32
    scf.if %120 {
      %c0_60 = arith.constant 0 : index
      %c0_61 = arith.constant 0 : index
      %c0_62 = arith.constant 0 : index
      %121 = vector.load %arg15[%c0_60, %c0_61, %c0_62] : memref<1x16x128xf32, #tpu.memory_space<vmem>>, vector<1x16x128xf32>
      %122 = vector.shape_cast %121 : vector<1x16x128xf32> to vector<16x128xf32>
      %123 = vector.shape_cast %116 : vector<16x128xf32> to vector<1x16x128xf32>
      tpu.vector_store %arg15[%c0_60, %c0_61, %c0_62], %123 {strides = array<i32>} : memref<1x16x128xf32, #tpu.memory_space<vmem>>, vector<1x16x128xf32>,
    } else {
    }
    return
  }
  func.func @transform_0(%arg0: i32, %arg1: i32) -> (i32, i32, i32) {
    %c0_i32 = arith.constant 0 : i32
    %c0_i32_0 = arith.constant 0 : i32
    %c0_i32_1 = arith.constant 0 : i32
    return %arg0, %c0_i32, %c0_i32_0 : i32, i32, i32
  }
  func.func @transform_1(%arg0: i32, %arg1: i32) -> (i32, i32, i32) {
    %c0_i32 = arith.constant 0 : i32
    %c0_i32_0 = arith.constant 0 : i32
    %c0_i32_1 = arith.constant 0 : i32
    return %arg1, %c0_i32, %c0_i32_0 : i32, i32, i32
  }
  func.func @transform_2(%arg0: i32, %arg1: i32) -> (i32, i32, i32) {
    %c0_i32 = arith.constant 0 : i32
    %c0_i32_0 = arith.constant 0 : i32
    %c0_i32_1 = arith.constant 0 : i32
    return %arg1, %c0_i32, %c0_i32_0 : i32, i32, i32
  }
  func.func @transform_3(%arg0: i32, %arg1: i32) -> (i32, i32, i32) {
    %c0_i32 = arith.constant 0 : i32
    %c0_i32_0 = arith.constant 0 : i32
    %c0_i32_1 = arith.constant 0 : i32
    return %arg1, %c0_i32, %c0_i32_0 : i32, i32, i32
  }
  func.func @transform_4(%arg0: i32, %arg1: i32) -> (i32, i32, i32) {
    %c0_i32 = arith.constant 0 : i32
    %c0_i32_0 = arith.constant 0 : i32
    %c0_i32_1 = arith.constant 0 : i32
    return %arg1, %c0_i32, %c0_i32_0 : i32, i32, i32
  }
  func.func @transform_5(%arg0: i32, %arg1: i32) -> (i32, i32, i32) {
    %c0_i32 = arith.constant 0 : i32
    %c0_i32_0 = arith.constant 0 : i32
    %c0_i32_1 = arith.constant 0 : i32
    return %arg1, %c0_i32, %c0_i32_0 : i32, i32, i32
  }
  func.func @transform_6(%arg0: i32, %arg1: i32) -> (i32, i32, i32) {
    %c0_i32 = arith.constant 0 : i32
    %c0_i32_0 = arith.constant 0 : i32
    %c0_i32_1 = arith.constant 0 : i32
    return %arg1, %c0_i32, %c0_i32_0 : i32, i32, i32
  }
  func.func @transform_7(%arg0: i32, %arg1: i32) -> (i32, i32, i32) {
    %c0_i32 = arith.constant 0 : i32
    %c0_i32_0 = arith.constant 0 : i32
    %c0_i32_1 = arith.constant 0 : i32
    return %arg1, %c0_i32, %c0_i32_0 : i32, i32, i32
  }
  func.func @transform_8(%arg0: i32, %arg1: i32) -> (i32, i32, i32) {
    %c0_i32 = arith.constant 0 : i32
    %c0_i32_0 = arith.constant 0 : i32
    %c0_i32_1 = arith.constant 0 : i32
    return %arg1, %c0_i32, %c0_i32_0 : i32, i32, i32
  }
  func.func @transform_9(%arg0: i32, %arg1: i32) -> (i32, i32, i32) {
    %c0_i32 = arith.constant 0 : i32
    %c0_i32_0 = arith.constant 0 : i32
    %c0_i32_1 = arith.constant 0 : i32
    return %arg1, %c0_i32, %c0_i32_0 : i32, i32, i32
  }
  func.func @transform_10(%arg0: i32, %arg1: i32) -> (i32, i32, i32) {
    %c0_i32 = arith.constant 0 : i32
    %c0_i32_0 = arith.constant 0 : i32
    %c0_i32_1 = arith.constant 0 : i32
    return %arg1, %c0_i32, %c0_i32_0 : i32, i32, i32
  }
  func.func @transform_11(%arg0: i32, %arg1: i32) -> (i32, i32, i32) {
    %c0_i32 = arith.constant 0 : i32
    %c0_i32_0 = arith.constant 0 : i32
    %c0_i32_1 = arith.constant 0 : i32
    return %arg1, %c0_i32, %c0_i32_0 : i32, i32, i32
  }
  func.func @transform_12(%arg0: i32, %arg1: i32) -> (i32, i32, i32) {
    %c0_i32 = arith.constant 0 : i32
    %c0_i32_0 = arith.constant 0 : i32
    %c0_i32_1 = arith.constant 0 : i32
    return %arg1, %c0_i32, %c0_i32_0 : i32, i32, i32
  }
  func.func @transform_13(%arg0: i32, %arg1: i32) -> (i32, i32, i32) {
    %c0_i32 = arith.constant 0 : i32
    %c0_i32_0 = arith.constant 0 : i32
    %c0_i32_1 = arith.constant 0 : i32
    return %arg0, %c0_i32, %c0_i32_0 : i32, i32, i32
  }
}

</mosaic_0001>

<llo_original>
// kernel: tpu_custom_call.1
$region0: #{tpu_custom_call.1}
  #allocation0 [shape = 'u32[]', space=smem, size = 0x4, offset = 0x4, fixed_abs, tag = 'smem constant byte address 0x4 - core index']
  #allocation1 [shape = 'u32[144,128]{1,0:T(1,128)}', space=vmem, size = 0x12000, scoped, tag = 'internal scratch']
  #allocation2 [shape = 'f32[16,128]{1,0:T(8,128)}', space=vmem, size = 0x2000, scoped, tag = 'scratch operand']
  %s0 = inlined_call_operand.hbm [shape: f32[2,16,128], index: 0, kind: input, shape index: {}]
  %s1 = inlined_call_operand.hbm [shape: f32[2,1,128], index: 1, kind: input, shape index: {}]
  %s2 = inlined_call_operand.hbm [shape: f32[2,1,128], index: 2, kind: input, shape index: {}]
  %s3 = inlined_call_operand.hbm [shape: f32[2,128,384], index: 3, kind: input, shape index: {}]
  %s4 = inlined_call_operand.vmem [shape: f32[2,1,384], index: 4, kind: input, shape index: {}]
  %s5 = inlined_call_operand.hbm [shape: f32[2,128,128], index: 5, kind: input, shape index: {}]
  %s6 = inlined_call_operand.vmem [shape: f32[2,1,128], index: 6, kind: input, shape index: {}]
  %s7 = inlined_call_operand.vmem [shape: f32[2,1,128], index: 7, kind: input, shape index: {}]
  %s8 = inlined_call_operand.vmem [shape: f32[2,1,128], index: 8, kind: input, shape index: {}]
  %s9 = inlined_call_operand.hbm [shape: f32[2,128,512], index: 9, kind: input, shape index: {}]
  %s10 = inlined_call_operand.vmem [shape: f32[2,1,512], index: 10, kind: input, shape index: {}]
  %s11 = inlined_call_operand.hbm [shape: f32[2,512,128], index: 11, kind: input, shape index: {}]
  %s12 = inlined_call_operand.vmem [shape: f32[2,1,128], index: 12, kind: input, shape index: {}]
  %s13 = inlined_call_operand.hbm [shape: f32[2,16,128], index: 13, kind: output, shape index: {}]
  %s14 = sld [smem:[#allocation0]]
  $region121: #{tpu_custom_call.1} parent=0
    _
  %s16 = ssub.s32 1, %s14
  %s17 = scalar_select 0, %s16, %s14
  $region1: #{tpu_custom_call.1} parent=0
    #allocation3 [shape = 'u8[16384]{0}', space=vmem, size = 0x4000, scoped, tag = 'input window, operand 0']
    #allocation4 [shape = 's32[2]{0}', space=sflag, size = 0x8, scoped, tag = 'scoped memory for tpu_custom_call.1']
    #allocation5 [shape = 's32[2]{0}', space=sflag, size = 0x8, scoped, tag = 'scoped memory for tpu_custom_call.1']
    #allocation6 [shape = 'u8[1024]{0}', space=vmem, size = 0x400, scoped, tag = 'input window, operand 1']
    #allocation7 [shape = 's32[2]{0}', space=sflag, size = 0x8, scoped, tag = 'scoped memory for tpu_custom_call.1']
    #allocation8 [shape = 'u8[1024]{0}', space=vmem, size = 0x400, scoped, tag = 'input window, operand 2']
    #allocation9 [shape = 'u8[393216]{0}', space=vmem, size = 0x60000, scoped, tag = 'input window, operand 3']
    #allocation10 [shape = 's32[2]{0}', space=sflag, size = 0x8, scoped, tag = 'scoped memory for tpu_custom_call.1']
    #allocation11 [shape = 'u8[131072]{0}', space=vmem, size = 0x20000, scoped, tag = 'input window, operand 5']
    #allocation12 [shape = 'u8[524288]{0}', space=vmem, size = 0x80000, scoped, tag = 'input window, operand 9']
    #allocation13 [shape = 's32[2]{0}', space=sflag, size = 0x8, scoped, tag = 'scoped memory for tpu_custom_call.1']
    #allocation14 [shape = 'u8[524288]{0}', space=vmem, size = 0x80000, scoped, tag = 'input window, operand 11']
    #allocation15 [shape = 'u8[16384]{0}', space=vmem, size = 0x4000, scoped, tag = 'output window, operand 0']
    %18 = vsyncpa [#allocation4], 0
    %s19 = scalar_lea.sflag [#allocation4], 1
    %20 = vsyncpa %s19, 0
    %21 = vsyncpa [#allocation7], 0
    %s22 = scalar_lea.sflag [#allocation7], 1
    %23 = vsyncpa %s22, 0
    %24 = vsyncpa [#allocation10], 0
    %s25 = scalar_lea.sflag [#allocation10], 1
    %26 = vsyncpa %s25, 0
    %27 = vsyncpa [#allocation13], 0
    %s28 = scalar_lea.sflag [#allocation13], 1
    %29 = vsyncpa %s28, 0
    %30 = vsyncpa [#allocation5], 0
    %s31 = scalar_lea.sflag [#allocation5], 1
    %32 = vsyncpa %s31, 0
    loop: start=0, step=1, limit=6
    $region2: #{tpu_custom_call.1} parent=1 // loop_pre_header
      _
    $region3: #{tpu_custom_call.1} parent=1 // loop_header
      %s34 = sphi 0, %s38
      %p35 = scmp.ge.s32.totalorder %s34, 6
      %s41 = sphi 0, %s53
      %s42 = sphi 0, %s49
      %s43 = sphi 0, %s41
      %s44 = sphi 0, %s42
      %s45 = sphi 0, %s43
      %s46 = sphi 0, %s44
      %s56 = sphi 0, %s58
      %s59 = sphi 0, %s56
      %s60 = sphi 0, %s59
      %s76 = sphi 0, %s60
      %s82 = sphi 0, %s84
      %s85 = sphi 0, %s82
      %s86 = sphi 0, %s85
      %s102 = sphi 0, %s86
      %s108 = sphi 0, %s110
      %s111 = sphi 0, %s108
      %s112 = sphi 0, %s111
      %s128 = sphi 0, %s112
      %s134 = sphi 0, %s136
      %s137 = sphi 0, %s134
      %s138 = sphi 0, %s137
      %s154 = sphi 0, %s138
      %s160 = sphi 0, %s162
      %s163 = sphi 0, %s160
      %s164 = sphi 0, %s163
      %s180 = sphi 0, %s164
      %s186 = sphi 0, %s188
      %s189 = sphi 0, %s186
      %s190 = sphi 0, %s189
      %s206 = sphi 0, %s190
      %s212 = sphi 0, %s214
      %s215 = sphi 0, %s212
      %s216 = sphi 0, %s215
      %s232 = sphi 0, %s216
      %s238 = sphi 0, %s240
      %s241 = sphi 0, %s238
      %s242 = sphi 0, %s241
      %s258 = sphi 0, %s242
      %s264 = sphi 0, %s266
      %s267 = sphi 0, %s264
      %s268 = sphi 0, %s267
      %s284 = sphi 0, %s268
      %s290 = sphi 0, %s292
      %s293 = sphi 0, %s290
      %s294 = sphi 0, %s293
      %s310 = sphi 0, %s294
      %s316 = sphi 0, %s318
      %s319 = sphi 0, %s316
      %s320 = sphi 0, %s319
      %s336 = sphi 0, %s320
      %s342 = sphi 0, %s344
      %s345 = sphi 0, %s342
      %s346 = sphi 0, %s345
      %s362 = sphi 0, %s346
      %s368 = sphi 0, %s370
      %s371 = sphi 0, %s368
      %s372 = sphi 0, %s371
      %s388 = sphi 0, %s372
      %s394 = sphi 0, %s396
      %s397 = sphi 0, %s394
      %s398 = sphi 0, %s397
      %s414 = sphi 0, %s398
    $region4: #{tpu_custom_call.1} parent=1 // loop_header_branch
      %37 = sbr.rel (%p35) target = $region8
    $region5: #{tpu_custom_call.1} parent=1 // loop_body
      %s39 = ssub.s32 %s34, 1
      %s40 = ssub.s32 %s34, 2
      %s47 = sadd.s32 1, %s42
      %p48 = scmp.ge.s32.totalorder %s47, 2
      %s49 = scalar_select %p48, 0, %s47
      %s50 = sadd.s32 1, %s41
      %s51 = scalar_select %p48, %s50, %s41
      %p52 = scmp.ge.s32.totalorder %s51, 2
      %s53 = scalar_select %p52, 0, %s51
      %s54 = ssub.s32 %s41, %s53
      %p55 = scmp.eq.s32.totalorder %s54, 0
      %s57 = sadd.s32 %s56, 1
      %s58 = scalar_select %p55, %s56, %s57
      %p61 = pneg %p55
      %p62 = scmp.eq.s32.totalorder %s34, 3
      %p63 = por %p61, %p62
      %p64 = scmp.ne.s32.totalorder %s56, %s59
      %p65 = scmp.eq.s32.totalorder %s34, 0
      %p66 = por %p64, %p65
      %p67 = scmp.ne.s32.totalorder %s56, %s59
      %p68 = scmp.eq.s32.totalorder %s39, 3
      %p69 = por %p67, %p68
      %p70 = scmp.ne.s32.totalorder %s59, %s60
      %p71 = scmp.eq.s32.totalorder %s39, 0
      %p72 = por %p70, %p71
      %p73 = scmp.ne.s32.totalorder %s59, %s60
      %p74 = scmp.eq.s32.totalorder %s40, 3
      %p75 = por %p73, %p74
      %p77 = scmp.ne.s32.totalorder %s60, %s76
      %p78 = scmp.eq.s32.totalorder %s40, 0
      %p79 = por %p77, %p78
      %s80 = ssub.s32 %s42, %s49
      %p81 = scmp.eq.s32.totalorder %s80, 0
      %s83 = sadd.s32 %s82, 1
      %s84 = scalar_select %p81, %s82, %s83
      %p87 = pneg %p81
      %p88 = scmp.eq.s32.totalorder %s34, 3
      %p89 = por %p87, %p88
      %p90 = scmp.ne.s32.totalorder %s82, %s85
      %p91 = scmp.eq.s32.totalorder %s34, 0
      %p92 = por %p90, %p91
      %p93 = scmp.ne.s32.totalorder %s82, %s85
      %p94 = scmp.eq.s32.totalorder %s39, 3
      %p95 = por %p93, %p94
      %p96 = scmp.ne.s32.totalorder %s85, %s86
      %p97 = scmp.eq.s32.totalorder %s39, 0
      %p98 = por %p96, %p97
      %p99 = scmp.ne.s32.totalorder %s85, %s86
      %p100 = scmp.eq.s32.totalorder %s40, 3
      %p101 = por %p99, %p100
      %p103 = scmp.ne.s32.totalorder %s86, %s102
      %p104 = scmp.eq.s32.totalorder %s40, 0
      %p105 = por %p103, %p104
      %s106 = ssub.s32 %s42, %s49
      %p107 = scmp.eq.s32.totalorder %s106, 0
      %s109 = sadd.s32 %s108, 1
      %s110 = scalar_select %p107, %s108, %s109
      %p113 = pneg %p107
      %p114 = scmp.eq.s32.totalorder %s34, 3
      %p115 = por %p113, %p114
      %p116 = scmp.ne.s32.totalorder %s108, %s111
      %p117 = scmp.eq.s32.totalorder %s34, 0
      %p118 = por %p116, %p117
      %p119 = scmp.ne.s32.totalorder %s108, %s111
      %p120 = scmp.eq.s32.totalorder %s39, 3
      %p121 = por %p119, %p120
      %p122 = scmp.ne.s32.totalorder %s111, %s112
      %p123 = scmp.eq.s32.totalorder %s39, 0
      %p124 = por %p122, %p123
      %p125 = scmp.ne.s32.totalorder %s111, %s112
      %p126 = scmp.eq.s32.totalorder %s40, 3
      %p127 = por %p125, %p126
      %p129 = scmp.ne.s32.totalorder %s112, %s128
      %p130 = scmp.eq.s32.totalorder %s40, 0
      %p131 = por %p129, %p130
      %s132 = ssub.s32 %s42, %s49
      %p133 = scmp.eq.s32.totalorder %s132, 0
      %s135 = sadd.s32 %s134, 1
      %s136 = scalar_select %p133, %s134, %s135
      %p139 = pneg %p133
      %p140 = scmp.eq.s32.totalorder %s34, 3
      %p141 = por %p139, %p140
      %p142 = scmp.ne.s32.totalorder %s134, %s137
      %p143 = scmp.eq.s32.totalorder %s34, 0
      %p144 = por %p142, %p143
      %p145 = scmp.ne.s32.totalorder %s134, %s137
      %p146 = scmp.eq.s32.totalorder %s39, 3
      %p147 = por %p145, %p146
      %p148 = scmp.ne.s32.totalorder %s137, %s138
      %p149 = scmp.eq.s32.totalorder %s39, 0
      %p150 = por %p148, %p149
      %p151 = scmp.ne.s32.totalorder %s137, %s138
      %p152 = scmp.eq.s32.totalorder %s40, 3
      %p153 = por %p151, %p152
      %p155 = scmp.ne.s32.totalorder %s138, %s154
      %p156 = scmp.eq.s32.totalorder %s40, 0
      %p157 = por %p155, %p156
      %s158 = ssub.s32 %s42, %s49
      %p159 = scmp.eq.s32.totalorder %s158, 0
      %s161 = sadd.s32 %s160, 1
      %s162 = scalar_select %p159, %s160, %s161
      %p165 = pneg %p159
      %p166 = scmp.eq.s32.totalorder %s34, 3
      %p167 = por %p165, %p166
      %p168 = scmp.ne.s32.totalorder %s160, %s163
      %p169 = scmp.eq.s32.totalorder %s34, 0
      %p170 = por %p168, %p169
      %p171 = scmp.ne.s32.totalorder %s160, %s163
      %p172 = scmp.eq.s32.totalorder %s39, 3
      %p173 = por %p171, %p172
      %p174 = scmp.ne.s32.totalorder %s163, %s164
      %p175 = scmp.eq.s32.totalorder %s39, 0
      %p176 = por %p174, %p175
      %p177 = scmp.ne.s32.totalorder %s163, %s164
      %p178 = scmp.eq.s32.totalorder %s40, 3
      %p179 = por %p177, %p178
      %p181 = scmp.ne.s32.totalorder %s164, %s180
      %p182 = scmp.eq.s32.totalorder %s40, 0
      %p183 = por %p181, %p182
      %s184 = ssub.s32 %s42, %s49
      %p185 = scmp.eq.s32.totalorder %s184, 0
      %s187 = sadd.s32 %s186, 1
      %s188 = scalar_select %p185, %s186, %s187
      %p191 = pneg %p185
      %p192 = scmp.eq.s32.totalorder %s34, 3
      %p193 = por %p191, %p192
      %p194 = scmp.ne.s32.totalorder %s186, %s189
      %p195 = scmp.eq.s32.totalorder %s34, 0
      %p196 = por %p194, %p195
      %p197 = scmp.ne.s32.totalorder %s186, %s189
      %p198 = scmp.eq.s32.totalorder %s39, 3
      %p199 = por %p197, %p198
      %p200 = scmp.ne.s32.totalorder %s189, %s190
      %p201 = scmp.eq.s32.totalorder %s39, 0
      %p202 = por %p200, %p201
      %p203 = scmp.ne.s32.totalorder %s189, %s190
      %p204 = scmp.eq.s32.totalorder %s40, 3
      %p205 = por %p203, %p204
      %p207 = scmp.ne.s32.totalorder %s190, %s206
      %p208 = scmp.eq.s32.totalorder %s40, 0
      %p209 = por %p207, %p208
      %s210 = ssub.s32 %s42, %s49
      %p211 = scmp.eq.s32.totalorder %s210, 0
      %s213 = sadd.s32 %s212, 1
      %s214 = scalar_select %p211, %s212, %s213
      %p217 = pneg %p211
      %p218 = scmp.eq.s32.totalorder %s34, 3
      %p219 = por %p217, %p218
      %p220 = scmp.ne.s32.totalorder %s212, %s215
      %p221 = scmp.eq.s32.totalorder %s34, 0
      %p222 = por %p220, %p221
      %p223 = scmp.ne.s32.totalorder %s212, %s215
      %p224 = scmp.eq.s32.totalorder %s39, 3
      %p225 = por %p223, %p224
      %p226 = scmp.ne.s32.totalorder %s215, %s216
      %p227 = scmp.eq.s32.totalorder %s39, 0
      %p228 = por %p226, %p227
      %p229 = scmp.ne.s32.totalorder %s215, %s216
      %p230 = scmp.eq.s32.totalorder %s40, 3
      %p231 = por %p229, %p230
      %p233 = scmp.ne.s32.totalorder %s216, %s232
      %p234 = scmp.eq.s32.totalorder %s40, 0
      %p235 = por %p233, %p234
      %s236 = ssub.s32 %s42, %s49
      %p237 = scmp.eq.s32.totalorder %s236, 0
      %s239 = sadd.s32 %s238, 1
      %s240 = scalar_select %p237, %s238, %s239
      %p243 = pneg %p237
      %p244 = scmp.eq.s32.totalorder %s34, 3
      %p245 = por %p243, %p244
      %p246 = scmp.ne.s32.totalorder %s238, %s241
      %p247 = scmp.eq.s32.totalorder %s34, 0
      %p248 = por %p246, %p247
      %p249 = scmp.ne.s32.totalorder %s238, %s241
      %p250 = scmp.eq.s32.totalorder %s39, 3
      %p251 = por %p249, %p250
      %p252 = scmp.ne.s32.totalorder %s241, %s242
      %p253 = scmp.eq.s32.totalorder %s39, 0
      %p254 = por %p252, %p253
      %p255 = scmp.ne.s32.totalorder %s241, %s242
      %p256 = scmp.eq.s32.totalorder %s40, 3
      %p257 = por %p255, %p256
      %p259 = scmp.ne.s32.totalorder %s242, %s258
      %p260 = scmp.eq.s32.totalorder %s40, 0
      %p261 = por %p259, %p260
      %s262 = ssub.s32 %s42, %s49
      %p263 = scmp.eq.s32.totalorder %s262, 0
      %s265 = sadd.s32 %s264, 1
      %s266 = scalar_select %p263, %s264, %s265
      %p269 = pneg %p263
      %p270 = scmp.eq.s32.totalorder %s34, 3
      %p271 = por %p269, %p270
      %p272 = scmp.ne.s32.totalorder %s264, %s267
      %p273 = scmp.eq.s32.totalorder %s34, 0
      %p274 = por %p272, %p273
      %p275 = scmp.ne.s32.totalorder %s264, %s267
      %p276 = scmp.eq.s32.totalorder %s39, 3
      %p277 = por %p275, %p276
      %p278 = scmp.ne.s32.totalorder %s267, %s268
      %p279 = scmp.eq.s32.totalorder %s39, 0
      %p280 = por %p278, %p279
      %p281 = scmp.ne.s32.totalorder %s267, %s268
      %p282 = scmp.eq.s32.totalorder %s40, 3
      %p283 = por %p281, %p282
      %p285 = scmp.ne.s32.totalorder %s268, %s284
      %p286 = scmp.eq.s32.totalorder %s40, 0
      %p287 = por %p285, %p286
      %s288 = ssub.s32 %s42, %s49
      %p289 = scmp.eq.s32.totalorder %s288, 0
      %s291 = sadd.s32 %s290, 1
      %s292 = scalar_select %p289, %s290, %s291
      %p295 = pneg %p289
      %p296 = scmp.eq.s32.totalorder %s34, 3
      %p297 = por %p295, %p296
      %p298 = scmp.ne.s32.totalorder %s290, %s293
      %p299 = scmp.eq.s32.totalorder %s34, 0
      %p300 = por %p298, %p299
      %p301 = scmp.ne.s32.totalorder %s290, %s293
      %p302 = scmp.eq.s32.totalorder %s39, 3
      %p303 = por %p301, %p302
      %p304 = scmp.ne.s32.totalorder %s293, %s294
      %p305 = scmp.eq.s32.totalorder %s39, 0
      %p306 = por %p304, %p305
      %p307 = scmp.ne.s32.totalorder %s293, %s294
      %p308 = scmp.eq.s32.totalorder %s40, 3
      %p309 = por %p307, %p308
      %p311 = scmp.ne.s32.totalorder %s294, %s310
      %p312 = scmp.eq.s32.totalorder %s40, 0
      %p313 = por %p311, %p312
      %s314 = ssub.s32 %s42, %s49
      %p315 = scmp.eq.s32.totalorder %s314, 0
      %s317 = sadd.s32 %s316, 1
      %s318 = scalar_select %p315, %s316, %s317
      %p321 = pneg %p315
      %p322 = scmp.eq.s32.totalorder %s34, 3
      %p323 = por %p321, %p322
      %p324 = scmp.ne.s32.totalorder %s316, %s319
      %p325 = scmp.eq.s32.totalorder %s34, 0
      %p326 = por %p324, %p325
      %p327 = scmp.ne.s32.totalorder %s316, %s319
      %p328 = scmp.eq.s32.totalorder %s39, 3
      %p329 = por %p327, %p328
      %p330 = scmp.ne.s32.totalorder %s319, %s320
      %p331 = scmp.eq.s32.totalorder %s39, 0
      %p332 = por %p330, %p331
      %p333 = scmp.ne.s32.totalorder %s319, %s320
      %p334 = scmp.eq.s32.totalorder %s40, 3
      %p335 = por %p333, %p334
      %p337 = scmp.ne.s32.totalorder %s320, %s336
      %p338 = scmp.eq.s32.totalorder %s40, 0
      %p339 = por %p337, %p338
      %s340 = ssub.s32 %s42, %s49
      %p341 = scmp.eq.s32.totalorder %s340, 0
      %s343 = sadd.s32 %s342, 1
      %s344 = scalar_select %p341, %s342, %s343
      %p347 = pneg %p341
      %p348 = scmp.eq.s32.totalorder %s34, 3
      %p349 = por %p347, %p348
      %p350 = scmp.ne.s32.totalorder %s342, %s345
      %p351 = scmp.eq.s32.totalorder %s34, 0
      %p352 = por %p350, %p351
      %p353 = scmp.ne.s32.totalorder %s342, %s345
      %p354 = scmp.eq.s32.totalorder %s39, 3
      %p355 = por %p353, %p354
      %p356 = scmp.ne.s32.totalorder %s345, %s346
      %p357 = scmp.eq.s32.totalorder %s39, 0
      %p358 = por %p356, %p357
      %p359 = scmp.ne.s32.totalorder %s345, %s346
      %p360 = scmp.eq.s32.totalorder %s40, 3
      %p361 = por %p359, %p360
      %p363 = scmp.ne.s32.totalorder %s346, %s362
      %p364 = scmp.eq.s32.totalorder %s40, 0
      %p365 = por %p363, %p364
      %s366 = ssub.s32 %s42, %s49
      %p367 = scmp.eq.s32.totalorder %s366, 0
      %s369 = sadd.s32 %s368, 1
      %s370 = scalar_select %p367, %s368, %s369
      %p373 = pneg %p367
      %p374 = scmp.eq.s32.totalorder %s34, 3
      %p375 = por %p373, %p374
      %p376 = scmp.ne.s32.totalorder %s368, %s371
      %p377 = scmp.eq.s32.totalorder %s34, 0
      %p378 = por %p376, %p377
      %p379 = scmp.ne.s32.totalorder %s368, %s371
      %p380 = scmp.eq.s32.totalorder %s39, 3
      %p381 = por %p379, %p380
      %p382 = scmp.ne.s32.totalorder %s371, %s372
      %p383 = scmp.eq.s32.totalorder %s39, 0
      %p384 = por %p382, %p383
      %p385 = scmp.ne.s32.totalorder %s371, %s372
      %p386 = scmp.eq.s32.totalorder %s40, 3
      %p387 = por %p385, %p386
      %p389 = scmp.ne.s32.totalorder %s372, %s388
      %p390 = scmp.eq.s32.totalorder %s40, 0
      %p391 = por %p389, %p390
      %s392 = ssub.s32 %s41, %s53
      %p393 = scmp.eq.s32.totalorder %s392, 0
      %s395 = sadd.s32 %s394, 1
      %s396 = scalar_select %p393, %s394, %s395
      %p399 = pneg %p393
      %p400 = scmp.eq.s32.totalorder %s34, 3
      %p401 = por %p399, %p400
      %p402 = scmp.ne.s32.totalorder %s394, %s397
      %p403 = scmp.eq.s32.totalorder %s34, 0
      %p404 = por %p402, %p403
      %p405 = scmp.ne.s32.totalorder %s394, %s397
      %p406 = scmp.eq.s32.totalorder %s39, 3
      %p407 = por %p405, %p406
      %p408 = scmp.ne.s32.totalorder %s397, %s398
      %p409 = scmp.eq.s32.totalorder %s39, 0
      %p410 = por %p408, %p409
      %p411 = scmp.ne.s32.totalorder %s397, %s398
      %p412 = scmp.eq.s32.totalorder %s40, 3
      %p413 = por %p411, %p412
      %p415 = scmp.ne.s32.totalorder %s398, %s414
      %p416 = scmp.eq.s32.totalorder %s40, 0
      %p417 = por %p415, %p416
      %p418 = scmp.le.s32.totalorder 1, %s34
      %p419 = scmp.lt.s32.totalorder %s34, 5
      %p420 = pnand %p418, %p419
      %p421 = pneg %p420
      // Predicated region
      $region9: #{tpu_custom_call.1} parent=5 // pred_check
        _
      $region10: #{tpu_custom_call.1} parent=5 // pred_check_branch
        %423 = sbr.rel (%p420) target = $region12
      $region11: #{tpu_custom_call.1} parent=5 // pred_region
        %s424 = ssub.s32 %s34, 1
      $region12: #{tpu_custom_call.1} parent=5 // pred_fallthru
        _
      %p425 = scmp.lt.s32.totalorder %s34, 4
      // Predicated region
      $region13: #{tpu_custom_call.1} parent=5 // pred_check
        %p426 = pneg %p425
      $region14: #{tpu_custom_call.1} parent=5 // pred_check_branch
        %428 = sbr.rel (%p426) target = $region16
      $region15: #{tpu_custom_call.1} parent=5 // pred_region
        // Predicated region
        $region17: #{tpu_custom_call.1} parent=15 // pred_check
          %p429 = pneg %p66
        $region18: #{tpu_custom_call.1} parent=15 // pred_check_branch
          %431 = sbr.rel (%p429) target = $region20
        $region19: #{tpu_custom_call.1} parent=15 // pred_region
          %s432 = sand.u32 %s56, 1
          %s433 = scalar_lea.sflag [#allocation4], %s432
          %s434 = sand.u32 %s56, 1
          %s435 = smul.addr %s434, 16
          %s436 = scalar_lea.vmem [#allocation3], %s435
          %s438 = ssub.s32 256, 256
          %439 = vsyncadd %s433, %s438
          %s440 = smul.addr %s41, 2
          %s441 = smul.addr %s440, 128
          %s442 = scalar_lea.hbm %s0, %s441
          %s443 = sshll.u32 %s436, 4
          %s444 = int_to_ptr.vmem [resolvable:$true] %s443
          %449 = dma.hbm_to_vmem [thread:$0]  %s442, 256, %s444, %s433, 128, 128, 8
        $region20: #{tpu_custom_call.1} parent=15 // pred_fallthru
          _
        // Predicated region
        $region21: #{tpu_custom_call.1} parent=15 // pred_check
          %p450 = pneg %p92
        $region22: #{tpu_custom_call.1} parent=15 // pred_check_branch
          %452 = sbr.rel (%p450) target = $region24
        $region23: #{tpu_custom_call.1} parent=15 // pred_region
          %s453 = sand.u32 %s34, 1
          %s454 = scalar_lea.sflag [#allocation7], %s453
          %s455 = sand.u32 %s82, 1
          %s456 = scalar_lea.vmem [#allocation6], %s455
          %s458 = ssub.s32 16, 16
          %459 = vsyncadd %s454, %s458
          %s460 = smul.addr %s42, 16
          %s461 = scalar_lea.hbm %s1, %s460
          %s463 = sshll.u32 %s456, 4
          %s464 = int_to_ptr.vmem [resolvable:$true] %s463
          %466 = dma.hbm_to_vmem [thread:$0]  %s461, 16, %s464, %s454
        $region24: #{tpu_custom_call.1} parent=15 // pred_fallthru
          _
        // Predicated region
        $region25: #{tpu_custom_call.1} parent=15 // pred_check
          %p467 = pneg %p118
        $region26: #{tpu_custom_call.1} parent=15 // pred_check_branch
          %469 = sbr.rel (%p467) target = $region28
        $region27: #{tpu_custom_call.1} parent=15 // pred_region
          %s470 = sand.u32 %s34, 1
          %s471 = scalar_lea.sflag [#allocation7], %s470
          %s472 = sand.u32 %s108, 1
          %s473 = scalar_lea.vmem [#allocation8], %s472
          %s475 = ssub.s32 16, 16
          %476 = vsyncadd %s471, %s475
          %s477 = smul.addr %s42, 16
          %s478 = scalar_lea.hbm %s2, %s477
          %s480 = sshll.u32 %s473, 4
          %s481 = int_to_ptr.vmem [resolvable:$true] %s480
          %483 = dma.hbm_to_vmem [thread:$0]  %s478, 16, %s481, %s471
        $region28: #{tpu_custom_call.1} parent=15 // pred_fallthru
          _
        // Predicated region
        $region29: #{tpu_custom_call.1} parent=15 // pred_check
          %p484 = pneg %p144
        $region30: #{tpu_custom_call.1} parent=15 // pred_check_branch
          %486 = sbr.rel (%p484) target = $region32
        $region31: #{tpu_custom_call.1} parent=15 // pred_region
          %s487 = sand.u32 %s34, 1
          %s488 = scalar_lea.sflag [#allocation10], %s487
          %s489 = sand.u32 %s134, 1
          %s490 = smul.addr %s489, 384
          %s491 = scalar_lea.vmem [#allocation9], %s490
          %s493 = ssub.s32 6144, 6144
          %494 = vsyncadd %s488, %s493
          %s495 = smul.addr %s42, 48
          %s496 = smul.addr %s495, 128
          %s497 = scalar_lea.hbm %s3, %s496
          %s498 = sshll.u32 %s491, 4
          %s499 = int_to_ptr.vmem [resolvable:$true] %s498
          %504 = dma.hbm_to_vmem [thread:$0]  %s497, 6144, %s499, %s488, 384, 384, 24
        $region32: #{tpu_custom_call.1} parent=15 // pred_fallthru
          _
        // Predicated region
        $region33: #{tpu_custom_call.1} parent=15 // pred_check
          %p505 = pneg %p170
        $region34: #{tpu_custom_call.1} parent=15 // pred_check_branch
          %507 = sbr.rel (%p505) target = $region36
        $region35: #{tpu_custom_call.1} parent=15 // pred_region
          %p508 = scmp.lt.s32.totalorder %s42, 1
          %s509 = scalar_select %p508, %s42, 1
          %s510 = smul.addr %s509, 3
          %s511 = scalar_lea.vmem %s4, %s510
        $region36: #{tpu_custom_call.1} parent=15 // pred_fallthru
          _
        // Predicated region
        $region37: #{tpu_custom_call.1} parent=15 // pred_check
          %p512 = pneg %p196
        $region38: #{tpu_custom_call.1} parent=15 // pred_check_branch
          %514 = sbr.rel (%p512) target = $region40
        $region39: #{tpu_custom_call.1} parent=15 // pred_region
          %s515 = sand.u32 %s34, 1
          %s516 = scalar_lea.sflag [#allocation10], %s515
          %s517 = sand.u32 %s186, 1
          %s518 = smul.addr %s517, 128
          %s519 = scalar_lea.vmem [#allocation11], %s518
          %s521 = ssub.s32 2048, 2048
          %522 = vsyncadd %s516, %s521
          %s523 = smul.addr %s42, 16
          %s524 = smul.addr %s523, 128
          %s525 = scalar_lea.hbm %s5, %s524
          %s526 = sshll.u32 %s519, 4
          %s527 = int_to_ptr.vmem [resolvable:$true] %s526
          %532 = dma.hbm_to_vmem [thread:$0]  %s525, 2048, %s527, %s516, 128, 128, 8
        $region40: #{tpu_custom_call.1} parent=15 // pred_fallthru
          _
        // Predicated region
        $region41: #{tpu_custom_call.1} parent=15 // pred_check
          %p533 = pneg %p222
        $region42: #{tpu_custom_call.1} parent=15 // pred_check_branch
          %535 = sbr.rel (%p533) target = $region44
        $region43: #{tpu_custom_call.1} parent=15 // pred_region
          %p536 = scmp.lt.s32.totalorder %s42, 1
          %s537 = scalar_select %p536, %s42, 1
          %s538 = scalar_lea.vmem %s6, %s537
        $region44: #{tpu_custom_call.1} parent=15 // pred_fallthru
          _
        // Predicated region
        $region45: #{tpu_custom_call.1} parent=15 // pred_check
          %p539 = pneg %p248
        $region46: #{tpu_custom_call.1} parent=15 // pred_check_branch
          %541 = sbr.rel (%p539) target = $region48
        $region47: #{tpu_custom_call.1} parent=15 // pred_region
          %p542 = scmp.lt.s32.totalorder %s42, 1
          %s543 = scalar_select %p542, %s42, 1
          %s544 = scalar_lea.vmem %s7, %s543
        $region48: #{tpu_custom_call.1} parent=15 // pred_fallthru
          _
        // Predicated region
        $region49: #{tpu_custom_call.1} parent=15 // pred_check
          %p545 = pneg %p274
        $region50: #{tpu_custom_call.1} parent=15 // pred_check_branch
          %547 = sbr.rel (%p545) target = $region52
        $region51: #{tpu_custom_call.1} parent=15 // pred_region
          %p548 = scmp.lt.s32.totalorder %s42, 1
          %s549 = scalar_select %p548, %s42, 1
          %s550 = scalar_lea.vmem %s8, %s549
        $region52: #{tpu_custom_call.1} parent=15 // pred_fallthru
          _
        // Predicated region
        $region53: #{tpu_custom_call.1} parent=15 // pred_check
          %p551 = pneg %p300
        $region54: #{tpu_custom_call.1} parent=15 // pred_check_branch
          %553 = sbr.rel (%p551) target = $region56
        $region55: #{tpu_custom_call.1} parent=15 // pred_region
          %s554 = sand.u32 %s34, 1
          %s555 = scalar_lea.sflag [#allocation13], %s554
          %s556 = sand.u32 %s290, 1
          %s557 = smul.addr %s556, 512
          %s558 = scalar_lea.vmem [#allocation12], %s557
          %s560 = ssub.s32 8192, 8192
          %561 = vsyncadd %s555, %s560
          %s562 = smul.addr %s42, 64
          %s563 = smul.addr %s562, 128
          %s564 = scalar_lea.hbm %s9, %s563
          %s565 = sshll.u32 %s558, 4
          %s566 = int_to_ptr.vmem [resolvable:$true] %s565
          %571 = dma.hbm_to_vmem [thread:$0]  %s564, 8192, %s566, %s555, 512, 512, 32
        $region56: #{tpu_custom_call.1} parent=15 // pred_fallthru
          _
        // Predicated region
        $region57: #{tpu_custom_call.1} parent=15 // pred_check
          %p572 = pneg %p326
        $region58: #{tpu_custom_call.1} parent=15 // pred_check_branch
          %574 = sbr.rel (%p572) target = $region60
        $region59: #{tpu_custom_call.1} parent=15 // pred_region
          %p575 = scmp.lt.s32.totalorder %s42, 1
          %s576 = scalar_select %p575, %s42, 1
          %s577 = smul.addr %s576, 4
          %s578 = scalar_lea.vmem %s10, %s577
        $region60: #{tpu_custom_call.1} parent=15 // pred_fallthru
          _
        // Predicated region
        $region61: #{tpu_custom_call.1} parent=15 // pred_check
          %p579 = pneg %p352
        $region62: #{tpu_custom_call.1} parent=15 // pred_check_branch
          %581 = sbr.rel (%p579) target = $region64
        $region63: #{tpu_custom_call.1} parent=15 // pred_region
          %s582 = sand.u32 %s34, 1
          %s583 = scalar_lea.sflag [#allocation13], %s582
          %s584 = sand.u32 %s342, 1
          %s585 = smul.addr %s584, 512
          %s586 = scalar_lea.vmem [#allocation14], %s585
          %s588 = ssub.s32 8192, 8192
          %589 = vsyncadd %s583, %s588
          %s590 = smul.addr %s42, 64
          %s591 = smul.addr %s590, 128
          %s592 = scalar_lea.hbm %s11, %s591
          %s593 = sshll.u32 %s586, 4
          %s594 = int_to_ptr.vmem [resolvable:$true] %s593
          %599 = dma.hbm_to_vmem [thread:$0]  %s592, 8192, %s594, %s583, 128, 128, 8
        $region64: #{tpu_custom_call.1} parent=15 // pred_fallthru
          _
        // Predicated region
        $region65: #{tpu_custom_call.1} parent=15 // pred_check
          %p600 = pneg %p378
        $region66: #{tpu_custom_call.1} parent=15 // pred_check_branch
          %602 = sbr.rel (%p600) target = $region68
        $region67: #{tpu_custom_call.1} parent=15 // pred_region
          %p603 = scmp.lt.s32.totalorder %s42, 1
          %s604 = scalar_select %p603, %s42, 1
          %s605 = scalar_lea.vmem %s12, %s604
        $region68: #{tpu_custom_call.1} parent=15 // pred_fallthru
          _
      $region16: #{tpu_custom_call.1} parent=5 // pred_fallthru
        _
      %p606 = scmp.le.s32.totalorder 1, %s34
      %p607 = scmp.lt.s32.totalorder %s34, 5
      %p608 = pnand %p606, %p607
      %p609 = pneg %p608
      // Predicated region
      $region69: #{tpu_custom_call.1} parent=5 // pred_check
        _
      $region70: #{tpu_custom_call.1} parent=5 // pred_check_branch
        %611 = sbr.rel (%p608) target = $region72
      $region71: #{tpu_custom_call.1} parent=5 // pred_region
        %s612 = ssub.s32 %s34, 1
        %s613 = sand.u32 %s59, 1
        %s614 = scalar_lea.sflag [#allocation4], %s613
        %s615 = sand.u32 %s59, 1
        %s616 = smul.addr %s615, 16
        %s617 = scalar_lea.vmem [#allocation3], %s616
        // Predicated region
        $region73: #{tpu_custom_call.1} parent=71 // pred_check
          %p618 = pneg %p72
        $region74: #{tpu_custom_call.1} parent=71 // pred_check_branch
          %620 = sbr.rel (%p618) target = $region76
        $region75: #{tpu_custom_call.1} parent=71 // pred_region
          %621 = dma.done %s614, 256
        $region76: #{tpu_custom_call.1} parent=71 // pred_fallthru
          _
        %s622 = sand.u32 %s39, 1
        %s623 = scalar_lea.sflag [#allocation7], %s622
        %s624 = sand.u32 %s85, 1
        %s625 = scalar_lea.vmem [#allocation6], %s624
        // Predicated region
        $region77: #{tpu_custom_call.1} parent=71 // pred_check
          %p626 = pneg %p98
        $region78: #{tpu_custom_call.1} parent=71 // pred_check_branch
          %628 = sbr.rel (%p626) target = $region80
        $region79: #{tpu_custom_call.1} parent=71 // pred_region
          %629 = dma.done %s623, 16
        $region80: #{tpu_custom_call.1} parent=71 // pred_fallthru
          _
        %s630 = sand.u32 %s39, 1
        %s631 = scalar_lea.sflag [#allocation7], %s630
        %s632 = sand.u32 %s111, 1
        %s633 = scalar_lea.vmem [#allocation8], %s632
        // Predicated region
        $region81: #{tpu_custom_call.1} parent=71 // pred_check
          %p634 = pneg %p124
        $region82: #{tpu_custom_call.1} parent=71 // pred_check_branch
          %636 = sbr.rel (%p634) target = $region84
        $region83: #{tpu_custom_call.1} parent=71 // pred_region
          %637 = dma.done %s631, 16
        $region84: #{tpu_custom_call.1} parent=71 // pred_fallthru
          _
        %s638 = sand.u32 %s39, 1
        %s639 = scalar_lea.sflag [#allocation10], %s638
        %s640 = sand.u32 %s137, 1
        %s641 = smul.addr %s640, 384
        %s642 = scalar_lea.vmem [#allocation9], %s641
        // Predicated region
        $region85: #{tpu_custom_call.1} parent=71 // pred_check
          %p643 = pneg %p150
        $region86: #{tpu_custom_call.1} parent=71 // pred_check_branch
          %645 = sbr.rel (%p643) target = $region88
        $region87: #{tpu_custom_call.1} parent=71 // pred_region
          %646 = dma.done %s639, 6144
        $region88: #{tpu_custom_call.1} parent=71 // pred_fallthru
          _
        %s647 = sand.u32 %s39, 1
        %s648 = scalar_lea.sflag [#allocation10], %s647
        %s649 = sand.u32 %s189, 1
        %s650 = smul.addr %s649, 128
        %s651 = scalar_lea.vmem [#allocation11], %s650
        // Predicated region
        $region89: #{tpu_custom_call.1} parent=71 // pred_check
          %p652 = pneg %p202
        $region90: #{tpu_custom_call.1} parent=71 // pred_check_branch
          %654 = sbr.rel (%p652) target = $region92
        $region91: #{tpu_custom_call.1} parent=71 // pred_region
          %655 = dma.done %s648, 2048
        $region92: #{tpu_custom_call.1} parent=71 // pred_fallthru
          _
        %s656 = sand.u32 %s39, 1
        %s657 = scalar_lea.sflag [#allocation13], %s656
        %s658 = sand.u32 %s293, 1
        %s659 = smul.addr %s658, 512
        %s660 = scalar_lea.vmem [#allocation12], %s659
        // Predicated region
        $region93: #{tpu_custom_call.1} parent=71 // pred_check
          %p661 = pneg %p306
        $region94: #{tpu_custom_call.1} parent=71 // pred_check_branch
          %663 = sbr.rel (%p661) target = $region96
        $region95: #{tpu_custom_call.1} parent=71 // pred_region
          %664 = dma.done %s657, 8192
        $region96: #{tpu_custom_call.1} parent=71 // pred_fallthru
          _
        %s665 = sand.u32 %s39, 1
        %s666 = scalar_lea.sflag [#allocation13], %s665
        %s667 = sand.u32 %s345, 1
        %s668 = smul.addr %s667, 512
        %s669 = scalar_lea.vmem [#allocation14], %s668
        // Predicated region
        $region97: #{tpu_custom_call.1} parent=71 // pred_check
          %p670 = pneg %p358
        $region98: #{tpu_custom_call.1} parent=71 // pred_check_branch
          %672 = sbr.rel (%p670) target = $region100
        $region99: #{tpu_custom_call.1} parent=71 // pred_region
          %673 = dma.done %s666, 8192
        $region100: #{tpu_custom_call.1} parent=71 // pred_fallthru
          _
        %s674 = sand.u32 %s59, 1
        %s675 = scalar_lea.sflag [#allocation4], %s674
        %s676 = sand.u32 %s59, 1
        %s677 = smul.addr %s676, 16
        %s678 = scalar_lea.vmem [#allocation3], %s677
        %p679 = pneg %p72
        %p680 = pneg %p69
        %s681 = sand.u32 %s39, 1
        %s682 = scalar_lea.sflag [#allocation7], %s681
        %s683 = sand.u32 %s85, 1
        %s684 = scalar_lea.vmem [#allocation6], %s683
        %p685 = pneg %p98
        %p686 = pneg %p95
        %s687 = sand.u32 %s39, 1
        %s688 = scalar_lea.sflag [#allocation7], %s687
        %s689 = sand.u32 %s111, 1
        %s690 = scalar_lea.vmem [#allocation8], %s689
        %p691 = pneg %p124
        %p692 = pneg %p121
        %s693 = sand.u32 %s39, 1
        %s694 = scalar_lea.sflag [#allocation10], %s693
        %s695 = sand.u32 %s137, 1
        %s696 = smul.addr %s695, 384
        %s697 = scalar_lea.vmem [#allocation9], %s696
        %p698 = pneg %p150
        %p699 = pneg %p147
        %p700 = scmp.lt.s32.totalorder %s44, 1
        %s701 = scalar_select %p700, %s44, 1
        %s702 = smul.addr %s701, 3
        %s703 = scalar_lea.vmem %s4, %s702
        %p704 = pneg %p176
        %p705 = pneg %p173
        %s706 = sand.u32 %s39, 1
        %s707 = scalar_lea.sflag [#allocation10], %s706
        %s708 = sand.u32 %s189, 1
        %s709 = smul.addr %s708, 128
        %s710 = scalar_lea.vmem [#allocation11], %s709
        %p711 = pneg %p202
        %p712 = pneg %p199
        %p713 = scmp.lt.s32.totalorder %s44, 1
        %s714 = scalar_select %p713, %s44, 1
        %s715 = scalar_lea.vmem %s6, %s714
        %p716 = pneg %p228
        %p717 = pneg %p225
        %p718 = scmp.lt.s32.totalorder %s44, 1
        %s719 = scalar_select %p718, %s44, 1
        %s720 = scalar_lea.vmem %s7, %s719
        %p721 = pneg %p254
        %p722 = pneg %p251
        %p723 = scmp.lt.s32.totalorder %s44, 1
        %s724 = scalar_select %p723, %s44, 1
        %s725 = scalar_lea.vmem %s8, %s724
        %p726 = pneg %p280
        %p727 = pneg %p277
        %s728 = sand.u32 %s39, 1
        %s729 = scalar_lea.sflag [#allocation13], %s728
        %s730 = sand.u32 %s293, 1
        %s731 = smul.addr %s730, 512
        %s732 = scalar_lea.vmem [#allocation12], %s731
        %p733 = pneg %p306
        %p734 = pneg %p303
        %p735 = scmp.lt.s32.totalorder %s44, 1
        %s736 = scalar_select %p735, %s44, 1
        %s737 = smul.addr %s736, 4
        %s738 = scalar_lea.vmem %s10, %s737
        %p739 = pneg %p332
        %p740 = pneg %p329
        %s741 = sand.u32 %s39, 1
        %s742 = scalar_lea.sflag [#allocation13], %s741
        %s743 = sand.u32 %s345, 1
        %s744 = smul.addr %s743, 512
        %s745 = scalar_lea.vmem [#allocation14], %s744
        %p746 = pneg %p358
        %p747 = pneg %p355
        %p748 = scmp.lt.s32.totalorder %s44, 1
        %s749 = scalar_select %p748, %s44, 1
        %s750 = scalar_lea.vmem %s12, %s749
        %p751 = pneg %p384
        %p752 = pneg %p381
        %p753 = pneg %p410
        %p754 = pneg %p407
        %s755 = sand.u32 %s397, 1
        %s756 = scalar_lea.sflag [#allocation5], %s755
        %s757 = sand.u32 %s397, 1
        %s758 = smul.addr %s757, 16
        %s759 = scalar_lea.vmem [#allocation15], %s758
        %p760 = scmp.lt.s32.totalorder %s44, 1
        %s761 = scalar_select %p760, %s44, 1
        %s762 = smul.addr %s761, 3
        %s763 = scalar_lea.vmem %s4, %s762
        %p764 = scmp.lt.s32.totalorder %s44, 1
        %s765 = scalar_select %p764, %s44, 1
        %s766 = scalar_lea.vmem %s6, %s765
        %p767 = scmp.lt.s32.totalorder %s44, 1
        %s768 = scalar_select %p767, %s44, 1
        %s769 = scalar_lea.vmem %s7, %s768
        %p770 = scmp.lt.s32.totalorder %s44, 1
        %s771 = scalar_select %p770, %s44, 1
        %s772 = scalar_lea.vmem %s8, %s771
        %p773 = scmp.lt.s32.totalorder %s44, 1
        %s774 = scalar_select %p773, %s44, 1
        %s775 = smul.addr %s774, 4
        %s776 = scalar_lea.vmem %s10, %s775
        %p777 = scmp.lt.s32.totalorder %s44, 1
        %s778 = scalar_select %p777, %s44, 1
        %s779 = scalar_lea.vmem %s12, %s778
        %p780 = scmp.eq.s32.totalorder %s44, 0
        // Predicated region
        $region101: #{tpu_custom_call.1} parent=71 // pred_check
          %p781 = pneg %p780
        $region102: #{tpu_custom_call.1} parent=71 // pred_check_branch
          %783 = sbr.rel (%p781) target = $region104
        $region103: #{tpu_custom_call.1} parent=71 // pred_region
          %v784 = vld [vmem:[%s617] sm:$0xff]
          %v785 = vld [vmem:[%s617 + $0x8] sm:$0xff]
          %786 = vst [vmem:[#allocation2] sm:$0xff] %v784
          %787 = vst [vmem:[#allocation2 + $0x8] sm:$0xff] %v785
        $region104: #{tpu_custom_call.1} parent=71 // pred_fallthru
          _
        %v788 = vld [vmem:[#allocation2] sm:$0xff]
        %v789 = vld [vmem:[#allocation2 + $0x8] sm:$0xff]
        %v790 = vld [vmem:[%s625] sm:$0x1]
        %v791 = vld [vmem:[%s633] sm:$0x1]
        %792 = vadd.xlane.f32.xlu0 %v788
        %v793 = vpop.xlane.xlu0 %792
        %794 = vadd.xlane.f32.xlu0 %v789
        %v795 = vpop.xlane.xlu0 %794
        %v796 = vrcp.pop 128.0
        %v797 = vmul.f32 %v793, %v796
        %v798 = vmul.f32 %v795, %v796
        %v799 = vsub.f32 %v788, %v797
        %v800 = vsub.f32 %v789, %v798
        %v801 = vmul.f32 %v799, %v799
        %v802 = vmul.f32 %v800, %v800
        %803 = vadd.xlane.f32.xlu0 %v801
        %v804 = vpop.xlane.xlu0 %803
        %805 = vadd.xlane.f32.xlu0 %v802
        %v806 = vpop.xlane.xlu0 %805
        %v807 = vmul.f32 %v804, %v796
        %v808 = vmul.f32 %v806, %v796
        %v809 = vadd.f32 %v807, 1e-05
        %v810 = vadd.f32 %v808, 1e-05
        %v811 = vrsqrt.pop %v809
        %v812 = vrsqrt.pop %v810
        %v813 = vmul.f32 %v799, %v811
        %v814 = vmul.f32 %v800, %v812
        %v816 = vlaneseq
        %v817 = vshrl.u32 %v816, 7
        %v818 = vsub.s32 0, %v817
        %v819 = vrot.slane %v790, %v818
        %v821 = vmul.f32 %v813, %v819
        %v822 = vmul.f32 %v814, %v819
        %v824 = vlaneseq
        %v825 = vshrl.u32 %v824, 7
        %v826 = vsub.s32 0, %v825
        %v827 = vrot.slane %v791, %v826
        %v829 = vadd.f32 %v821, %v827
        %v830 = vadd.f32 %v822, %v827
        %v831 = vld [vmem:[%s642] sm:$0xff]
        %v832 = vld [vmem:[%s642 + $0x8] sm:$0xff]
        %v833 = vld [vmem:[%s642 + $0x10] sm:$0xff]
        %v834 = vld [vmem:[%s642 + $0x18] sm:$0xff]
        %v835 = vld [vmem:[%s642 + $0x20] sm:$0xff]
        %v836 = vld [vmem:[%s642 + $0x28] sm:$0xff]
        %v837 = vld [vmem:[%s642 + $0x30] sm:$0xff]
        %v838 = vld [vmem:[%s642 + $0x38] sm:$0xff]
        %v839 = vld [vmem:[%s642 + $0x40] sm:$0xff]
        %v840 = vld [vmem:[%s642 + $0x48] sm:$0xff]
        %v841 = vld [vmem:[%s642 + $0x50] sm:$0xff]
        %v842 = vld [vmem:[%s642 + $0x58] sm:$0xff]
        %v843 = vld [vmem:[%s642 + $0x60] sm:$0xff]
        %v844 = vld [vmem:[%s642 + $0x68] sm:$0xff]
        %v845 = vld [vmem:[%s642 + $0x70] sm:$0xff]
        %v846 = vld [vmem:[%s642 + $0x78] sm:$0xff]
        %v847 = vld [vmem:[%s642 + $0x80] sm:$0xff]
        %v848 = vld [vmem:[%s642 + $0x88] sm:$0xff]
        %v849 = vld [vmem:[%s642 + $0x90] sm:$0xff]
        %v850 = vld [vmem:[%s642 + $0x98] sm:$0xff]
        %v851 = vld [vmem:[%s642 + $0xa0] sm:$0xff]
        %v852 = vld [vmem:[%s642 + $0xa8] sm:$0xff]
        %v853 = vld [vmem:[%s642 + $0xb0] sm:$0xff]
        %v854 = vld [vmem:[%s642 + $0xb8] sm:$0xff]
        %v855 = vld [vmem:[%s642 + $0xc0] sm:$0xff]
        %v856 = vld [vmem:[%s642 + $0xc8] sm:$0xff]
        %v857 = vld [vmem:[%s642 + $0xd0] sm:$0xff]
        %v858 = vld [vmem:[%s642 + $0xd8] sm:$0xff]
        %v859 = vld [vmem:[%s642 + $0xe0] sm:$0xff]
        %v860 = vld [vmem:[%s642 + $0xe8] sm:$0xff]
        %v861 = vld [vmem:[%s642 + $0xf0] sm:$0xff]
        %v862 = vld [vmem:[%s642 + $0xf8] sm:$0xff]
        %v863 = vld [vmem:[%s642 + $0x100] sm:$0xff]
        %v864 = vld [vmem:[%s642 + $0x108] sm:$0xff]
        %v865 = vld [vmem:[%s642 + $0x110] sm:$0xff]
        %v866 = vld [vmem:[%s642 + $0x118] sm:$0xff]
        %v867 = vld [vmem:[%s642 + $0x120] sm:$0xff]
        %v868 = vld [vmem:[%s642 + $0x128] sm:$0xff]
        %v869 = vld [vmem:[%s642 + $0x130] sm:$0xff]
        %v870 = vld [vmem:[%s642 + $0x138] sm:$0xff]
        %v871 = vld [vmem:[%s642 + $0x140] sm:$0xff]
        %v872 = vld [vmem:[%s642 + $0x148] sm:$0xff]
        %v873 = vld [vmem:[%s642 + $0x150] sm:$0xff]
        %v874 = vld [vmem:[%s642 + $0x158] sm:$0xff]
        %v875 = vld [vmem:[%s642 + $0x160] sm:$0xff]
        %v876 = vld [vmem:[%s642 + $0x168] sm:$0xff]
        %v877 = vld [vmem:[%s642 + $0x170] sm:$0xff]
        %v878 = vld [vmem:[%s642 + $0x178] sm:$0xff]
        %v879 = vld [vmem:[%s763] sm:$0x7]
        %v881 = vlaneseq
        %v882 = vshrl.u32 %v881, 7
        %v883 = vsub.s32 0, %v882
        %v884 = vrot.slane %v879, %v883
        %v885 = vlaneseq
        %v886 = vshrl.u32 %v885, 7
        %v887 = vsub.s32 1, %v886
        %v888 = vrot.slane %v879, %v887
        %v889 = vlaneseq
        %v890 = vshrl.u32 %v889, 7
        %v891 = vsub.s32 2, %v890
        %v892 = vrot.slane %v879, %v891
        %896 = vmatprep.subr.mxu0 %v832
        %897 = vmatpush1.msra.mxu0 %v831
        %898 = vmatprep.subr.mxu0 %v835
        %899 = vmatpush1.msra.mxu0 %v834
        %900 = vmatprep.subr.mxu0 %v838
        %901 = vmatpush1.msra.mxu0 %v837
        %902 = vmatprep.subr.mxu0 %v841
        %903 = vmatpush1.msra.mxu0 %v840
        %904 = vmatprep.subr.mxu0 %v844
        %905 = vmatpush1.msra.mxu0 %v843
        %906 = vmatprep.subr.mxu0 %v847
        %907 = vmatpush1.msra.mxu0 %v846
        %908 = vmatprep.subr.mxu0 %v850
        %909 = vmatpush1.msra.mxu0 %v849
        %910 = vmatprep.subr.mxu0 %v853
        %911 = vmatpush1.msra.mxu0 %v852
        %912 = vmatprep.subr.mxu0 %v856
        %913 = vmatpush1.msra.mxu0 %v855
        %914 = vmatprep.subr.mxu0 %v859
        %915 = vmatpush1.msra.mxu0 %v858
        %916 = vmatprep.subr.mxu0 %v862
        %917 = vmatpush1.msra.mxu0 %v861
        %918 = vmatprep.subr.mxu0 %v865
        %919 = vmatpush1.msra.mxu0 %v864
        %920 = vmatprep.subr.mxu0 %v868
        %921 = vmatpush1.msra.mxu0 %v867
        %922 = vmatprep.subr.mxu0 %v871
        %923 = vmatpush1.msra.mxu0 %v870
        %924 = vmatprep.subr.mxu0 %v874
        %925 = vmatpush1.msra.mxu0 %v873
        %926 = vmatprep.subr.mxu0 %v877
        %927 = vmatpush1.msra.mxu0 %v876
        %928 = vmatprep.subr.mxu0 0.0
        %929 = vmatpush1.msra.mxu0 0.0
        %930 = vmatprep.subr.mxu0 0.0
        %931 = vmatpush1.msra.mxu0 0.0
        %932 = vmatprep.subr.mxu0 0.0
        %933 = vmatpush1.msra.mxu0 0.0
        %934 = vmatprep.subr.mxu0 0.0
        %935 = vmatpush1.msra.mxu0 0.0
        %936 = vmatprep.subr.mxu0 0.0
        %937 = vmatpush1.msra.mxu0 0.0
        %938 = vmatprep.subr.mxu0 0.0
        %939 = vmatpush1.msra.mxu0 0.0
        %940 = vmatprep.subr.mxu0 0.0
        %941 = vmatpush1.msra.mxu0 0.0
        %942 = vmatprep.subr.mxu0 0.0
        %943 = vmatpush1.msra.mxu0 0.0
        %944 = vmatprep.subr.mxu0 0.0
        %945 = vmatpush1.msra.mxu0 0.0
        %946 = vmatprep.subr.mxu0 0.0
        %947 = vmatpush1.msra.mxu0 0.0
        %948 = vmatprep.subr.mxu0 0.0
        %949 = vmatpush1.msra.mxu0 0.0
        %950 = vmatprep.subr.mxu0 0.0
        %951 = vmatpush1.msra.mxu0 0.0
        %952 = vmatprep.subr.mxu0 0.0
        %953 = vmatpush1.msra.mxu0 0.0
        %954 = vmatprep.subr.mxu0 0.0
        %955 = vmatpush1.msra.mxu0 0.0
        %956 = vmatprep.subr.mxu0 0.0
        %957 = vmatpush1.msra.mxu0 0.0
        %958 = vmatprep.subr.mxu0 0.0
        %959 = vmatpush1.msra.mxu0 0.0
        %960 = vmatprep.mubr.f32.mxu0 0.0
        %961 = vmatmul.mubr.f32.gmra.mrb[0].mxu0 %v829
        %v962 = vpop.f32.mrb[0].mxu0
        %v963 = vadd.f32 %v884, %v962
        %v964 = vpop.f32.mrb[0].mxu0
        %v965 = vadd.f32 %v888, %v964
        %966 = vmatprep.mubr.f32.mxu0 0.0
        %967 = vmatmul.mubr.f32.gmra.mrb[0].mxu0 %v830
        %v968 = vpop.f32.mrb[0].mxu0
        %v969 = vadd.f32 %v884, %v968
        %v970 = vpop.f32.mrb[0].mxu0
        %v971 = vadd.f32 %v888, %v970
        %972 = vdwg.mxu0
        %973 = vmatprep.subr.mxu0 0.0
        %974 = vmatpush1.msra.mxu0 %v833
        %975 = vmatprep.subr.mxu0 0.0
        %976 = vmatpush1.msra.mxu0 %v836
        %977 = vmatprep.subr.mxu0 0.0
        %978 = vmatpush1.msra.mxu0 %v839
        %979 = vmatprep.subr.mxu0 0.0
        %980 = vmatpush1.msra.mxu0 %v842
        %981 = vmatprep.subr.mxu0 0.0
        %982 = vmatpush1.msra.mxu0 %v845
        %983 = vmatprep.subr.mxu0 0.0
        %984 = vmatpush1.msra.mxu0 %v848
        %985 = vmatprep.subr.mxu0 0.0
        %986 = vmatpush1.msra.mxu0 %v851
        %987 = vmatprep.subr.mxu0 0.0
        %988 = vmatpush1.msra.mxu0 %v854
        %989 = vmatprep.subr.mxu0 0.0
        %990 = vmatpush1.msra.mxu0 %v857
        %991 = vmatprep.subr.mxu0 0.0
        %992 = vmatpush1.msra.mxu0 %v860
        %993 = vmatprep.subr.mxu0 0.0
        %994 = vmatpush1.msra.mxu0 %v863
        %995 = vmatprep.subr.mxu0 0.0
        %996 = vmatpush1.msra.mxu0 %v866
        %997 = vmatprep.subr.mxu0 0.0
        %998 = vmatpush1.msra.mxu0 %v869
        %999 = vmatprep.subr.mxu0 0.0
        %1000 = vmatpush1.msra.mxu0 %v872
        %1001 = vmatprep.subr.mxu0 0.0
        %1002 = vmatpush1.msra.mxu0 %v875
        %1003 = vmatprep.subr.mxu0 0.0
        %1004 = vmatpush1.msra.mxu0 %v878
        %1005 = vmatprep.subr.mxu0 0.0
        %1006 = vmatpush1.msra.mxu0 0.0
        %1007 = vmatprep.subr.mxu0 0.0
        %1008 = vmatpush1.msra.mxu0 0.0
        %1009 = vmatprep.subr.mxu0 0.0
        %1010 = vmatpush1.msra.mxu0 0.0
        %1011 = vmatprep.subr.mxu0 0.0
        %1012 = vmatpush1.msra.mxu0 0.0
        %1013 = vmatprep.subr.mxu0 0.0
        %1014 = vmatpush1.msra.mxu0 0.0
        %1015 = vmatprep.subr.mxu0 0.0
        %1016 = vmatpush1.msra.mxu0 0.0
        %1017 = vmatprep.subr.mxu0 0.0
        %1018 = vmatpush1.msra.mxu0 0.0
        %1019 = vmatprep.subr.mxu0 0.0
        %1020 = vmatpush1.msra.mxu0 0.0
        %1021 = vmatprep.subr.mxu0 0.0
        %1022 = vmatpush1.msra.mxu0 0.0
        %1023 = vmatprep.subr.mxu0 0.0
        %1024 = vmatpush1.msra.mxu0 0.0
        %1025 = vmatprep.subr.mxu0 0.0
        %1026 = vmatpush1.msra.mxu0 0.0
        %1027 = vmatprep.subr.mxu0 0.0
        %1028 = vmatpush1.msra.mxu0 0.0
        %1029 = vmatprep.subr.mxu0 0.0
        %1030 = vmatpush1.msra.mxu0 0.0
        %1031 = vmatprep.subr.mxu0 0.0
        %1032 = vmatpush1.msra.mxu0 0.0
        %1033 = vmatprep.subr.mxu0 0.0
        %1034 = vmatpush1.msra.mxu0 0.0
        %1035 = vmatprep.subr.mxu0 0.0
        %1036 = vmatpush1.msra.mxu0 0.0
        %1037 = vmatprep.mubr.f32.mxu0 0.0
        %1038 = vmatmul.mubr.f32.gmra.mrb[0].mxu0 %v829
        %v1039 = vpop.f32.mrb[0].mxu0
        %v1040 = vadd.f32 %v892, %v1039
        %v1041 = vpop.f32.mrb[0].mxu0
        %1042 = vmatprep.mubr.f32.mxu0 0.0
        %1043 = vmatmul.mubr.f32.gmra.mrb[0].mxu0 %v830
        %v1044 = vpop.f32.mrb[0].mxu0
        %v1045 = vadd.f32 %v892, %v1044
        %v1046 = vpop.f32.mrb[0].mxu0
        %1047 = vdwg.mxu0
        %1050 = vrot.lane.b32.xlu0 %v963, 96
        %v1051 = vpop.permute.xlu0 %1050
        %1052 = vrot.lane.b32.xlu0 %v969, 96
        %v1053 = vpop.permute.xlu0 %1052
        %1056 = vrot.lane.b32.xlu0 %v963, 64
        %v1057 = vpop.permute.xlu0 %1056
        %1058 = vrot.lane.b32.xlu0 %v969, 64
        %v1059 = vpop.permute.xlu0 %1058
        %1062 = vrot.lane.b32.xlu0 %v963, 32
        %v1063 = vpop.permute.xlu0 %1062
        %1064 = vrot.lane.b32.xlu0 %v969, 32
        %v1065 = vpop.permute.xlu0 %1064
        %v1068 = vcombine.low %v963, %v1057
        %v1069 = vcombine.high %v963, %v1057
        %v1071 = vunpack.c.l.s4 1983009808
        %v1072 = vunpack.c.0.s8 %v1071
        %v1073 = vlaneseq
        %v1074 = vshrl.u32 %v1073, 7
        %v1075 = vsub.s32 %v1072, %v1074
        %v1076 = vrot.slane %v1068, %v1075
        %v1078 = vunpack.c.l.s4 1983009808
        %v1079 = vunpack.c.0.s8 %v1078
        %v1080 = vlaneseq
        %v1081 = vshrl.u32 %v1080, 7
        %v1082 = vsub.s32 %v1079, %v1081
        %v1083 = vrot.slane %v1069, %v1082
        %v1084 = vcombine.low %v1051, %v1063
        %v1085 = vcombine.high %v1051, %v1063
        %v1087 = vunpack.c.l.s4 1983009808
        %v1088 = vunpack.c.0.s8 %v1087
        %v1089 = vlaneseq
        %v1090 = vshrl.u32 %v1089, 7
        %v1091 = vsub.s32 %v1088, %v1090
        %v1092 = vrot.slane %v1084, %v1091
        %v1094 = vunpack.c.l.s4 1983009808
        %v1095 = vunpack.c.0.s8 %v1094
        %v1096 = vlaneseq
        %v1097 = vshrl.u32 %v1096, 7
        %v1098 = vsub.s32 %v1095, %v1097
        %v1099 = vrot.slane %v1085, %v1098
        %v1100 = vcombine.low %v1076, %v1092
        %v1101 = vcombine.high %v1076, %v1092
        %v1103 = vunpack.c.l.s4 1934713408
        %v1104 = vunpack.c.0.s8 %v1103
        %v1105 = vlaneseq
        %v1106 = vshrl.u32 %v1105, 7
        %v1107 = vsub.s32 %v1104, %v1106
        %v1108 = vrot.slane %v1100, %v1107
        %v1110 = vunpack.c.l.s4 1934713408
        %v1111 = vunpack.c.0.s8 %v1110
        %v1112 = vlaneseq
        %v1113 = vshrl.u32 %v1112, 7
        %v1114 = vsub.s32 %v1111, %v1113
        %v1115 = vrot.slane %v1101, %v1114
        %v1116 = vcombine.low %v1083, %v1099
        %v1117 = vcombine.high %v1083, %v1099
        %v1119 = vunpack.c.l.s4 1934713408
        %v1120 = vunpack.c.0.s8 %v1119
        %v1121 = vlaneseq
        %v1122 = vshrl.u32 %v1121, 7
        %v1123 = vsub.s32 %v1120, %v1122
        %v1124 = vrot.slane %v1116, %v1123
        %v1126 = vunpack.c.l.s4 1934713408
        %v1127 = vunpack.c.0.s8 %v1126
        %v1128 = vlaneseq
        %v1129 = vshrl.u32 %v1128, 7
        %v1130 = vsub.s32 %v1127, %v1129
        %v1131 = vrot.slane %v1117, %v1130
        %v1132 = vcombine.high %v1108, 0.0
        %v1133 = vcombine.high %v1115, 0.0
        %v1134 = vcombine.high %v1124, 0.0
        %v1135 = vcombine.high %v1131, 0.0
        %v1136 = vcombine.low %v969, %v1059
        %v1137 = vcombine.high %v969, %v1059
        %v1139 = vunpack.c.l.s4 1983009808
        %v1140 = vunpack.c.0.s8 %v1139
        %v1141 = vlaneseq
        %v1142 = vshrl.u32 %v1141, 7
        %v1143 = vsub.s32 %v1140, %v1142
        %v1144 = vrot.slane %v1136, %v1143
        %v1146 = vunpack.c.l.s4 1983009808
        %v1147 = vunpack.c.0.s8 %v1146
        %v1148 = vlaneseq
        %v1149 = vshrl.u32 %v1148, 7
        %v1150 = vsub.s32 %v1147, %v1149
        %v1151 = vrot.slane %v1137, %v1150
        %v1152 = vcombine.low %v1053, %v1065
        %v1153 = vcombine.high %v1053, %v1065
        %v1155 = vunpack.c.l.s4 1983009808
        %v1156 = vunpack.c.0.s8 %v1155
        %v1157 = vlaneseq
        %v1158 = vshrl.u32 %v1157, 7
        %v1159 = vsub.s32 %v1156, %v1158
        %v1160 = vrot.slane %v1152, %v1159
        %v1162 = vunpack.c.l.s4 1983009808
        %v1163 = vunpack.c.0.s8 %v1162
        %v1164 = vlaneseq
        %v1165 = vshrl.u32 %v1164, 7
        %v1166 = vsub.s32 %v1163, %v1165
        %v1167 = vrot.slane %v1153, %v1166
        %v1168 = vcombine.low %v1144, %v1160
        %v1169 = vcombine.high %v1144, %v1160
        %v1171 = vunpack.c.l.s4 1934713408
        %v1172 = vunpack.c.0.s8 %v1171
        %v1173 = vlaneseq
        %v1174 = vshrl.u32 %v1173, 7
        %v1175 = vsub.s32 %v1172, %v1174
        %v1176 = vrot.slane %v1168, %v1175
        %v1178 = vunpack.c.l.s4 1934713408
        %v1179 = vunpack.c.0.s8 %v1178
        %v1180 = vlaneseq
        %v1181 = vshrl.u32 %v1180, 7
        %v1182 = vsub.s32 %v1179, %v1181
        %v1183 = vrot.slane %v1169, %v1182
        %v1184 = vcombine.low %v1151, %v1167
        %v1185 = vcombine.high %v1151, %v1167
        %v1187 = vunpack.c.l.s4 1934713408
        %v1188 = vunpack.c.0.s8 %v1187
        %v1189 = vlaneseq
        %v1190 = vshrl.u32 %v1189, 7
        %v1191 = vsub.s32 %v1188, %v1190
        %v1192 = vrot.slane %v1184, %v1191
        %v1194 = vunpack.c.l.s4 1934713408
        %v1195 = vunpack.c.0.s8 %v1194
        %v1196 = vlaneseq
        %v1197 = vshrl.u32 %v1196, 7
        %v1198 = vsub.s32 %v1195, %v1197
        %v1199 = vrot.slane %v1185, %v1198
        %v1200 = vcombine.high %v1176, 0.0
        %v1201 = vcombine.high %v1183, 0.0
        %v1202 = vcombine.high %v1192, 0.0
        %v1203 = vcombine.high %v1199, 0.0
        %v1204 = vcombine.low %v1108, %v1115
        %v1206 = vunpack.c.l.s4 1983009808
        %v1207 = vunpack.c.0.s8 %v1206
        %v1208 = vlaneseq
        %v1209 = vshrl.u32 %v1208, 7
        %v1210 = vsub.s32 %v1207, %v1209
        %v1211 = vrot.slane %v1204, %v1210
        %v1212 = vcombine.low %v1132, %v1133
        %v1214 = vunpack.c.l.s4 1983009808
        %v1215 = vunpack.c.0.s8 %v1214
        %v1216 = vlaneseq
        %v1217 = vshrl.u32 %v1216, 7
        %v1218 = vsub.s32 %v1215, %v1217
        %v1219 = vrot.slane %v1212, %v1218
        %v1220 = vcombine.low %v1124, %v1131
        %v1222 = vunpack.c.l.s4 1983009808
        %v1223 = vunpack.c.0.s8 %v1222
        %v1224 = vlaneseq
        %v1225 = vshrl.u32 %v1224, 7
        %v1226 = vsub.s32 %v1223, %v1225
        %v1227 = vrot.slane %v1220, %v1226
        %v1228 = vcombine.low %v1134, %v1135
        %v1230 = vunpack.c.l.s4 1983009808
        %v1231 = vunpack.c.0.s8 %v1230
        %v1232 = vlaneseq
        %v1233 = vshrl.u32 %v1232, 7
        %v1234 = vsub.s32 %v1231, %v1233
        %v1235 = vrot.slane %v1228, %v1234
        %v1236 = vcombine.low %v1211, %v1219
        %v1237 = vcombine.high %v1211, %v1219
        %v1239 = vunpack.c.l.s4 1934713408
        %v1240 = vunpack.c.0.s8 %v1239
        %v1241 = vlaneseq
        %v1242 = vshrl.u32 %v1241, 7
        %v1243 = vsub.s32 %v1240, %v1242
        %v1244 = vrot.slane %v1236, %v1243
        %v1246 = vunpack.c.l.s4 1934713408
        %v1247 = vunpack.c.0.s8 %v1246
        %v1248 = vlaneseq
        %v1249 = vshrl.u32 %v1248, 7
        %v1250 = vsub.s32 %v1247, %v1249
        %v1251 = vrot.slane %v1237, %v1250
        %v1252 = vcombine.low %v1227, %v1235
        %v1253 = vcombine.high %v1227, %v1235
        %v1255 = vunpack.c.l.s4 1934713408
        %v1256 = vunpack.c.0.s8 %v1255
        %v1257 = vlaneseq
        %v1258 = vshrl.u32 %v1257, 7
        %v1259 = vsub.s32 %v1256, %v1258
        %v1260 = vrot.slane %v1252, %v1259
        %v1262 = vunpack.c.l.s4 1934713408
        %v1263 = vunpack.c.0.s8 %v1262
        %v1264 = vlaneseq
        %v1265 = vshrl.u32 %v1264, 7
        %v1266 = vsub.s32 %v1263, %v1265
        %v1267 = vrot.slane %v1253, %v1266
        %v1268 = vcombine.low %v1244, %v1260
        %v1269 = vcombine.high %v1244, %v1260
        %v1270 = vcombine.low %v1251, %v1267
        %v1271 = vcombine.high %v1251, %v1267
        %v1272 = vcombine.low %v1176, %v1183
        %v1274 = vunpack.c.l.s4 1983009808
        %v1275 = vunpack.c.0.s8 %v1274
        %v1276 = vlaneseq
        %v1277 = vshrl.u32 %v1276, 7
        %v1278 = vsub.s32 %v1275, %v1277
        %v1279 = vrot.slane %v1272, %v1278
        %v1280 = vcombine.low %v1200, %v1201
        %v1282 = vunpack.c.l.s4 1983009808
        %v1283 = vunpack.c.0.s8 %v1282
        %v1284 = vlaneseq
        %v1285 = vshrl.u32 %v1284, 7
        %v1286 = vsub.s32 %v1283, %v1285
        %v1287 = vrot.slane %v1280, %v1286
        %v1288 = vcombine.low %v1192, %v1199
        %v1290 = vunpack.c.l.s4 1983009808
        %v1291 = vunpack.c.0.s8 %v1290
        %v1292 = vlaneseq
        %v1293 = vshrl.u32 %v1292, 7
        %v1294 = vsub.s32 %v1291, %v1293
        %v1295 = vrot.slane %v1288, %v1294
        %v1296 = vcombine.low %v1202, %v1203
        %v1298 = vunpack.c.l.s4 1983009808
        %v1299 = vunpack.c.0.s8 %v1298
        %v1300 = vlaneseq
        %v1301 = vshrl.u32 %v1300, 7
        %v1302 = vsub.s32 %v1299, %v1301
        %v1303 = vrot.slane %v1296, %v1302
        %v1304 = vcombine.low %v1279, %v1287
        %v1305 = vcombine.high %v1279, %v1287
        %v1307 = vunpack.c.l.s4 1934713408
        %v1308 = vunpack.c.0.s8 %v1307
        %v1309 = vlaneseq
        %v1310 = vshrl.u32 %v1309, 7
        %v1311 = vsub.s32 %v1308, %v1310
        %v1312 = vrot.slane %v1304, %v1311
        %v1314 = vunpack.c.l.s4 1934713408
        %v1315 = vunpack.c.0.s8 %v1314
        %v1316 = vlaneseq
        %v1317 = vshrl.u32 %v1316, 7
        %v1318 = vsub.s32 %v1315, %v1317
        %v1319 = vrot.slane %v1305, %v1318
        %v1320 = vcombine.low %v1295, %v1303
        %v1321 = vcombine.high %v1295, %v1303
        %v1323 = vunpack.c.l.s4 1934713408
        %v1324 = vunpack.c.0.s8 %v1323
        %v1325 = vlaneseq
        %v1326 = vshrl.u32 %v1325, 7
        %v1327 = vsub.s32 %v1324, %v1326
        %v1328 = vrot.slane %v1320, %v1327
        %v1330 = vunpack.c.l.s4 1934713408
        %v1331 = vunpack.c.0.s8 %v1330
        %v1332 = vlaneseq
        %v1333 = vshrl.u32 %v1332, 7
        %v1334 = vsub.s32 %v1331, %v1333
        %v1335 = vrot.slane %v1321, %v1334
        %v1336 = vcombine.low %v1312, %v1328
        %v1337 = vcombine.high %v1312, %v1328
        %v1338 = vcombine.low %v1319, %v1335
        %v1339 = vcombine.high %v1319, %v1335
        %1342 = vrot.lane.b32.xlu0 %v965, 96
        %v1343 = vpop.permute.xlu0 %1342
        %1344 = vrot.lane.b32.xlu0 %v971, 96
        %v1345 = vpop.permute.xlu0 %1344
        %1348 = vrot.lane.b32.xlu0 %v965, 64
        %v1349 = vpop.permute.xlu0 %1348
        %1350 = vrot.lane.b32.xlu0 %v971, 64
        %v1351 = vpop.permute.xlu0 %1350
        %1354 = vrot.lane.b32.xlu0 %v965, 32
        %v1355 = vpop.permute.xlu0 %1354
        %1356 = vrot.lane.b32.xlu0 %v971, 32
        %v1357 = vpop.permute.xlu0 %1356
        %v1360 = vcombine.low %v965, %v1349
        %v1361 = vcombine.high %v965, %v1349
        %v1363 = vunpack.c.l.s4 1983009808
        %v1364 = vunpack.c.0.s8 %v1363
        %v1365 = vlaneseq
        %v1366 = vshrl.u32 %v1365, 7
        %v1367 = vsub.s32 %v1364, %v1366
        %v1368 = vrot.slane %v1360, %v1367
        %v1370 = vunpack.c.l.s4 1983009808
        %v1371 = vunpack.c.0.s8 %v1370
        %v1372 = vlaneseq
        %v1373 = vshrl.u32 %v1372, 7
        %v1374 = vsub.s32 %v1371, %v1373
        %v1375 = vrot.slane %v1361, %v1374
        %v1376 = vcombine.low %v1343, %v1355
        %v1377 = vcombine.high %v1343, %v1355
        %v1379 = vunpack.c.l.s4 1983009808
        %v1380 = vunpack.c.0.s8 %v1379
        %v1381 = vlaneseq
        %v1382 = vshrl.u32 %v1381, 7
        %v1383 = vsub.s32 %v1380, %v1382
        %v1384 = vrot.slane %v1376, %v1383
        %v1386 = vunpack.c.l.s4 1983009808
        %v1387 = vunpack.c.0.s8 %v1386
        %v1388 = vlaneseq
        %v1389 = vshrl.u32 %v1388, 7
        %v1390 = vsub.s32 %v1387, %v1389
        %v1391 = vrot.slane %v1377, %v1390
        %v1392 = vcombine.low %v1368, %v1384
        %v1393 = vcombine.high %v1368, %v1384
        %v1395 = vunpack.c.l.s4 1934713408
        %v1396 = vunpack.c.0.s8 %v1395
        %v1397 = vlaneseq
        %v1398 = vshrl.u32 %v1397, 7
        %v1399 = vsub.s32 %v1396, %v1398
        %v1400 = vrot.slane %v1392, %v1399
        %v1402 = vunpack.c.l.s4 1934713408
        %v1403 = vunpack.c.0.s8 %v1402
        %v1404 = vlaneseq
        %v1405 = vshrl.u32 %v1404, 7
        %v1406 = vsub.s32 %v1403, %v1405
        %v1407 = vrot.slane %v1393, %v1406
        %v1408 = vcombine.low %v1375, %v1391
        %v1409 = vcombine.high %v1375, %v1391
        %v1411 = vunpack.c.l.s4 1934713408
        %v1412 = vunpack.c.0.s8 %v1411
        %v1413 = vlaneseq
        %v1414 = vshrl.u32 %v1413, 7
        %v1415 = vsub.s32 %v1412, %v1414
        %v1416 = vrot.slane %v1408, %v1415
        %v1418 = vunpack.c.l.s4 1934713408
        %v1419 = vunpack.c.0.s8 %v1418
        %v1420 = vlaneseq
        %v1421 = vshrl.u32 %v1420, 7
        %v1422 = vsub.s32 %v1419, %v1421
        %v1423 = vrot.slane %v1409, %v1422
        %v1424 = vcombine.high %v1400, 0.0
        %v1425 = vcombine.high %v1407, 0.0
        %v1426 = vcombine.high %v1416, 0.0
        %v1427 = vcombine.high %v1423, 0.0
        %v1428 = vcombine.low %v971, %v1351
        %v1429 = vcombine.high %v971, %v1351
        %v1431 = vunpack.c.l.s4 1983009808
        %v1432 = vunpack.c.0.s8 %v1431
        %v1433 = vlaneseq
        %v1434 = vshrl.u32 %v1433, 7
        %v1435 = vsub.s32 %v1432, %v1434
        %v1436 = vrot.slane %v1428, %v1435
        %v1438 = vunpack.c.l.s4 1983009808
        %v1439 = vunpack.c.0.s8 %v1438
        %v1440 = vlaneseq
        %v1441 = vshrl.u32 %v1440, 7
        %v1442 = vsub.s32 %v1439, %v1441
        %v1443 = vrot.slane %v1429, %v1442
        %v1444 = vcombine.low %v1345, %v1357
        %v1445 = vcombine.high %v1345, %v1357
        %v1447 = vunpack.c.l.s4 1983009808
        %v1448 = vunpack.c.0.s8 %v1447
        %v1449 = vlaneseq
        %v1450 = vshrl.u32 %v1449, 7
        %v1451 = vsub.s32 %v1448, %v1450
        %v1452 = vrot.slane %v1444, %v1451
        %v1454 = vunpack.c.l.s4 1983009808
        %v1455 = vunpack.c.0.s8 %v1454
        %v1456 = vlaneseq
        %v1457 = vshrl.u32 %v1456, 7
        %v1458 = vsub.s32 %v1455, %v1457
        %v1459 = vrot.slane %v1445, %v1458
        %v1460 = vcombine.low %v1436, %v1452
        %v1461 = vcombine.high %v1436, %v1452
        %v1463 = vunpack.c.l.s4 1934713408
        %v1464 = vunpack.c.0.s8 %v1463
        %v1465 = vlaneseq
        %v1466 = vshrl.u32 %v1465, 7
        %v1467 = vsub.s32 %v1464, %v1466
        %v1468 = vrot.slane %v1460, %v1467
        %v1470 = vunpack.c.l.s4 1934713408
        %v1471 = vunpack.c.0.s8 %v1470
        %v1472 = vlaneseq
        %v1473 = vshrl.u32 %v1472, 7
        %v1474 = vsub.s32 %v1471, %v1473
        %v1475 = vrot.slane %v1461, %v1474
        %v1476 = vcombine.low %v1443, %v1459
        %v1477 = vcombine.high %v1443, %v1459
        %v1479 = vunpack.c.l.s4 1934713408
        %v1480 = vunpack.c.0.s8 %v1479
        %v1481 = vlaneseq
        %v1482 = vshrl.u32 %v1481, 7
        %v1483 = vsub.s32 %v1480, %v1482
        %v1484 = vrot.slane %v1476, %v1483
        %v1486 = vunpack.c.l.s4 1934713408
        %v1487 = vunpack.c.0.s8 %v1486
        %v1488 = vlaneseq
        %v1489 = vshrl.u32 %v1488, 7
        %v1490 = vsub.s32 %v1487, %v1489
        %v1491 = vrot.slane %v1477, %v1490
        %v1492 = vcombine.high %v1468, 0.0
        %v1493 = vcombine.high %v1475, 0.0
        %v1494 = vcombine.high %v1484, 0.0
        %v1495 = vcombine.high %v1491, 0.0
        %v1496 = vcombine.low %v1400, %v1407
        %v1498 = vunpack.c.l.s4 1983009808
        %v1499 = vunpack.c.0.s8 %v1498
        %v1500 = vlaneseq
        %v1501 = vshrl.u32 %v1500, 7
        %v1502 = vsub.s32 %v1499, %v1501
        %v1503 = vrot.slane %v1496, %v1502
        %v1504 = vcombine.low %v1424, %v1425
        %v1506 = vunpack.c.l.s4 1983009808
        %v1507 = vunpack.c.0.s8 %v1506
        %v1508 = vlaneseq
        %v1509 = vshrl.u32 %v1508, 7
        %v1510 = vsub.s32 %v1507, %v1509
        %v1511 = vrot.slane %v1504, %v1510
        %v1512 = vcombine.low %v1416, %v1423
        %v1514 = vunpack.c.l.s4 1983009808
        %v1515 = vunpack.c.0.s8 %v1514
        %v1516 = vlaneseq
        %v1517 = vshrl.u32 %v1516, 7
        %v1518 = vsub.s32 %v1515, %v1517
        %v1519 = vrot.slane %v1512, %v1518
        %v1520 = vcombine.low %v1426, %v1427
        %v1522 = vunpack.c.l.s4 1983009808
        %v1523 = vunpack.c.0.s8 %v1522
        %v1524 = vlaneseq
        %v1525 = vshrl.u32 %v1524, 7
        %v1526 = vsub.s32 %v1523, %v1525
        %v1527 = vrot.slane %v1520, %v1526
        %v1528 = vcombine.low %v1503, %v1511
        %v1529 = vcombine.high %v1503, %v1511
        %v1531 = vunpack.c.l.s4 1934713408
        %v1532 = vunpack.c.0.s8 %v1531
        %v1533 = vlaneseq
        %v1534 = vshrl.u32 %v1533, 7
        %v1535 = vsub.s32 %v1532, %v1534
        %v1536 = vrot.slane %v1528, %v1535
        %v1538 = vunpack.c.l.s4 1934713408
        %v1539 = vunpack.c.0.s8 %v1538
        %v1540 = vlaneseq
        %v1541 = vshrl.u32 %v1540, 7
        %v1542 = vsub.s32 %v1539, %v1541
        %v1543 = vrot.slane %v1529, %v1542
        %v1544 = vcombine.low %v1519, %v1527
        %v1545 = vcombine.high %v1519, %v1527
        %v1547 = vunpack.c.l.s4 1934713408
        %v1548 = vunpack.c.0.s8 %v1547
        %v1549 = vlaneseq
        %v1550 = vshrl.u32 %v1549, 7
        %v1551 = vsub.s32 %v1548, %v1550
        %v1552 = vrot.slane %v1544, %v1551
        %v1554 = vunpack.c.l.s4 1934713408
        %v1555 = vunpack.c.0.s8 %v1554
        %v1556 = vlaneseq
        %v1557 = vshrl.u32 %v1556, 7
        %v1558 = vsub.s32 %v1555, %v1557
        %v1559 = vrot.slane %v1545, %v1558
        %v1560 = vcombine.low %v1536, %v1552
        %v1561 = vcombine.high %v1536, %v1552
        %v1562 = vcombine.low %v1543, %v1559
        %v1563 = vcombine.high %v1543, %v1559
        %v1564 = vcombine.low %v1468, %v1475
        %v1566 = vunpack.c.l.s4 1983009808
        %v1567 = vunpack.c.0.s8 %v1566
        %v1568 = vlaneseq
        %v1569 = vshrl.u32 %v1568, 7
        %v1570 = vsub.s32 %v1567, %v1569
        %v1571 = vrot.slane %v1564, %v1570
        %v1572 = vcombine.low %v1492, %v1493
        %v1574 = vunpack.c.l.s4 1983009808
        %v1575 = vunpack.c.0.s8 %v1574
        %v1576 = vlaneseq
        %v1577 = vshrl.u32 %v1576, 7
        %v1578 = vsub.s32 %v1575, %v1577
        %v1579 = vrot.slane %v1572, %v1578
        %v1580 = vcombine.low %v1484, %v1491
        %v1582 = vunpack.c.l.s4 1983009808
        %v1583 = vunpack.c.0.s8 %v1582
        %v1584 = vlaneseq
        %v1585 = vshrl.u32 %v1584, 7
        %v1586 = vsub.s32 %v1583, %v1585
        %v1587 = vrot.slane %v1580, %v1586
        %v1588 = vcombine.low %v1494, %v1495
        %v1590 = vunpack.c.l.s4 1983009808
        %v1591 = vunpack.c.0.s8 %v1590
        %v1592 = vlaneseq
        %v1593 = vshrl.u32 %v1592, 7
        %v1594 = vsub.s32 %v1591, %v1593
        %v1595 = vrot.slane %v1588, %v1594
        %v1596 = vcombine.low %v1571, %v1579
        %v1597 = vcombine.high %v1571, %v1579
        %v1599 = vunpack.c.l.s4 1934713408
        %v1600 = vunpack.c.0.s8 %v1599
        %v1601 = vlaneseq
        %v1602 = vshrl.u32 %v1601, 7
        %v1603 = vsub.s32 %v1600, %v1602
        %v1604 = vrot.slane %v1596, %v1603
        %v1606 = vunpack.c.l.s4 1934713408
        %v1607 = vunpack.c.0.s8 %v1606
        %v1608 = vlaneseq
        %v1609 = vshrl.u32 %v1608, 7
        %v1610 = vsub.s32 %v1607, %v1609
        %v1611 = vrot.slane %v1597, %v1610
        %v1612 = vcombine.low %v1587, %v1595
        %v1613 = vcombine.high %v1587, %v1595
        %v1615 = vunpack.c.l.s4 1934713408
        %v1616 = vunpack.c.0.s8 %v1615
        %v1617 = vlaneseq
        %v1618 = vshrl.u32 %v1617, 7
        %v1619 = vsub.s32 %v1616, %v1618
        %v1620 = vrot.slane %v1612, %v1619
        %v1622 = vunpack.c.l.s4 1934713408
        %v1623 = vunpack.c.0.s8 %v1622
        %v1624 = vlaneseq
        %v1625 = vshrl.u32 %v1624, 7
        %v1626 = vsub.s32 %v1623, %v1625
        %v1627 = vrot.slane %v1613, %v1626
        %v1628 = vcombine.low %v1604, %v1620
        %v1629 = vcombine.high %v1604, %v1620
        %v1630 = vcombine.low %v1611, %v1627
        %v1631 = vcombine.high %v1611, %v1627
        %1634 = vrot.lane.b32.xlu0 %v1040, 96
        %v1635 = vpop.permute.xlu0 %1634
        %1636 = vrot.lane.b32.xlu0 %v1045, 96
        %v1637 = vpop.permute.xlu0 %1636
        %1640 = vrot.lane.b32.xlu0 %v1040, 64
        %v1641 = vpop.permute.xlu0 %1640
        %1642 = vrot.lane.b32.xlu0 %v1045, 64
        %v1643 = vpop.permute.xlu0 %1642
        %1646 = vrot.lane.b32.xlu0 %v1040, 32
        %v1647 = vpop.permute.xlu0 %1646
        %1648 = vrot.lane.b32.xlu0 %v1045, 32
        %v1649 = vpop.permute.xlu0 %1648
        %v1652 = vcombine.low %v1040, %v1641
        %v1653 = vcombine.high %v1040, %v1641
        %v1655 = vunpack.c.l.s4 1983009808
        %v1656 = vunpack.c.0.s8 %v1655
        %v1657 = vlaneseq
        %v1658 = vshrl.u32 %v1657, 7
        %v1659 = vsub.s32 %v1656, %v1658
        %v1660 = vrot.slane %v1652, %v1659
        %v1662 = vunpack.c.l.s4 1983009808
        %v1663 = vunpack.c.0.s8 %v1662
        %v1664 = vlaneseq
        %v1665 = vshrl.u32 %v1664, 7
        %v1666 = vsub.s32 %v1663, %v1665
        %v1667 = vrot.slane %v1653, %v1666
        %v1668 = vcombine.low %v1635, %v1647
        %v1669 = vcombine.high %v1635, %v1647
        %v1671 = vunpack.c.l.s4 1983009808
        %v1672 = vunpack.c.0.s8 %v1671
        %v1673 = vlaneseq
        %v1674 = vshrl.u32 %v1673, 7
        %v1675 = vsub.s32 %v1672, %v1674
        %v1676 = vrot.slane %v1668, %v1675
        %v1678 = vunpack.c.l.s4 1983009808
        %v1679 = vunpack.c.0.s8 %v1678
        %v1680 = vlaneseq
        %v1681 = vshrl.u32 %v1680, 7
        %v1682 = vsub.s32 %v1679, %v1681
        %v1683 = vrot.slane %v1669, %v1682
        %v1684 = vcombine.low %v1660, %v1676
        %v1685 = vcombine.high %v1660, %v1676
        %v1687 = vunpack.c.l.s4 1934713408
        %v1688 = vunpack.c.0.s8 %v1687
        %v1689 = vlaneseq
        %v1690 = vshrl.u32 %v1689, 7
        %v1691 = vsub.s32 %v1688, %v1690
        %v1692 = vrot.slane %v1684, %v1691
        %v1694 = vunpack.c.l.s4 1934713408
        %v1695 = vunpack.c.0.s8 %v1694
        %v1696 = vlaneseq
        %v1697 = vshrl.u32 %v1696, 7
        %v1698 = vsub.s32 %v1695, %v1697
        %v1699 = vrot.slane %v1685, %v1698
        %v1700 = vcombine.low %v1667, %v1683
        %v1701 = vcombine.high %v1667, %v1683
        %v1703 = vunpack.c.l.s4 1934713408
        %v1704 = vunpack.c.0.s8 %v1703
        %v1705 = vlaneseq
        %v1706 = vshrl.u32 %v1705, 7
        %v1707 = vsub.s32 %v1704, %v1706
        %v1708 = vrot.slane %v1700, %v1707
        %v1710 = vunpack.c.l.s4 1934713408
        %v1711 = vunpack.c.0.s8 %v1710
        %v1712 = vlaneseq
        %v1713 = vshrl.u32 %v1712, 7
        %v1714 = vsub.s32 %v1711, %v1713
        %v1715 = vrot.slane %v1701, %v1714
        %v1716 = vcombine.high %v1692, 0.0
        %v1717 = vcombine.high %v1699, 0.0
        %v1718 = vcombine.high %v1708, 0.0
        %v1719 = vcombine.high %v1715, 0.0
        %v1720 = vcombine.low %v1045, %v1643
        %v1721 = vcombine.high %v1045, %v1643
        %v1723 = vunpack.c.l.s4 1983009808
        %v1724 = vunpack.c.0.s8 %v1723
        %v1725 = vlaneseq
        %v1726 = vshrl.u32 %v1725, 7
        %v1727 = vsub.s32 %v1724, %v1726
        %v1728 = vrot.slane %v1720, %v1727
        %v1730 = vunpack.c.l.s4 1983009808
        %v1731 = vunpack.c.0.s8 %v1730
        %v1732 = vlaneseq
        %v1733 = vshrl.u32 %v1732, 7
        %v1734 = vsub.s32 %v1731, %v1733
        %v1735 = vrot.slane %v1721, %v1734
        %v1736 = vcombine.low %v1637, %v1649
        %v1737 = vcombine.high %v1637, %v1649
        %v1739 = vunpack.c.l.s4 1983009808
        %v1740 = vunpack.c.0.s8 %v1739
        %v1741 = vlaneseq
        %v1742 = vshrl.u32 %v1741, 7
        %v1743 = vsub.s32 %v1740, %v1742
        %v1744 = vrot.slane %v1736, %v1743
        %v1746 = vunpack.c.l.s4 1983009808
        %v1747 = vunpack.c.0.s8 %v1746
        %v1748 = vlaneseq
        %v1749 = vshrl.u32 %v1748, 7
        %v1750 = vsub.s32 %v1747, %v1749
        %v1751 = vrot.slane %v1737, %v1750
        %v1752 = vcombine.low %v1728, %v1744
        %v1753 = vcombine.high %v1728, %v1744
        %v1755 = vunpack.c.l.s4 1934713408
        %v1756 = vunpack.c.0.s8 %v1755
        %v1757 = vlaneseq
        %v1758 = vshrl.u32 %v1757, 7
        %v1759 = vsub.s32 %v1756, %v1758
        %v1760 = vrot.slane %v1752, %v1759
        %v1762 = vunpack.c.l.s4 1934713408
        %v1763 = vunpack.c.0.s8 %v1762
        %v1764 = vlaneseq
        %v1765 = vshrl.u32 %v1764, 7
        %v1766 = vsub.s32 %v1763, %v1765
        %v1767 = vrot.slane %v1753, %v1766
        %v1768 = vcombine.low %v1735, %v1751
        %v1769 = vcombine.high %v1735, %v1751
        %v1771 = vunpack.c.l.s4 1934713408
        %v1772 = vunpack.c.0.s8 %v1771
        %v1773 = vlaneseq
        %v1774 = vshrl.u32 %v1773, 7
        %v1775 = vsub.s32 %v1772, %v1774
        %v1776 = vrot.slane %v1768, %v1775
        %v1778 = vunpack.c.l.s4 1934713408
        %v1779 = vunpack.c.0.s8 %v1778
        %v1780 = vlaneseq
        %v1781 = vshrl.u32 %v1780, 7
        %v1782 = vsub.s32 %v1779, %v1781
        %v1783 = vrot.slane %v1769, %v1782
        %v1784 = vcombine.high %v1760, 0.0
        %v1785 = vcombine.high %v1767, 0.0
        %v1786 = vcombine.high %v1776, 0.0
        %v1787 = vcombine.high %v1783, 0.0
        %v1788 = vcombine.low %v1692, %v1699
        %v1790 = vunpack.c.l.s4 1983009808
        %v1791 = vunpack.c.0.s8 %v1790
        %v1792 = vlaneseq
        %v1793 = vshrl.u32 %v1792, 7
        %v1794 = vsub.s32 %v1791, %v1793
        %v1795 = vrot.slane %v1788, %v1794
        %v1796 = vcombine.low %v1716, %v1717
        %v1798 = vunpack.c.l.s4 1983009808
        %v1799 = vunpack.c.0.s8 %v1798
        %v1800 = vlaneseq
        %v1801 = vshrl.u32 %v1800, 7
        %v1802 = vsub.s32 %v1799, %v1801
        %v1803 = vrot.slane %v1796, %v1802
        %v1804 = vcombine.low %v1708, %v1715
        %v1806 = vunpack.c.l.s4 1983009808
        %v1807 = vunpack.c.0.s8 %v1806
        %v1808 = vlaneseq
        %v1809 = vshrl.u32 %v1808, 7
        %v1810 = vsub.s32 %v1807, %v1809
        %v1811 = vrot.slane %v1804, %v1810
        %v1812 = vcombine.low %v1718, %v1719
        %v1814 = vunpack.c.l.s4 1983009808
        %v1815 = vunpack.c.0.s8 %v1814
        %v1816 = vlaneseq
        %v1817 = vshrl.u32 %v1816, 7
        %v1818 = vsub.s32 %v1815, %v1817
        %v1819 = vrot.slane %v1812, %v1818
        %v1820 = vcombine.low %v1795, %v1803
        %v1821 = vcombine.high %v1795, %v1803
        %v1823 = vunpack.c.l.s4 1934713408
        %v1824 = vunpack.c.0.s8 %v1823
        %v1825 = vlaneseq
        %v1826 = vshrl.u32 %v1825, 7
        %v1827 = vsub.s32 %v1824, %v1826
        %v1828 = vrot.slane %v1820, %v1827
        %v1830 = vunpack.c.l.s4 1934713408
        %v1831 = vunpack.c.0.s8 %v1830
        %v1832 = vlaneseq
        %v1833 = vshrl.u32 %v1832, 7
        %v1834 = vsub.s32 %v1831, %v1833
        %v1835 = vrot.slane %v1821, %v1834
        %v1836 = vcombine.low %v1811, %v1819
        %v1837 = vcombine.high %v1811, %v1819
        %v1839 = vunpack.c.l.s4 1934713408
        %v1840 = vunpack.c.0.s8 %v1839
        %v1841 = vlaneseq
        %v1842 = vshrl.u32 %v1841, 7
        %v1843 = vsub.s32 %v1840, %v1842
        %v1844 = vrot.slane %v1836, %v1843
        %v1846 = vunpack.c.l.s4 1934713408
        %v1847 = vunpack.c.0.s8 %v1846
        %v1848 = vlaneseq
        %v1849 = vshrl.u32 %v1848, 7
        %v1850 = vsub.s32 %v1847, %v1849
        %v1851 = vrot.slane %v1837, %v1850
        %v1852 = vcombine.low %v1828, %v1844
        %v1853 = vcombine.high %v1828, %v1844
        %v1854 = vcombine.low %v1835, %v1851
        %v1855 = vcombine.high %v1835, %v1851
        %v1856 = vcombine.low %v1760, %v1767
        %v1858 = vunpack.c.l.s4 1983009808
        %v1859 = vunpack.c.0.s8 %v1858
        %v1860 = vlaneseq
        %v1861 = vshrl.u32 %v1860, 7
        %v1862 = vsub.s32 %v1859, %v1861
        %v1863 = vrot.slane %v1856, %v1862
        %v1864 = vcombine.low %v1784, %v1785
        %v1866 = vunpack.c.l.s4 1983009808
        %v1867 = vunpack.c.0.s8 %v1866
        %v1868 = vlaneseq
        %v1869 = vshrl.u32 %v1868, 7
        %v1870 = vsub.s32 %v1867, %v1869
        %v1871 = vrot.slane %v1864, %v1870
        %v1872 = vcombine.low %v1776, %v1783
        %v1874 = vunpack.c.l.s4 1983009808
        %v1875 = vunpack.c.0.s8 %v1874
        %v1876 = vlaneseq
        %v1877 = vshrl.u32 %v1876, 7
        %v1878 = vsub.s32 %v1875, %v1877
        %v1879 = vrot.slane %v1872, %v1878
        %v1880 = vcombine.low %v1786, %v1787
        %v1882 = vunpack.c.l.s4 1983009808
        %v1883 = vunpack.c.0.s8 %v1882
        %v1884 = vlaneseq
        %v1885 = vshrl.u32 %v1884, 7
        %v1886 = vsub.s32 %v1883, %v1885
        %v1887 = vrot.slane %v1880, %v1886
        %v1888 = vcombine.low %v1863, %v1871
        %v1889 = vcombine.high %v1863, %v1871
        %v1891 = vunpack.c.l.s4 1934713408
        %v1892 = vunpack.c.0.s8 %v1891
        %v1893 = vlaneseq
        %v1894 = vshrl.u32 %v1893, 7
        %v1895 = vsub.s32 %v1892, %v1894
        %v1896 = vrot.slane %v1888, %v1895
        %v1898 = vunpack.c.l.s4 1934713408
        %v1899 = vunpack.c.0.s8 %v1898
        %v1900 = vlaneseq
        %v1901 = vshrl.u32 %v1900, 7
        %v1902 = vsub.s32 %v1899, %v1901
        %v1903 = vrot.slane %v1889, %v1902
        %v1904 = vcombine.low %v1879, %v1887
        %v1905 = vcombine.high %v1879, %v1887
        %v1907 = vunpack.c.l.s4 1934713408
        %v1908 = vunpack.c.0.s8 %v1907
        %v1909 = vlaneseq
        %v1910 = vshrl.u32 %v1909, 7
        %v1911 = vsub.s32 %v1908, %v1910
        %v1912 = vrot.slane %v1904, %v1911
        %v1914 = vunpack.c.l.s4 1934713408
        %v1915 = vunpack.c.0.s8 %v1914
        %v1916 = vlaneseq
        %v1917 = vshrl.u32 %v1916, 7
        %v1918 = vsub.s32 %v1915, %v1917
        %v1919 = vrot.slane %v1905, %v1918
        %v1920 = vcombine.low %v1896, %v1912
        %v1921 = vcombine.high %v1896, %v1912
        %v1922 = vcombine.low %v1903, %v1919
        %v1923 = vcombine.high %v1903, %v1919
        %vm1924 = vcmask 261120
        %v1926 = vsel %vm1924, %v1268, 0
        %v1929 = vsel %vm1924, %v1336, 0
        %v1932 = vsel %vm1924, %v1560, 0
        %v1935 = vsel %vm1924, %v1628, 0
        %1937 = vmatprep.subr.mxu0 0.0
        %1938 = vmatpush1.xpose.msra.mxu0 %v1932
        %1939 = vmatprep.subr.mxu0 0.0
        %1940 = vmatpush1.xpose.msra.mxu0 %v1935
        %1941 = vmatprep.subr.mxu0 0.0
        %1942 = vmatpush1.xpose.msra.mxu0 0.0
        %1943 = vmatprep.subr.mxu0 0.0
        %1944 = vmatpush1.xpose.msra.mxu0 0.0
        %1945 = vmatprep.subr.mxu0 0.0
        %1946 = vmatpush1.xpose.msra.mxu0 0.0
        %1947 = vmatprep.subr.mxu0 0.0
        %1948 = vmatpush1.xpose.msra.mxu0 0.0
        %1949 = vmatprep.subr.mxu0 0.0
        %1950 = vmatpush1.xpose.msra.mxu0 0.0
        %1951 = vmatprep.subr.mxu0 0.0
        %1952 = vmatpush1.xpose.msra.mxu0 0.0
        %1953 = vmatprep.subr.mxu0 0.0
        %1954 = vmatpush1.xpose.msra.mxu0 0.0
        %1955 = vmatprep.subr.mxu0 0.0
        %1956 = vmatpush1.xpose.msra.mxu0 0.0
        %1957 = vmatprep.subr.mxu0 0.0
        %1958 = vmatpush1.xpose.msra.mxu0 0.0
        %1959 = vmatprep.subr.mxu0 0.0
        %1960 = vmatpush1.xpose.msra.mxu0 0.0
        %1961 = vmatprep.subr.mxu0 0.0
        %1962 = vmatpush1.xpose.msra.mxu0 0.0
        %1963 = vmatprep.subr.mxu0 0.0
        %1964 = vmatpush1.xpose.msra.mxu0 0.0
        %1965 = vmatprep.subr.mxu0 0.0
        %1966 = vmatpush1.xpose.msra.mxu0 0.0
        %1967 = vmatprep.subr.mxu0 0.0
        %1968 = vmatpush1.xpose.msra.mxu0 0.0
        %1969 = vmatprep.subr.mxu0 0.0
        %1970 = vmatpush1.xpose.msra.mxu0 0.0
        %1971 = vmatprep.subr.mxu0 0.0
        %1972 = vmatpush1.xpose.msra.mxu0 0.0
        %1973 = vmatprep.subr.mxu0 0.0
        %1974 = vmatpush1.xpose.msra.mxu0 0.0
        %1975 = vmatprep.subr.mxu0 0.0
        %1976 = vmatpush1.xpose.msra.mxu0 0.0
        %1977 = vmatprep.subr.mxu0 0.0
        %1978 = vmatpush1.xpose.msra.mxu0 0.0
        %1979 = vmatprep.subr.mxu0 0.0
        %1980 = vmatpush1.xpose.msra.mxu0 0.0
        %1981 = vmatprep.subr.mxu0 0.0
        %1982 = vmatpush1.xpose.msra.mxu0 0.0
        %1983 = vmatprep.subr.mxu0 0.0
        %1984 = vmatpush1.xpose.msra.mxu0 0.0
        %1985 = vmatprep.subr.mxu0 0.0
        %1986 = vmatpush1.xpose.msra.mxu0 0.0
        %1987 = vmatprep.subr.mxu0 0.0
        %1988 = vmatpush1.xpose.msra.mxu0 0.0
        %1989 = vmatprep.subr.mxu0 0.0
        %1990 = vmatpush1.xpose.msra.mxu0 0.0
        %1991 = vmatprep.subr.mxu0 0.0
        %1992 = vmatpush1.xpose.msra.mxu0 0.0
        %1993 = vmatprep.subr.mxu0 0.0
        %1994 = vmatpush1.xpose.msra.mxu0 0.0
        %1995 = vmatprep.subr.mxu0 0.0
        %1996 = vmatpush1.xpose.msra.mxu0 0.0
        %1997 = vmatprep.subr.mxu0 0.0
        %1998 = vmatpush1.xpose.msra.mxu0 0.0
        %1999 = vmatprep.subr.mxu0 0.0
        %2000 = vmatpush1.xpose.msra.mxu0 0.0
        %2001 = vmatprep.mubr.f32.mxu0 0.0
        %2002 = vmatmul.mubr.f32.gmra.mrb[0].mxu0 %v1926
        %v2003 = vpop.f32.mrb[0].mxu0
        %v2004 = vadd.f32 0.0, %v2003
        %v2005 = vpop.f32.mrb[0].mxu0
        %2006 = vmatprep.mubr.f32.mxu0 0.0
        %2007 = vmatmul.mubr.f32.gmra.mrb[0].mxu0 %v1929
        %v2008 = vpop.f32.mrb[0].mxu0
        %v2009 = vadd.f32 0.0, %v2008
        %v2010 = vpop.f32.mrb[0].mxu0
        %2011 = vdwg.mxu0
        %v2013 = vsel %vm1924, %v1269, 0
        %v2016 = vsel %vm1924, %v1337, 0
        %v2019 = vsel %vm1924, %v1561, 0
        %v2022 = vsel %vm1924, %v1629, 0
        %2024 = vmatprep.subr.mxu0 0.0
        %2025 = vmatpush1.xpose.msra.mxu0 %v2019
        %2026 = vmatprep.subr.mxu0 0.0
        %2027 = vmatpush1.xpose.msra.mxu0 %v2022
        %2028 = vmatprep.subr.mxu0 0.0
        %2029 = vmatpush1.xpose.msra.mxu0 0.0
        %2030 = vmatprep.subr.mxu0 0.0
        %2031 = vmatpush1.xpose.msra.mxu0 0.0
        %2032 = vmatprep.subr.mxu0 0.0
        %2033 = vmatpush1.xpose.msra.mxu0 0.0
        %2034 = vmatprep.subr.mxu0 0.0
        %2035 = vmatpush1.xpose.msra.mxu0 0.0
        %2036 = vmatprep.subr.mxu0 0.0
        %2037 = vmatpush1.xpose.msra.mxu0 0.0
        %2038 = vmatprep.subr.mxu0 0.0
        %2039 = vmatpush1.xpose.msra.mxu0 0.0
        %2040 = vmatprep.subr.mxu0 0.0
        %2041 = vmatpush1.xpose.msra.mxu0 0.0
        %2042 = vmatprep.subr.mxu0 0.0
        %2043 = vmatpush1.xpose.msra.mxu0 0.0
        %2044 = vmatprep.subr.mxu0 0.0
        %2045 = vmatpush1.xpose.msra.mxu0 0.0
        %2046 = vmatprep.subr.mxu0 0.0
        %2047 = vmatpush1.xpose.msra.mxu0 0.0
        %2048 = vmatprep.subr.mxu0 0.0
        %2049 = vmatpush1.xpose.msra.mxu0 0.0
        %2050 = vmatprep.subr.mxu0 0.0
        %2051 = vmatpush1.xpose.msra.mxu0 0.0
        %2052 = vmatprep.subr.mxu0 0.0
        %2053 = vmatpush1.xpose.msra.mxu0 0.0
        %2054 = vmatprep.subr.mxu0 0.0
        %2055 = vmatpush1.xpose.msra.mxu0 0.0
        %2056 = vmatprep.subr.mxu0 0.0
        %2057 = vmatpush1.xpose.msra.mxu0 0.0
        %2058 = vmatprep.subr.mxu0 0.0
        %2059 = vmatpush1.xpose.msra.mxu0 0.0
        %2060 = vmatprep.subr.mxu0 0.0
        %2061 = vmatpush1.xpose.msra.mxu0 0.0
        %2062 = vmatprep.subr.mxu0 0.0
        %2063 = vmatpush1.xpose.msra.mxu0 0.0
        %2064 = vmatprep.subr.mxu0 0.0
        %2065 = vmatpush1.xpose.msra.mxu0 0.0
        %2066 = vmatprep.subr.mxu0 0.0
        %2067 = vmatpush1.xpose.msra.mxu0 0.0
        %2068 = vmatprep.subr.mxu0 0.0
        %2069 = vmatpush1.xpose.msra.mxu0 0.0
        %2070 = vmatprep.subr.mxu0 0.0
        %2071 = vmatpush1.xpose.msra.mxu0 0.0
        %2072 = vmatprep.subr.mxu0 0.0
        %2073 = vmatpush1.xpose.msra.mxu0 0.0
        %2074 = vmatprep.subr.mxu0 0.0
        %2075 = vmatpush1.xpose.msra.mxu0 0.0
        %2076 = vmatprep.subr.mxu0 0.0
        %2077 = vmatpush1.xpose.msra.mxu0 0.0
        %2078 = vmatprep.subr.mxu0 0.0
        %2079 = vmatpush1.xpose.msra.mxu0 0.0
        %2080 = vmatprep.subr.mxu0 0.0
        %2081 = vmatpush1.xpose.msra.mxu0 0.0
        %2082 = vmatprep.subr.mxu0 0.0
        %2083 = vmatpush1.xpose.msra.mxu0 0.0
        %2084 = vmatprep.subr.mxu0 0.0
        %2085 = vmatpush1.xpose.msra.mxu0 0.0
        %2086 = vmatprep.subr.mxu0 0.0
        %2087 = vmatpush1.xpose.msra.mxu0 0.0
        %2088 = vmatprep.mubr.f32.mxu0 0.0
        %2089 = vmatmul.mubr.f32.gmra.mrb[0].mxu0 %v2013
        %v2090 = vpop.f32.mrb[0].mxu0
        %v2091 = vadd.f32 0.0, %v2090
        %v2092 = vpop.f32.mrb[0].mxu0
        %2093 = vmatprep.mubr.f32.mxu0 0.0
        %2094 = vmatmul.mubr.f32.gmra.mrb[0].mxu0 %v2016
        %v2095 = vpop.f32.mrb[0].mxu0
        %v2096 = vadd.f32 0.0, %v2095
        %v2097 = vpop.f32.mrb[0].mxu0
        %2098 = vdwg.mxu0
        %v2100 = vsel %vm1924, %v1270, 0
        %v2103 = vsel %vm1924, %v1338, 0
        %v2106 = vsel %vm1924, %v1562, 0
        %v2109 = vsel %vm1924, %v1630, 0
        %2111 = vmatprep.subr.mxu0 0.0
        %2112 = vmatpush1.xpose.msra.mxu0 %v2106
        %2113 = vmatprep.subr.mxu0 0.0
        %2114 = vmatpush1.xpose.msra.mxu0 %v2109
        %2115 = vmatprep.subr.mxu0 0.0
        %2116 = vmatpush1.xpose.msra.mxu0 0.0
        %2117 = vmatprep.subr.mxu0 0.0
        %2118 = vmatpush1.xpose.msra.mxu0 0.0
        %2119 = vmatprep.subr.mxu0 0.0
        %2120 = vmatpush1.xpose.msra.mxu0 0.0
        %2121 = vmatprep.subr.mxu0 0.0
        %2122 = vmatpush1.xpose.msra.mxu0 0.0
        %2123 = vmatprep.subr.mxu0 0.0
        %2124 = vmatpush1.xpose.msra.mxu0 0.0
        %2125 = vmatprep.subr.mxu0 0.0
        %2126 = vmatpush1.xpose.msra.mxu0 0.0
        %2127 = vmatprep.subr.mxu0 0.0
        %2128 = vmatpush1.xpose.msra.mxu0 0.0
        %2129 = vmatprep.subr.mxu0 0.0
        %2130 = vmatpush1.xpose.msra.mxu0 0.0
        %2131 = vmatprep.subr.mxu0 0.0
        %2132 = vmatpush1.xpose.msra.mxu0 0.0
        %2133 = vmatprep.subr.mxu0 0.0
        %2134 = vmatpush1.xpose.msra.mxu0 0.0
        %2135 = vmatprep.subr.mxu0 0.0
        %2136 = vmatpush1.xpose.msra.mxu0 0.0
        %2137 = vmatprep.subr.mxu0 0.0
        %2138 = vmatpush1.xpose.msra.mxu0 0.0
        %2139 = vmatprep.subr.mxu0 0.0
        %2140 = vmatpush1.xpose.msra.mxu0 0.0
        %2141 = vmatprep.subr.mxu0 0.0
        %2142 = vmatpush1.xpose.msra.mxu0 0.0
        %2143 = vmatprep.subr.mxu0 0.0
        %2144 = vmatpush1.xpose.msra.mxu0 0.0
        %2145 = vmatprep.subr.mxu0 0.0
        %2146 = vmatpush1.xpose.msra.mxu0 0.0
        %2147 = vmatprep.subr.mxu0 0.0
        %2148 = vmatpush1.xpose.msra.mxu0 0.0
        %2149 = vmatprep.subr.mxu0 0.0
        %2150 = vmatpush1.xpose.msra.mxu0 0.0
        %2151 = vmatprep.subr.mxu0 0.0
        %2152 = vmatpush1.xpose.msra.mxu0 0.0
        %2153 = vmatprep.subr.mxu0 0.0
        %2154 = vmatpush1.xpose.msra.mxu0 0.0
        %2155 = vmatprep.subr.mxu0 0.0
        %2156 = vmatpush1.xpose.msra.mxu0 0.0
        %2157 = vmatprep.subr.mxu0 0.0
        %2158 = vmatpush1.xpose.msra.mxu0 0.0
        %2159 = vmatprep.subr.mxu0 0.0
        %2160 = vmatpush1.xpose.msra.mxu0 0.0
        %2161 = vmatprep.subr.mxu0 0.0
        %2162 = vmatpush1.xpose.msra.mxu0 0.0
        %2163 = vmatprep.subr.mxu0 0.0
        %2164 = vmatpush1.xpose.msra.mxu0 0.0
        %2165 = vmatprep.subr.mxu0 0.0
        %2166 = vmatpush1.xpose.msra.mxu0 0.0
        %2167 = vmatprep.subr.mxu0 0.0
        %2168 = vmatpush1.xpose.msra.mxu0 0.0
        %2169 = vmatprep.subr.mxu0 0.0
        %2170 = vmatpush1.xpose.msra.mxu0 0.0
        %2171 = vmatprep.subr.mxu0 0.0
        %2172 = vmatpush1.xpose.msra.mxu0 0.0
        %2173 = vmatprep.subr.mxu0 0.0
        %2174 = vmatpush1.xpose.msra.mxu0 0.0
        %2175 = vmatprep.mubr.f32.mxu0 0.0
        %2176 = vmatmul.mubr.f32.gmra.mrb[0].mxu0 %v2100
        %v2177 = vpop.f32.mrb[0].mxu0
        %v2178 = vadd.f32 0.0, %v2177
        %v2179 = vpop.f32.mrb[0].mxu0
        %2180 = vmatprep.mubr.f32.mxu0 0.0
        %2181 = vmatmul.mubr.f32.gmra.mrb[0].mxu0 %v2103
        %v2182 = vpop.f32.mrb[0].mxu0
        %v2183 = vadd.f32 0.0, %v2182
        %v2184 = vpop.f32.mrb[0].mxu0
        %2185 = vdwg.mxu0
        %v2187 = vsel %vm1924, %v1271, 0
        %v2190 = vsel %vm1924, %v1339, 0
        %v2193 = vsel %vm1924, %v1563, 0
        %v2196 = vsel %vm1924, %v1631, 0
        %2198 = vmatprep.subr.mxu0 0.0
        %2199 = vmatpush1.xpose.msra.mxu0 %v2193
        %2200 = vmatprep.subr.mxu0 0.0
        %2201 = vmatpush1.xpose.msra.mxu0 %v2196
        %2202 = vmatprep.subr.mxu0 0.0
        %2203 = vmatpush1.xpose.msra.mxu0 0.0
        %2204 = vmatprep.subr.mxu0 0.0
        %2205 = vmatpush1.xpose.msra.mxu0 0.0
        %2206 = vmatprep.subr.mxu0 0.0
        %2207 = vmatpush1.xpose.msra.mxu0 0.0
        %2208 = vmatprep.subr.mxu0 0.0
        %2209 = vmatpush1.xpose.msra.mxu0 0.0
        %2210 = vmatprep.subr.mxu0 0.0
        %2211 = vmatpush1.xpose.msra.mxu0 0.0
        %2212 = vmatprep.subr.mxu0 0.0
        %2213 = vmatpush1.xpose.msra.mxu0 0.0
        %2214 = vmatprep.subr.mxu0 0.0
        %2215 = vmatpush1.xpose.msra.mxu0 0.0
        %2216 = vmatprep.subr.mxu0 0.0
        %2217 = vmatpush1.xpose.msra.mxu0 0.0
        %2218 = vmatprep.subr.mxu0 0.0
        %2219 = vmatpush1.xpose.msra.mxu0 0.0
        %2220 = vmatprep.subr.mxu0 0.0
        %2221 = vmatpush1.xpose.msra.mxu0 0.0
        %2222 = vmatprep.subr.mxu0 0.0
        %2223 = vmatpush1.xpose.msra.mxu0 0.0
        %2224 = vmatprep.subr.mxu0 0.0
        %2225 = vmatpush1.xpose.msra.mxu0 0.0
        %2226 = vmatprep.subr.mxu0 0.0
        %2227 = vmatpush1.xpose.msra.mxu0 0.0
        %2228 = vmatprep.subr.mxu0 0.0
        %2229 = vmatpush1.xpose.msra.mxu0 0.0
        %2230 = vmatprep.subr.mxu0 0.0
        %2231 = vmatpush1.xpose.msra.mxu0 0.0
        %2232 = vmatprep.subr.mxu0 0.0
        %2233 = vmatpush1.xpose.msra.mxu0 0.0
        %2234 = vmatprep.subr.mxu0 0.0
        %2235 = vmatpush1.xpose.msra.mxu0 0.0
        %2236 = vmatprep.subr.mxu0 0.0
        %2237 = vmatpush1.xpose.msra.mxu0 0.0
        %2238 = vmatprep.subr.mxu0 0.0
        %2239 = vmatpush1.xpose.msra.mxu0 0.0
        %2240 = vmatprep.subr.mxu0 0.0
        %2241 = vmatpush1.xpose.msra.mxu0 0.0
        %2242 = vmatprep.subr.mxu0 0.0
        %2243 = vmatpush1.xpose.msra.mxu0 0.0
        %2244 = vmatprep.subr.mxu0 0.0
        %2245 = vmatpush1.xpose.msra.mxu0 0.0
        %2246 = vmatprep.subr.mxu0 0.0
        %2247 = vmatpush1.xpose.msra.mxu0 0.0
        %2248 = vmatprep.subr.mxu0 0.0
        %2249 = vmatpush1.xpose.msra.mxu0 0.0
        %2250 = vmatprep.subr.mxu0 0.0
        %2251 = vmatpush1.xpose.msra.mxu0 0.0
        %2252 = vmatprep.subr.mxu0 0.0
        %2253 = vmatpush1.xpose.msra.mxu0 0.0
        %2254 = vmatprep.subr.mxu0 0.0
        %2255 = vmatpush1.xpose.msra.mxu0 0.0
        %2256 = vmatprep.subr.mxu0 0.0
        %2257 = vmatpush1.xpose.msra.mxu0 0.0
        %2258 = vmatprep.subr.mxu0 0.0
        %2259 = vmatpush1.xpose.msra.mxu0 0.0
        %2260 = vmatprep.subr.mxu0 0.0
        %2261 = vmatpush1.xpose.msra.mxu0 0.0
        %2262 = vmatprep.mubr.f32.mxu0 0.0
        %2263 = vmatmul.mubr.f32.gmra.mrb[0].mxu0 %v2187
        %v2264 = vpop.f32.mrb[0].mxu0
        %v2265 = vadd.f32 0.0, %v2264
        %v2266 = vpop.f32.mrb[0].mxu0
        %2267 = vmatprep.mubr.f32.mxu0 0.0
        %2268 = vmatmul.mubr.f32.gmra.mrb[0].mxu0 %v2190
        %v2269 = vpop.f32.mrb[0].mxu0
        %v2270 = vadd.f32 0.0, %v2269
        %v2271 = vpop.f32.mrb[0].mxu0
        %2272 = vdwg.mxu0
        %vm2273 = vcmask 130048
        %v2274 = vsel %vm2273, %v2004, -inf
        %2275 = vmax.xlane.f32.xlu0 %v2274
        %v2276 = vpop.xlane.xlu0 %2275
        %v2277 = vsel %vm2273, %v2009, -inf
        %2278 = vmax.xlane.f32.xlu0 %v2277
        %v2279 = vpop.xlane.xlu0 %2278
        %v2280 = vsel %vm2273, %v2091, -inf
        %2281 = vmax.xlane.f32.xlu0 %v2280
        %v2282 = vpop.xlane.xlu0 %2281
        %v2283 = vsel %vm2273, %v2096, -inf
        %2284 = vmax.xlane.f32.xlu0 %v2283
        %v2285 = vpop.xlane.xlu0 %2284
        %v2286 = vsel %vm2273, %v2178, -inf
        %2287 = vmax.xlane.f32.xlu0 %v2286
        %v2288 = vpop.xlane.xlu0 %2287
        %v2289 = vsel %vm2273, %v2183, -inf
        %2290 = vmax.xlane.f32.xlu0 %v2289
        %v2291 = vpop.xlane.xlu0 %2290
        %v2292 = vsel %vm2273, %v2265, -inf
        %2293 = vmax.xlane.f32.xlu0 %v2292
        %v2294 = vpop.xlane.xlu0 %2293
        %v2295 = vsel %vm2273, %v2270, -inf
        %2296 = vmax.xlane.f32.xlu0 %v2295
        %v2297 = vpop.xlane.xlu0 %2296
        %v2298 = vsub.f32 %v2004, %v2276
        %v2299 = vsub.f32 %v2009, %v2279
        %v2300 = vsub.f32 %v2091, %v2282
        %v2301 = vsub.f32 %v2096, %v2285
        %v2302 = vsub.f32 %v2178, %v2288
        %v2303 = vsub.f32 %v2183, %v2291
        %v2304 = vsub.f32 %v2265, %v2294
        %v2305 = vsub.f32 %v2270, %v2297
        %v2306 = vmul.f32 %v2298, 1.442695
        %v2307 = vpow.pop %v2306
        %v2308 = vmul.f32 %v2299, 1.442695
        %v2309 = vpow.pop %v2308
        %v2310 = vmul.f32 %v2300, 1.442695
        %v2311 = vpow.pop %v2310
        %v2312 = vmul.f32 %v2301, 1.442695
        %v2313 = vpow.pop %v2312
        %v2314 = vmul.f32 %v2302, 1.442695
        %v2315 = vpow.pop %v2314
        %v2316 = vmul.f32 %v2303, 1.442695
        %v2317 = vpow.pop %v2316
        %v2318 = vmul.f32 %v2304, 1.442695
        %v2319 = vpow.pop %v2318
        %v2320 = vmul.f32 %v2305, 1.442695
        %v2321 = vpow.pop %v2320
        %v2322 = vsel %vm2273, %v2307, 0.0
        %2323 = vadd.xlane.f32.xlu0 %v2322
        %v2324 = vpop.xlane.xlu0 %2323
        %v2325 = vsel %vm2273, %v2309, 0.0
        %2326 = vadd.xlane.f32.xlu0 %v2325
        %v2327 = vpop.xlane.xlu0 %2326
        %v2328 = vsel %vm2273, %v2311, 0.0
        %2329 = vadd.xlane.f32.xlu0 %v2328
        %v2330 = vpop.xlane.xlu0 %2329
        %v2331 = vsel %vm2273, %v2313, 0.0
        %2332 = vadd.xlane.f32.xlu0 %v2331
        %v2333 = vpop.xlane.xlu0 %2332
        %v2334 = vsel %vm2273, %v2315, 0.0
        %2335 = vadd.xlane.f32.xlu0 %v2334
        %v2336 = vpop.xlane.xlu0 %2335
        %v2337 = vsel %vm2273, %v2317, 0.0
        %2338 = vadd.xlane.f32.xlu0 %v2337
        %v2339 = vpop.xlane.xlu0 %2338
        %v2340 = vsel %vm2273, %v2319, 0.0
        %2341 = vadd.xlane.f32.xlu0 %v2340
        %v2342 = vpop.xlane.xlu0 %2341
        %v2343 = vsel %vm2273, %v2321, 0.0
        %2344 = vadd.xlane.f32.xlu0 %v2343
        %v2345 = vpop.xlane.xlu0 %2344
        %v2346 = vrcp.pop %v2324
        %v2347 = vrcp.pop %v2327
        %v2348 = vrcp.pop %v2330
        %v2349 = vrcp.pop %v2333
        %v2350 = vrcp.pop %v2336
        %v2351 = vrcp.pop %v2339
        %v2352 = vrcp.pop %v2342
        %v2353 = vrcp.pop %v2345
        %v2354 = vmul.f32 %v2307, %v2346
        %v2355 = vmul.f32 %v2309, %v2347
        %v2356 = vmul.f32 %v2311, %v2348
        %v2357 = vmul.f32 %v2313, %v2349
        %v2358 = vmul.f32 %v2315, %v2350
        %v2359 = vmul.f32 %v2317, %v2351
        %v2360 = vmul.f32 %v2319, %v2352
        %v2361 = vmul.f32 %v2321, %v2353
        %v2363 = vsel %vm2273, %v2354, 0
        %v2366 = vsel %vm2273, %v2355, 0
        %2368 = vmatprep.subr.mxu0 0.0
        %2369 = vmatpush1.msra.mxu0 %v1852
        %2370 = vmatprep.subr.mxu0 0.0
        %2371 = vmatpush1.msra.mxu0 %v1920
        %2372 = vmatprep.subr.mxu0 0.0
        %2373 = vmatpush1.msra.mxu0 0.0
        %2374 = vmatprep.subr.mxu0 0.0
        %2375 = vmatpush1.msra.mxu0 0.0
        %2376 = vmatprep.subr.mxu0 0.0
        %2377 = vmatpush1.msra.mxu0 0.0
        %2378 = vmatprep.subr.mxu0 0.0
        %2379 = vmatpush1.msra.mxu0 0.0
        %2380 = vmatprep.subr.mxu0 0.0
        %2381 = vmatpush1.msra.mxu0 0.0
        %2382 = vmatprep.subr.mxu0 0.0
        %2383 = vmatpush1.msra.mxu0 0.0
        %2384 = vmatprep.subr.mxu0 0.0
        %2385 = vmatpush1.msra.mxu0 0.0
        %2386 = vmatprep.subr.mxu0 0.0
        %2387 = vmatpush1.msra.mxu0 0.0
        %2388 = vmatprep.subr.mxu0 0.0
        %2389 = vmatpush1.msra.mxu0 0.0
        %2390 = vmatprep.subr.mxu0 0.0
        %2391 = vmatpush1.msra.mxu0 0.0
        %2392 = vmatprep.subr.mxu0 0.0
        %2393 = vmatpush1.msra.mxu0 0.0
        %2394 = vmatprep.subr.mxu0 0.0
        %2395 = vmatpush1.msra.mxu0 0.0
        %2396 = vmatprep.subr.mxu0 0.0
        %2397 = vmatpush1.msra.mxu0 0.0
        %2398 = vmatprep.subr.mxu0 0.0
        %2399 = vmatpush1.msra.mxu0 0.0
        %2400 = vmatprep.subr.mxu0 0.0
        %2401 = vmatpush1.msra.mxu0 0.0
        %2402 = vmatprep.subr.mxu0 0.0
        %2403 = vmatpush1.msra.mxu0 0.0
        %2404 = vmatprep.subr.mxu0 0.0
        %2405 = vmatpush1.msra.mxu0 0.0
        %2406 = vmatprep.subr.mxu0 0.0
        %2407 = vmatpush1.msra.mxu0 0.0
        %2408 = vmatprep.subr.mxu0 0.0
        %2409 = vmatpush1.msra.mxu0 0.0
        %2410 = vmatprep.subr.mxu0 0.0
        %2411 = vmatpush1.msra.mxu0 0.0
        %2412 = vmatprep.subr.mxu0 0.0
        %2413 = vmatpush1.msra.mxu0 0.0
        %2414 = vmatprep.subr.mxu0 0.0
        %2415 = vmatpush1.msra.mxu0 0.0
        %2416 = vmatprep.subr.mxu0 0.0
        %2417 = vmatpush1.msra.mxu0 0.0
        %2418 = vmatprep.subr.mxu0 0.0
        %2419 = vmatpush1.msra.mxu0 0.0
        %2420 = vmatprep.subr.mxu0 0.0
        %2421 = vmatpush1.msra.mxu0 0.0
        %2422 = vmatprep.subr.mxu0 0.0
        %2423 = vmatpush1.msra.mxu0 0.0
        %2424 = vmatprep.subr.mxu0 0.0
        %2425 = vmatpush1.msra.mxu0 0.0
        %2426 = vmatprep.subr.mxu0 0.0
        %2427 = vmatpush1.msra.mxu0 0.0
        %2428 = vmatprep.subr.mxu0 0.0
        %2429 = vmatpush1.msra.mxu0 0.0
        %2430 = vmatprep.subr.mxu0 0.0
        %2431 = vmatpush1.msra.mxu0 0.0
        %2432 = vmatprep.mubr.f32.mxu0 0.0
        %2433 = vmatmul.mubr.f32.gmra.mrb[0].mxu0 %v2363
        %v2434 = vpop.f32.mrb[0].mxu0
        %v2435 = vadd.f32 0.0, %v2434
        %v2436 = vpop.f32.mrb[0].mxu0
        %2437 = vmatprep.mubr.f32.mxu0 0.0
        %2438 = vmatmul.mubr.f32.gmra.mrb[0].mxu0 %v2366
        %v2439 = vpop.f32.mrb[0].mxu0
        %v2440 = vadd.f32 0.0, %v2439
        %v2441 = vpop.f32.mrb[0].mxu0
        %2442 = vdwg.mxu0
        %v2444 = vsel %vm2273, %v2356, 0
        %v2447 = vsel %vm2273, %v2357, 0
        %2449 = vmatprep.subr.mxu0 0.0
        %2450 = vmatpush1.msra.mxu0 %v1853
        %2451 = vmatprep.subr.mxu0 0.0
        %2452 = vmatpush1.msra.mxu0 %v1921
        %2453 = vmatprep.subr.mxu0 0.0
        %2454 = vmatpush1.msra.mxu0 0.0
        %2455 = vmatprep.subr.mxu0 0.0
        %2456 = vmatpush1.msra.mxu0 0.0
        %2457 = vmatprep.subr.mxu0 0.0
        %2458 = vmatpush1.msra.mxu0 0.0
        %2459 = vmatprep.subr.mxu0 0.0
        %2460 = vmatpush1.msra.mxu0 0.0
        %2461 = vmatprep.subr.mxu0 0.0
        %2462 = vmatpush1.msra.mxu0 0.0
        %2463 = vmatprep.subr.mxu0 0.0
        %2464 = vmatpush1.msra.mxu0 0.0
        %2465 = vmatprep.subr.mxu0 0.0
        %2466 = vmatpush1.msra.mxu0 0.0
        %2467 = vmatprep.subr.mxu0 0.0
        %2468 = vmatpush1.msra.mxu0 0.0
        %2469 = vmatprep.subr.mxu0 0.0
        %2470 = vmatpush1.msra.mxu0 0.0
        %2471 = vmatprep.subr.mxu0 0.0
        %2472 = vmatpush1.msra.mxu0 0.0
        %2473 = vmatprep.subr.mxu0 0.0
        %2474 = vmatpush1.msra.mxu0 0.0
        %2475 = vmatprep.subr.mxu0 0.0
        %2476 = vmatpush1.msra.mxu0 0.0
        %2477 = vmatprep.subr.mxu0 0.0
        %2478 = vmatpush1.msra.mxu0 0.0
        %2479 = vmatprep.subr.mxu0 0.0
        %2480 = vmatpush1.msra.mxu0 0.0
        %2481 = vmatprep.subr.mxu0 0.0
        %2482 = vmatpush1.msra.mxu0 0.0
        %2483 = vmatprep.subr.mxu0 0.0
        %2484 = vmatpush1.msra.mxu0 0.0
        %2485 = vmatprep.subr.mxu0 0.0
        %2486 = vmatpush1.msra.mxu0 0.0
        %2487 = vmatprep.subr.mxu0 0.0
        %2488 = vmatpush1.msra.mxu0 0.0
        %2489 = vmatprep.subr.mxu0 0.0
        %2490 = vmatpush1.msra.mxu0 0.0
        %2491 = vmatprep.subr.mxu0 0.0
        %2492 = vmatpush1.msra.mxu0 0.0
        %2493 = vmatprep.subr.mxu0 0.0
        %2494 = vmatpush1.msra.mxu0 0.0
        %2495 = vmatprep.subr.mxu0 0.0
        %2496 = vmatpush1.msra.mxu0 0.0
        %2497 = vmatprep.subr.mxu0 0.0
        %2498 = vmatpush1.msra.mxu0 0.0
        %2499 = vmatprep.subr.mxu0 0.0
        %2500 = vmatpush1.msra.mxu0 0.0
        %2501 = vmatprep.subr.mxu0 0.0
        %2502 = vmatpush1.msra.mxu0 0.0
        %2503 = vmatprep.subr.mxu0 0.0
        %2504 = vmatpush1.msra.mxu0 0.0
        %2505 = vmatprep.subr.mxu0 0.0
        %2506 = vmatpush1.msra.mxu0 0.0
        %2507 = vmatprep.subr.mxu0 0.0
        %2508 = vmatpush1.msra.mxu0 0.0
        %2509 = vmatprep.subr.mxu0 0.0
        %2510 = vmatpush1.msra.mxu0 0.0
        %2511 = vmatprep.subr.mxu0 0.0
        %2512 = vmatpush1.msra.mxu0 0.0
        %2513 = vmatprep.mubr.f32.mxu0 0.0
        %2514 = vmatmul.mubr.f32.gmra.mrb[0].mxu0 %v2444
        %v2515 = vpop.f32.mrb[0].mxu0
        %v2516 = vadd.f32 0.0, %v2515
        %v2517 = vpop.f32.mrb[0].mxu0
        %2518 = vmatprep.mubr.f32.mxu0 0.0
        %2519 = vmatmul.mubr.f32.gmra.mrb[0].mxu0 %v2447
        %v2520 = vpop.f32.mrb[0].mxu0
        %v2521 = vadd.f32 0.0, %v2520
        %v2522 = vpop.f32.mrb[0].mxu0
        %2523 = vdwg.mxu0
        %v2525 = vsel %vm2273, %v2358, 0
        %v2528 = vsel %vm2273, %v2359, 0
        %2530 = vmatprep.subr.mxu0 0.0
        %2531 = vmatpush1.msra.mxu0 %v1854
        %2532 = vmatprep.subr.mxu0 0.0
        %2533 = vmatpush1.msra.mxu0 %v1922
        %2534 = vmatprep.subr.mxu0 0.0
        %2535 = vmatpush1.msra.mxu0 0.0
        %2536 = vmatprep.subr.mxu0 0.0
        %2537 = vmatpush1.msra.mxu0 0.0
        %2538 = vmatprep.subr.mxu0 0.0
        %2539 = vmatpush1.msra.mxu0 0.0
        %2540 = vmatprep.subr.mxu0 0.0
        %2541 = vmatpush1.msra.mxu0 0.0
        %2542 = vmatprep.subr.mxu0 0.0
        %2543 = vmatpush1.msra.mxu0 0.0
        %2544 = vmatprep.subr.mxu0 0.0
        %2545 = vmatpush1.msra.mxu0 0.0
        %2546 = vmatprep.subr.mxu0 0.0
        %2547 = vmatpush1.msra.mxu0 0.0
        %2548 = vmatprep.subr.mxu0 0.0
        %2549 = vmatpush1.msra.mxu0 0.0
        %2550 = vmatprep.subr.mxu0 0.0
        %2551 = vmatpush1.msra.mxu0 0.0
        %2552 = vmatprep.subr.mxu0 0.0
        %2553 = vmatpush1.msra.mxu0 0.0
        %2554 = vmatprep.subr.mxu0 0.0
        %2555 = vmatpush1.msra.mxu0 0.0
        %2556 = vmatprep.subr.mxu0 0.0
        %2557 = vmatpush1.msra.mxu0 0.0
        %2558 = vmatprep.subr.mxu0 0.0
        %2559 = vmatpush1.msra.mxu0 0.0
        %2560 = vmatprep.subr.mxu0 0.0
        %2561 = vmatpush1.msra.mxu0 0.0
        %2562 = vmatprep.subr.mxu0 0.0
        %2563 = vmatpush1.msra.mxu0 0.0
        %2564 = vmatprep.subr.mxu0 0.0
        %2565 = vmatpush1.msra.mxu0 0.0
        %2566 = vmatprep.subr.mxu0 0.0
        %2567 = vmatpush1.msra.mxu0 0.0
        %2568 = vmatprep.subr.mxu0 0.0
        %2569 = vmatpush1.msra.mxu0 0.0
        %2570 = vmatprep.subr.mxu0 0.0
        %2571 = vmatpush1.msra.mxu0 0.0
        %2572 = vmatprep.subr.mxu0 0.0
        %2573 = vmatpush1.msra.mxu0 0.0
        %2574 = vmatprep.subr.mxu0 0.0
        %2575 = vmatpush1.msra.mxu0 0.0
        %2576 = vmatprep.subr.mxu0 0.0
        %2577 = vmatpush1.msra.mxu0 0.0
        %2578 = vmatprep.subr.mxu0 0.0
        %2579 = vmatpush1.msra.mxu0 0.0
        %2580 = vmatprep.subr.mxu0 0.0
        %2581 = vmatpush1.msra.mxu0 0.0
        %2582 = vmatprep.subr.mxu0 0.0
        %2583 = vmatpush1.msra.mxu0 0.0
        %2584 = vmatprep.subr.mxu0 0.0
        %2585 = vmatpush1.msra.mxu0 0.0
        %2586 = vmatprep.subr.mxu0 0.0
        %2587 = vmatpush1.msra.mxu0 0.0
        %2588 = vmatprep.subr.mxu0 0.0
        %2589 = vmatpush1.msra.mxu0 0.0
        %2590 = vmatprep.subr.mxu0 0.0
        %2591 = vmatpush1.msra.mxu0 0.0
        %2592 = vmatprep.subr.mxu0 0.0
        %2593 = vmatpush1.msra.mxu0 0.0
        %2594 = vmatprep.mubr.f32.mxu0 0.0
        %2595 = vmatmul.mubr.f32.gmra.mrb[0].mxu0 %v2525
        %v2596 = vpop.f32.mrb[0].mxu0
        %v2597 = vadd.f32 0.0, %v2596
        %v2598 = vpop.f32.mrb[0].mxu0
        %2599 = vmatprep.mubr.f32.mxu0 0.0
        %2600 = vmatmul.mubr.f32.gmra.mrb[0].mxu0 %v2528
        %v2601 = vpop.f32.mrb[0].mxu0
        %v2602 = vadd.f32 0.0, %v2601
        %v2603 = vpop.f32.mrb[0].mxu0
        %2604 = vdwg.mxu0
        %v2606 = vsel %vm2273, %v2360, 0
        %v2609 = vsel %vm2273, %v2361, 0
        %2611 = vmatprep.subr.mxu0 0.0
        %2612 = vmatpush1.msra.mxu0 %v1855
        %2613 = vmatprep.subr.mxu0 0.0
        %2614 = vmatpush1.msra.mxu0 %v1923
        %2615 = vmatprep.subr.mxu0 0.0
        %2616 = vmatpush1.msra.mxu0 0.0
        %2617 = vmatprep.subr.mxu0 0.0
        %2618 = vmatpush1.msra.mxu0 0.0
        %2619 = vmatprep.subr.mxu0 0.0
        %2620 = vmatpush1.msra.mxu0 0.0
        %2621 = vmatprep.subr.mxu0 0.0
        %2622 = vmatpush1.msra.mxu0 0.0
        %2623 = vmatprep.subr.mxu0 0.0
        %2624 = vmatpush1.msra.mxu0 0.0
        %2625 = vmatprep.subr.mxu0 0.0
        %2626 = vmatpush1.msra.mxu0 0.0
        %2627 = vmatprep.subr.mxu0 0.0
        %2628 = vmatpush1.msra.mxu0 0.0
        %2629 = vmatprep.subr.mxu0 0.0
        %2630 = vmatpush1.msra.mxu0 0.0
        %2631 = vmatprep.subr.mxu0 0.0
        %2632 = vmatpush1.msra.mxu0 0.0
        %2633 = vmatprep.subr.mxu0 0.0
        %2634 = vmatpush1.msra.mxu0 0.0
        %2635 = vmatprep.subr.mxu0 0.0
        %2636 = vmatpush1.msra.mxu0 0.0
        %2637 = vmatprep.subr.mxu0 0.0
        %2638 = vmatpush1.msra.mxu0 0.0
        %2639 = vmatprep.subr.mxu0 0.0
        %2640 = vmatpush1.msra.mxu0 0.0
        %2641 = vmatprep.subr.mxu0 0.0
        %2642 = vmatpush1.msra.mxu0 0.0
        %2643 = vmatprep.subr.mxu0 0.0
        %2644 = vmatpush1.msra.mxu0 0.0
        %2645 = vmatprep.subr.mxu0 0.0
        %2646 = vmatpush1.msra.mxu0 0.0
        %2647 = vmatprep.subr.mxu0 0.0
        %2648 = vmatpush1.msra.mxu0 0.0
        %2649 = vmatprep.subr.mxu0 0.0
        %2650 = vmatpush1.msra.mxu0 0.0
        %2651 = vmatprep.subr.mxu0 0.0
        %2652 = vmatpush1.msra.mxu0 0.0
        %2653 = vmatprep.subr.mxu0 0.0
        %2654 = vmatpush1.msra.mxu0 0.0
        %2655 = vmatprep.subr.mxu0 0.0
        %2656 = vmatpush1.msra.mxu0 0.0
        %2657 = vmatprep.subr.mxu0 0.0
        %2658 = vmatpush1.msra.mxu0 0.0
        %2659 = vmatprep.subr.mxu0 0.0
        %2660 = vmatpush1.msra.mxu0 0.0
        %2661 = vmatprep.subr.mxu0 0.0
        %2662 = vmatpush1.msra.mxu0 0.0
        %2663 = vmatprep.subr.mxu0 0.0
        %2664 = vmatpush1.msra.mxu0 0.0
        %2665 = vmatprep.subr.mxu0 0.0
        %2666 = vmatpush1.msra.mxu0 0.0
        %2667 = vmatprep.subr.mxu0 0.0
        %2668 = vmatpush1.msra.mxu0 0.0
        %2669 = vmatprep.subr.mxu0 0.0
        %2670 = vmatpush1.msra.mxu0 0.0
        %2671 = vmatprep.subr.mxu0 0.0
        %2672 = vmatpush1.msra.mxu0 0.0
        %2673 = vmatprep.subr.mxu0 0.0
        %2674 = vmatpush1.msra.mxu0 0.0
        %2675 = vmatprep.mubr.f32.mxu0 0.0
        %2676 = vmatmul.mubr.f32.gmra.mrb[0].mxu0 %v2606
        %v2677 = vpop.f32.mrb[0].mxu0
        %v2678 = vadd.f32 0.0, %v2677
        %v2679 = vpop.f32.mrb[0].mxu0
        %2680 = vmatprep.mubr.f32.mxu0 0.0
        %2681 = vmatmul.mubr.f32.gmra.mrb[0].mxu0 %v2609
        %v2682 = vpop.f32.mrb[0].mxu0
        %v2683 = vadd.f32 0.0, %v2682
        %v2684 = vpop.f32.mrb[0].mxu0
        %2685 = vdwg.mxu0
        %v2686 = vcombine.low %v2435, %v2597
        %v2687 = vcombine.high %v2435, %v2597
        %v2689 = vunpack.c.l.s4 1983009808
        %v2690 = vunpack.c.0.s8 %v2689
        %v2691 = vlaneseq
        %v2692 = vshrl.u32 %v2691, 7
        %v2693 = vsub.s32 %v2690, %v2692
        %v2694 = vrot.slane %v2686, %v2693
        %v2696 = vunpack.c.l.s4 1983009808
        %v2697 = vunpack.c.0.s8 %v2696
        %v2698 = vlaneseq
        %v2699 = vshrl.u32 %v2698, 7
        %v2700 = vsub.s32 %v2697, %v2699
        %v2701 = vrot.slane %v2687, %v2700
        %v2702 = vcombine.low %v2516, %v2678
        %v2703 = vcombine.high %v2516, %v2678
        %v2705 = vunpack.c.l.s4 1983009808
        %v2706 = vunpack.c.0.s8 %v2705
        %v2707 = vlaneseq
        %v2708 = vshrl.u32 %v2707, 7
        %v2709 = vsub.s32 %v2706, %v2708
        %v2710 = vrot.slane %v2702, %v2709
        %v2712 = vunpack.c.l.s4 1983009808
        %v2713 = vunpack.c.0.s8 %v2712
        %v2714 = vlaneseq
        %v2715 = vshrl.u32 %v2714, 7
        %v2716 = vsub.s32 %v2713, %v2715
        %v2717 = vrot.slane %v2703, %v2716
        %v2718 = vcombine.low %v2694, %v2710
        %v2719 = vcombine.high %v2694, %v2710
        %v2721 = vunpack.c.l.s4 1934713408
        %v2722 = vunpack.c.0.s8 %v2721
        %v2723 = vlaneseq
        %v2724 = vshrl.u32 %v2723, 7
        %v2725 = vsub.s32 %v2722, %v2724
        %v2726 = vrot.slane %v2718, %v2725
        %v2728 = vunpack.c.l.s4 1934713408
        %v2729 = vunpack.c.0.s8 %v2728
        %v2730 = vlaneseq
        %v2731 = vshrl.u32 %v2730, 7
        %v2732 = vsub.s32 %v2729, %v2731
        %v2733 = vrot.slane %v2719, %v2732
        %v2734 = vcombine.low %v2701, %v2717
        %v2735 = vcombine.high %v2701, %v2717
        %v2737 = vunpack.c.l.s4 1934713408
        %v2738 = vunpack.c.0.s8 %v2737
        %v2739 = vlaneseq
        %v2740 = vshrl.u32 %v2739, 7
        %v2741 = vsub.s32 %v2738, %v2740
        %v2742 = vrot.slane %v2734, %v2741
        %v2744 = vunpack.c.l.s4 1934713408
        %v2745 = vunpack.c.0.s8 %v2744
        %v2746 = vlaneseq
        %v2747 = vshrl.u32 %v2746, 7
        %v2748 = vsub.s32 %v2745, %v2747
        %v2749 = vrot.slane %v2735, %v2748
        %v2750 = vcombine.high %v2726, 0.0
        %v2751 = vcombine.high %v2733, 0.0
        %v2752 = vcombine.high %v2742, 0.0
        %v2753 = vcombine.high %v2749, 0.0
        %v2754 = vcombine.low %v2440, %v2602
        %v2755 = vcombine.high %v2440, %v2602
        %v2757 = vunpack.c.l.s4 1983009808
        %v2758 = vunpack.c.0.s8 %v2757
        %v2759 = vlaneseq
        %v2760 = vshrl.u32 %v2759, 7
        %v2761 = vsub.s32 %v2758, %v2760
        %v2762 = vrot.slane %v2754, %v2761
        %v2764 = vunpack.c.l.s4 1983009808
        %v2765 = vunpack.c.0.s8 %v2764
        %v2766 = vlaneseq
        %v2767 = vshrl.u32 %v2766, 7
        %v2768 = vsub.s32 %v2765, %v2767
        %v2769 = vrot.slane %v2755, %v2768
        %v2770 = vcombine.low %v2521, %v2683
        %v2771 = vcombine.high %v2521, %v2683
        %v2773 = vunpack.c.l.s4 1983009808
        %v2774 = vunpack.c.0.s8 %v2773
        %v2775 = vlaneseq
        %v2776 = vshrl.u32 %v2775, 7
        %v2777 = vsub.s32 %v2774, %v2776
        %v2778 = vrot.slane %v2770, %v2777
        %v2780 = vunpack.c.l.s4 1983009808
        %v2781 = vunpack.c.0.s8 %v2780
        %v2782 = vlaneseq
        %v2783 = vshrl.u32 %v2782, 7
        %v2784 = vsub.s32 %v2781, %v2783
        %v2785 = vrot.slane %v2771, %v2784
        %v2786 = vcombine.low %v2762, %v2778
        %v2787 = vcombine.high %v2762, %v2778
        %v2789 = vunpack.c.l.s4 1934713408
        %v2790 = vunpack.c.0.s8 %v2789
        %v2791 = vlaneseq
        %v2792 = vshrl.u32 %v2791, 7
        %v2793 = vsub.s32 %v2790, %v2792
        %v2794 = vrot.slane %v2786, %v2793
        %v2796 = vunpack.c.l.s4 1934713408
        %v2797 = vunpack.c.0.s8 %v2796
        %v2798 = vlaneseq
        %v2799 = vshrl.u32 %v2798, 7
        %v2800 = vsub.s32 %v2797, %v2799
        %v2801 = vrot.slane %v2787, %v2800
        %v2802 = vcombine.low %v2769, %v2785
        %v2803 = vcombine.high %v2769, %v2785
        %v2805 = vunpack.c.l.s4 1934713408
        %v2806 = vunpack.c.0.s8 %v2805
        %v2807 = vlaneseq
        %v2808 = vshrl.u32 %v2807, 7
        %v2809 = vsub.s32 %v2806, %v2808
        %v2810 = vrot.slane %v2802, %v2809
        %v2812 = vunpack.c.l.s4 1934713408
        %v2813 = vunpack.c.0.s8 %v2812
        %v2814 = vlaneseq
        %v2815 = vshrl.u32 %v2814, 7
        %v2816 = vsub.s32 %v2813, %v2815
        %v2817 = vrot.slane %v2803, %v2816
        %v2818 = vcombine.high %v2794, 0.0
        %v2819 = vcombine.high %v2801, 0.0
        %v2820 = vcombine.high %v2810, 0.0
        %v2821 = vcombine.high %v2817, 0.0
        %v2822 = vcombine.low %v2726, %v2733
        %v2824 = vunpack.c.l.s4 1983009808
        %v2825 = vunpack.c.0.s8 %v2824
        %v2826 = vlaneseq
        %v2827 = vshrl.u32 %v2826, 7
        %v2828 = vsub.s32 %v2825, %v2827
        %v2829 = vrot.slane %v2822, %v2828
        %v2830 = vcombine.low %v2750, %v2751
        %v2832 = vunpack.c.l.s4 1983009808
        %v2833 = vunpack.c.0.s8 %v2832
        %v2834 = vlaneseq
        %v2835 = vshrl.u32 %v2834, 7
        %v2836 = vsub.s32 %v2833, %v2835
        %v2837 = vrot.slane %v2830, %v2836
        %v2838 = vcombine.low %v2742, %v2749
        %v2840 = vunpack.c.l.s4 1983009808
        %v2841 = vunpack.c.0.s8 %v2840
        %v2842 = vlaneseq
        %v2843 = vshrl.u32 %v2842, 7
        %v2844 = vsub.s32 %v2841, %v2843
        %v2845 = vrot.slane %v2838, %v2844
        %v2846 = vcombine.low %v2752, %v2753
        %v2848 = vunpack.c.l.s4 1983009808
        %v2849 = vunpack.c.0.s8 %v2848
        %v2850 = vlaneseq
        %v2851 = vshrl.u32 %v2850, 7
        %v2852 = vsub.s32 %v2849, %v2851
        %v2853 = vrot.slane %v2846, %v2852
        %v2854 = vcombine.low %v2829, %v2837
        %v2855 = vcombine.high %v2829, %v2837
        %v2857 = vunpack.c.l.s4 1934713408
        %v2858 = vunpack.c.0.s8 %v2857
        %v2859 = vlaneseq
        %v2860 = vshrl.u32 %v2859, 7
        %v2861 = vsub.s32 %v2858, %v2860
        %v2862 = vrot.slane %v2854, %v2861
        %v2864 = vunpack.c.l.s4 1934713408
        %v2865 = vunpack.c.0.s8 %v2864
        %v2866 = vlaneseq
        %v2867 = vshrl.u32 %v2866, 7
        %v2868 = vsub.s32 %v2865, %v2867
        %v2869 = vrot.slane %v2855, %v2868
        %v2870 = vcombine.low %v2845, %v2853
        %v2871 = vcombine.high %v2845, %v2853
        %v2873 = vunpack.c.l.s4 1934713408
        %v2874 = vunpack.c.0.s8 %v2873
        %v2875 = vlaneseq
        %v2876 = vshrl.u32 %v2875, 7
        %v2877 = vsub.s32 %v2874, %v2876
        %v2878 = vrot.slane %v2870, %v2877
        %v2880 = vunpack.c.l.s4 1934713408
        %v2881 = vunpack.c.0.s8 %v2880
        %v2882 = vlaneseq
        %v2883 = vshrl.u32 %v2882, 7
        %v2884 = vsub.s32 %v2881, %v2883
        %v2885 = vrot.slane %v2871, %v2884
        %v2886 = vcombine.low %v2862, %v2878
        %v2887 = vcombine.high %v2862, %v2878
        %v2888 = vcombine.low %v2869, %v2885
        %v2889 = vcombine.high %v2869, %v2885
        %v2890 = vcombine.low %v2794, %v2801
        %v2892 = vunpack.c.l.s4 1983009808
        %v2893 = vunpack.c.0.s8 %v2892
        %v2894 = vlaneseq
        %v2895 = vshrl.u32 %v2894, 7
        %v2896 = vsub.s32 %v2893, %v2895
        %v2897 = vrot.slane %v2890, %v2896
        %v2898 = vcombine.low %v2818, %v2819
        %v2900 = vunpack.c.l.s4 1983009808
        %v2901 = vunpack.c.0.s8 %v2900
        %v2902 = vlaneseq
        %v2903 = vshrl.u32 %v2902, 7
        %v2904 = vsub.s32 %v2901, %v2903
        %v2905 = vrot.slane %v2898, %v2904
        %v2906 = vcombine.low %v2810, %v2817
        %v2908 = vunpack.c.l.s4 1983009808
        %v2909 = vunpack.c.0.s8 %v2908
        %v2910 = vlaneseq
        %v2911 = vshrl.u32 %v2910, 7
        %v2912 = vsub.s32 %v2909, %v2911
        %v2913 = vrot.slane %v2906, %v2912
        %v2914 = vcombine.low %v2820, %v2821
        %v2916 = vunpack.c.l.s4 1983009808
        %v2917 = vunpack.c.0.s8 %v2916
        %v2918 = vlaneseq
        %v2919 = vshrl.u32 %v2918, 7
        %v2920 = vsub.s32 %v2917, %v2919
        %v2921 = vrot.slane %v2914, %v2920
        %v2922 = vcombine.low %v2897, %v2905
        %v2923 = vcombine.high %v2897, %v2905
        %v2925 = vunpack.c.l.s4 1934713408
        %v2926 = vunpack.c.0.s8 %v2925
        %v2927 = vlaneseq
        %v2928 = vshrl.u32 %v2927, 7
        %v2929 = vsub.s32 %v2926, %v2928
        %v2930 = vrot.slane %v2922, %v2929
        %v2932 = vunpack.c.l.s4 1934713408
        %v2933 = vunpack.c.0.s8 %v2932
        %v2934 = vlaneseq
        %v2935 = vshrl.u32 %v2934, 7
        %v2936 = vsub.s32 %v2933, %v2935
        %v2937 = vrot.slane %v2923, %v2936
        %v2938 = vcombine.low %v2913, %v2921
        %v2939 = vcombine.high %v2913, %v2921
        %v2941 = vunpack.c.l.s4 1934713408
        %v2942 = vunpack.c.0.s8 %v2941
        %v2943 = vlaneseq
        %v2944 = vshrl.u32 %v2943, 7
        %v2945 = vsub.s32 %v2942, %v2944
        %v2946 = vrot.slane %v2938, %v2945
        %v2948 = vunpack.c.l.s4 1934713408
        %v2949 = vunpack.c.0.s8 %v2948
        %v2950 = vlaneseq
        %v2951 = vshrl.u32 %v2950, 7
        %v2952 = vsub.s32 %v2949, %v2951
        %v2953 = vrot.slane %v2939, %v2952
        %v2954 = vcombine.low %v2930, %v2946
        %v2955 = vcombine.high %v2930, %v2946
        %v2956 = vcombine.low %v2937, %v2953
        %v2957 = vcombine.high %v2937, %v2953
        %2960 = vrot.lane.b32.xlu0 %v2887, 32
        %v2961 = vpop.permute.xlu0 %2960
        %2962 = vrot.lane.b32.xlu0 %v2955, 32
        %v2963 = vpop.permute.xlu0 %2962
        %2968 = vrot.lane.b32.xlu0 %v2888, 64
        %v2969 = vpop.permute.xlu0 %2968
        %2970 = vrot.lane.b32.xlu0 %v2956, 64
        %v2971 = vpop.permute.xlu0 %2970
        %2976 = vrot.lane.b32.xlu0 %v2889, 96
        %v2977 = vpop.permute.xlu0 %2976
        %2978 = vrot.lane.b32.xlu0 %v2957, 96
        %v2979 = vpop.permute.xlu0 %2978
        %v2982 = vsel %vm1924, %v2886, %v2961
        %v2983 = vsel %vm1924, %v2954, %v2963
        %vm2984 = vcmask 523264
        %v2985 = vsel %vm2984, %v2982, %v2969
        %v2986 = vsel %vm2984, %v2983, %v2971
        %vm2987 = vcmask 785408
        %v2988 = vsel %vm2987, %v2985, %v2977
        %v2989 = vsel %vm2987, %v2986, %v2979
        %v2990 = vld [vmem:[%s651] sm:$0xff]
        %v2991 = vld [vmem:[%s651 + $0x8] sm:$0xff]
        %v2992 = vld [vmem:[%s651 + $0x10] sm:$0xff]
        %v2993 = vld [vmem:[%s651 + $0x18] sm:$0xff]
        %v2994 = vld [vmem:[%s651 + $0x20] sm:$0xff]
        %v2995 = vld [vmem:[%s651 + $0x28] sm:$0xff]
        %v2996 = vld [vmem:[%s651 + $0x30] sm:$0xff]
        %v2997 = vld [vmem:[%s651 + $0x38] sm:$0xff]
        %v2998 = vld [vmem:[%s651 + $0x40] sm:$0xff]
        %v2999 = vld [vmem:[%s651 + $0x48] sm:$0xff]
        %v3000 = vld [vmem:[%s651 + $0x50] sm:$0xff]
        %v3001 = vld [vmem:[%s651 + $0x58] sm:$0xff]
        %v3002 = vld [vmem:[%s651 + $0x60] sm:$0xff]
        %v3003 = vld [vmem:[%s651 + $0x68] sm:$0xff]
        %v3004 = vld [vmem:[%s651 + $0x70] sm:$0xff]
        %v3005 = vld [vmem:[%s651 + $0x78] sm:$0xff]
        %v3006 = vld [vmem:[%s766] sm:$0x1]
        %v3008 = vlaneseq
        %v3009 = vshrl.u32 %v3008, 7
        %v3010 = vsub.s32 0, %v3009
        %v3011 = vrot.slane %v3006, %v3010
        %3013 = vmatprep.subr.mxu0 0.0
        %3014 = vmatpush1.msra.mxu0 %v2990
        %3015 = vmatprep.subr.mxu0 0.0
        %3016 = vmatpush1.msra.mxu0 %v2991
        %3017 = vmatprep.subr.mxu0 0.0
        %3018 = vmatpush1.msra.mxu0 %v2992
        %3019 = vmatprep.subr.mxu0 0.0
        %3020 = vmatpush1.msra.mxu0 %v2993
        %3021 = vmatprep.subr.mxu0 0.0
        %3022 = vmatpush1.msra.mxu0 %v2994
        %3023 = vmatprep.subr.mxu0 0.0
        %3024 = vmatpush1.msra.mxu0 %v2995
        %3025 = vmatprep.subr.mxu0 0.0
        %3026 = vmatpush1.msra.mxu0 %v2996
        %3027 = vmatprep.subr.mxu0 0.0
        %3028 = vmatpush1.msra.mxu0 %v2997
        %3029 = vmatprep.subr.mxu0 0.0
        %3030 = vmatpush1.msra.mxu0 %v2998
        %3031 = vmatprep.subr.mxu0 0.0
        %3032 = vmatpush1.msra.mxu0 %v2999
        %3033 = vmatprep.subr.mxu0 0.0
        %3034 = vmatpush1.msra.mxu0 %v3000
        %3035 = vmatprep.subr.mxu0 0.0
        %3036 = vmatpush1.msra.mxu0 %v3001
        %3037 = vmatprep.subr.mxu0 0.0
        %3038 = vmatpush1.msra.mxu0 %v3002
        %3039 = vmatprep.subr.mxu0 0.0
        %3040 = vmatpush1.msra.mxu0 %v3003
        %3041 = vmatprep.subr.mxu0 0.0
        %3042 = vmatpush1.msra.mxu0 %v3004
        %3043 = vmatprep.subr.mxu0 0.0
        %3044 = vmatpush1.msra.mxu0 %v3005
        %3045 = vmatprep.subr.mxu0 0.0
        %3046 = vmatpush1.msra.mxu0 0.0
        %3047 = vmatprep.subr.mxu0 0.0
        %3048 = vmatpush1.msra.mxu0 0.0
        %3049 = vmatprep.subr.mxu0 0.0
        %3050 = vmatpush1.msra.mxu0 0.0
        %3051 = vmatprep.subr.mxu0 0.0
        %3052 = vmatpush1.msra.mxu0 0.0
        %3053 = vmatprep.subr.mxu0 0.0
        %3054 = vmatpush1.msra.mxu0 0.0
        %3055 = vmatprep.subr.mxu0 0.0
        %3056 = vmatpush1.msra.mxu0 0.0
        %3057 = vmatprep.subr.mxu0 0.0
        %3058 = vmatpush1.msra.mxu0 0.0
        %3059 = vmatprep.subr.mxu0 0.0
        %3060 = vmatpush1.msra.mxu0 0.0
        %3061 = vmatprep.subr.mxu0 0.0
        %3062 = vmatpush1.msra.mxu0 0.0
        %3063 = vmatprep.subr.mxu0 0.0
        %3064 = vmatpush1.msra.mxu0 0.0
        %3065 = vmatprep.subr.mxu0 0.0
        %3066 = vmatpush1.msra.mxu0 0.0
        %3067 = vmatprep.subr.mxu0 0.0
        %3068 = vmatpush1.msra.mxu0 0.0
        %3069 = vmatprep.subr.mxu0 0.0
        %3070 = vmatpush1.msra.mxu0 0.0
        %3071 = vmatprep.subr.mxu0 0.0
        %3072 = vmatpush1.msra.mxu0 0.0
        %3073 = vmatprep.subr.mxu0 0.0
        %3074 = vmatpush1.msra.mxu0 0.0
        %3075 = vmatprep.subr.mxu0 0.0
        %3076 = vmatpush1.msra.mxu0 0.0
        %3077 = vmatprep.mubr.f32.mxu0 0.0
        %3078 = vmatmul.mubr.f32.gmra.mrb[0].mxu0 %v2988
        %v3079 = vpop.f32.mrb[0].mxu0
        %v3080 = vadd.f32 %v3011, %v3079
        %v3081 = vpop.f32.mrb[0].mxu0
        %3082 = vmatprep.mubr.f32.mxu0 0.0
        %3083 = vmatmul.mubr.f32.gmra.mrb[0].mxu0 %v2989
        %v3084 = vpop.f32.mrb[0].mxu0
        %v3085 = vadd.f32 %v3011, %v3084
        %v3086 = vpop.f32.mrb[0].mxu0
        %3087 = vdwg.mxu0
        %v3088 = vadd.f32 %v788, %v3080
        %v3089 = vadd.f32 %v789, %v3085
        %v3090 = vld [vmem:[%s769] sm:$0x1]
        %v3091 = vld [vmem:[%s772] sm:$0x1]
        %3092 = vadd.xlane.f32.xlu0 %v3088
        %v3093 = vpop.xlane.xlu0 %3092
        %3094 = vadd.xlane.f32.xlu0 %v3089
        %v3095 = vpop.xlane.xlu0 %3094
        %v3096 = vmul.f32 %v3093, %v796
        %v3097 = vmul.f32 %v3095, %v796
        %v3098 = vsub.f32 %v3088, %v3096
        %v3099 = vsub.f32 %v3089, %v3097
        %v3100 = vmul.f32 %v3098, %v3098
        %v3101 = vmul.f32 %v3099, %v3099
        %3102 = vadd.xlane.f32.xlu0 %v3100
        %v3103 = vpop.xlane.xlu0 %3102
        %3104 = vadd.xlane.f32.xlu0 %v3101
        %v3105 = vpop.xlane.xlu0 %3104
        %v3106 = vmul.f32 %v3103, %v796
        %v3107 = vmul.f32 %v3105, %v796
        %v3108 = vadd.f32 %v3106, 1e-05
        %v3109 = vadd.f32 %v3107, 1e-05
        %v3110 = vrsqrt.pop %v3108
        %v3111 = vrsqrt.pop %v3109
        %v3112 = vmul.f32 %v3098, %v3110
        %v3113 = vmul.f32 %v3099, %v3111
        %v3115 = vlaneseq
        %v3116 = vshrl.u32 %v3115, 7
        %v3117 = vsub.s32 0, %v3116
        %v3118 = vrot.slane %v3090, %v3117
        %v3120 = vmul.f32 %v3112, %v3118
        %v3121 = vmul.f32 %v3113, %v3118
        %v3123 = vlaneseq
        %v3124 = vshrl.u32 %v3123, 7
        %v3125 = vsub.s32 0, %v3124
        %v3126 = vrot.slane %v3091, %v3125
        %v3128 = vadd.f32 %v3120, %v3126
        %v3129 = vadd.f32 %v3121, %v3126
        %v3130 = vld [vmem:[%s660] sm:$0xff]
        %v3131 = vld [vmem:[%s660 + $0x8] sm:$0xff]
        %v3132 = vld [vmem:[%s660 + $0x10] sm:$0xff]
        %v3133 = vld [vmem:[%s660 + $0x18] sm:$0xff]
        %v3134 = vld [vmem:[%s660 + $0x20] sm:$0xff]
        %v3135 = vld [vmem:[%s660 + $0x28] sm:$0xff]
        %v3136 = vld [vmem:[%s660 + $0x30] sm:$0xff]
        %v3137 = vld [vmem:[%s660 + $0x38] sm:$0xff]
        %v3138 = vld [vmem:[%s660 + $0x40] sm:$0xff]
        %v3139 = vld [vmem:[%s660 + $0x48] sm:$0xff]
        %v3140 = vld [vmem:[%s660 + $0x50] sm:$0xff]
        %v3141 = vld [vmem:[%s660 + $0x58] sm:$0xff]
        %v3142 = vld [vmem:[%s660 + $0x60] sm:$0xff]
        %v3143 = vld [vmem:[%s660 + $0x68] sm:$0xff]
        %v3144 = vld [vmem:[%s660 + $0x70] sm:$0xff]
        %v3145 = vld [vmem:[%s660 + $0x78] sm:$0xff]
        %v3146 = vld [vmem:[%s660 + $0x80] sm:$0xff]
        %v3147 = vld [vmem:[%s660 + $0x88] sm:$0xff]
        %v3148 = vld [vmem:[%s660 + $0x90] sm:$0xff]
        %v3149 = vld [vmem:[%s660 + $0x98] sm:$0xff]
        %v3150 = vld [vmem:[%s660 + $0xa0] sm:$0xff]
        %v3151 = vld [vmem:[%s660 + $0xa8] sm:$0xff]
        %v3152 = vld [vmem:[%s660 + $0xb0] sm:$0xff]
        %v3153 = vld [vmem:[%s660 + $0xb8] sm:$0xff]
        %v3154 = vld [vmem:[%s660 + $0xc0] sm:$0xff]
        %v3155 = vld [vmem:[%s660 + $0xc8] sm:$0xff]
        %v3156 = vld [vmem:[%s660 + $0xd0] sm:$0xff]
        %v3157 = vld [vmem:[%s660 + $0xd8] sm:$0xff]
        %v3158 = vld [vmem:[%s660 + $0xe0] sm:$0xff]
        %v3159 = vld [vmem:[%s660 + $0xe8] sm:$0xff]
        %v3160 = vld [vmem:[%s660 + $0xf0] sm:$0xff]
        %v3161 = vld [vmem:[%s660 + $0xf8] sm:$0xff]
        %v3162 = vld [vmem:[%s660 + $0x100] sm:$0xff]
        %v3163 = vld [vmem:[%s660 + $0x108] sm:$0xff]
        %v3164 = vld [vmem:[%s660 + $0x110] sm:$0xff]
        %v3165 = vld [vmem:[%s660 + $0x118] sm:$0xff]
        %v3166 = vld [vmem:[%s660 + $0x120] sm:$0xff]
        %v3167 = vld [vmem:[%s660 + $0x128] sm:$0xff]
        %v3168 = vld [vmem:[%s660 + $0x130] sm:$0xff]
        %v3169 = vld [vmem:[%s660 + $0x138] sm:$0xff]
        %v3170 = vld [vmem:[%s660 + $0x140] sm:$0xff]
        %v3171 = vld [vmem:[%s660 + $0x148] sm:$0xff]
        %v3172 = vld [vmem:[%s660 + $0x150] sm:$0xff]
        %v3173 = vld [vmem:[%s660 + $0x158] sm:$0xff]
        %v3174 = vld [vmem:[%s660 + $0x160] sm:$0xff]
        %v3175 = vld [vmem:[%s660 + $0x168] sm:$0xff]
        %v3176 = vld [vmem:[%s660 + $0x170] sm:$0xff]
        %v3177 = vld [vmem:[%s660 + $0x178] sm:$0xff]
        %v3178 = vld [vmem:[%s660 + $0x180] sm:$0xff]
        %v3179 = vld [vmem:[%s660 + $0x188] sm:$0xff]
        %v3180 = vld [vmem:[%s660 + $0x190] sm:$0xff]
        %v3181 = vld [vmem:[%s660 + $0x198] sm:$0xff]
        %v3182 = vld [vmem:[%s660 + $0x1a0] sm:$0xff]
        %v3183 = vld [vmem:[%s660 + $0x1a8] sm:$0xff]
        %v3184 = vld [vmem:[%s660 + $0x1b0] sm:$0xff]
        %v3185 = vld [vmem:[%s660 + $0x1b8] sm:$0xff]
        %v3186 = vld [vmem:[%s660 + $0x1c0] sm:$0xff]
        %v3187 = vld [vmem:[%s660 + $0x1c8] sm:$0xff]
        %v3188 = vld [vmem:[%s660 + $0x1d0] sm:$0xff]
        %v3189 = vld [vmem:[%s660 + $0x1d8] sm:$0xff]
        %v3190 = vld [vmem:[%s660 + $0x1e0] sm:$0xff]
        %v3191 = vld [vmem:[%s660 + $0x1e8] sm:$0xff]
        %v3192 = vld [vmem:[%s660 + $0x1f0] sm:$0xff]
        %v3193 = vld [vmem:[%s660 + $0x1f8] sm:$0xff]
        %v3194 = vld [vmem:[%s776] sm:$0xf]
        %v3196 = vlaneseq
        %v3197 = vshrl.u32 %v3196, 7
        %v3198 = vsub.s32 0, %v3197
        %v3199 = vrot.slane %v3194, %v3198
        %v3200 = vlaneseq
        %v3201 = vshrl.u32 %v3200, 7
        %v3202 = vsub.s32 1, %v3201
        %v3203 = vrot.slane %v3194, %v3202
        %v3204 = vlaneseq
        %v3205 = vshrl.u32 %v3204, 7
        %v3206 = vsub.s32 2, %v3205
        %v3207 = vrot.slane %v3194, %v3206
        %v3208 = vlaneseq
        %v3209 = vshrl.u32 %v3208, 7
        %v3210 = vsub.s32 3, %v3209
        %v3211 = vrot.slane %v3194, %v3210
        %3216 = vmatprep.subr.mxu0 %v3131
        %3217 = vmatpush1.msra.mxu0 %v3130
        %3218 = vmatprep.subr.mxu0 %v3135
        %3219 = vmatpush1.msra.mxu0 %v3134
        %3220 = vmatprep.subr.mxu0 %v3139
        %3221 = vmatpush1.msra.mxu0 %v3138
        %3222 = vmatprep.subr.mxu0 %v3143
        %3223 = vmatpush1.msra.mxu0 %v3142
        %3224 = vmatprep.subr.mxu0 %v3147
        %3225 = vmatpush1.msra.mxu0 %v3146
        %3226 = vmatprep.subr.mxu0 %v3151
        %3227 = vmatpush1.msra.mxu0 %v3150
        %3228 = vmatprep.subr.mxu0 %v3155
        %3229 = vmatpush1.msra.mxu0 %v3154
        %3230 = vmatprep.subr.mxu0 %v3159
        %3231 = vmatpush1.msra.mxu0 %v3158
        %3232 = vmatprep.subr.mxu0 %v3163
        %3233 = vmatpush1.msra.mxu0 %v3162
        %3234 = vmatprep.subr.mxu0 %v3167
        %3235 = vmatpush1.msra.mxu0 %v3166
        %3236 = vmatprep.subr.mxu0 %v3171
        %3237 = vmatpush1.msra.mxu0 %v3170
        %3238 = vmatprep.subr.mxu0 %v3175
        %3239 = vmatpush1.msra.mxu0 %v3174
        %3240 = vmatprep.subr.mxu0 %v3179
        %3241 = vmatpush1.msra.mxu0 %v3178
        %3242 = vmatprep.subr.mxu0 %v3183
        %3243 = vmatpush1.msra.mxu0 %v3182
        %3244 = vmatprep.subr.mxu0 %v3187
        %3245 = vmatpush1.msra.mxu0 %v3186
        %3246 = vmatprep.subr.mxu0 %v3191
        %3247 = vmatpush1.msra.mxu0 %v3190
        %3248 = vmatprep.subr.mxu0 0.0
        %3249 = vmatpush1.msra.mxu0 0.0
        %3250 = vmatprep.subr.mxu0 0.0
        %3251 = vmatpush1.msra.mxu0 0.0
        %3252 = vmatprep.subr.mxu0 0.0
        %3253 = vmatpush1.msra.mxu0 0.0
        %3254 = vmatprep.subr.mxu0 0.0
        %3255 = vmatpush1.msra.mxu0 0.0
        %3256 = vmatprep.subr.mxu0 0.0
        %3257 = vmatpush1.msra.mxu0 0.0
        %3258 = vmatprep.subr.mxu0 0.0
        %3259 = vmatpush1.msra.mxu0 0.0
        %3260 = vmatprep.subr.mxu0 0.0
        %3261 = vmatpush1.msra.mxu0 0.0
        %3262 = vmatprep.subr.mxu0 0.0
        %3263 = vmatpush1.msra.mxu0 0.0
        %3264 = vmatprep.subr.mxu0 0.0
        %3265 = vmatpush1.msra.mxu0 0.0
        %3266 = vmatprep.subr.mxu0 0.0
        %3267 = vmatpush1.msra.mxu0 0.0
        %3268 = vmatprep.subr.mxu0 0.0
        %3269 = vmatpush1.msra.mxu0 0.0
        %3270 = vmatprep.subr.mxu0 0.0
        %3271 = vmatpush1.msra.mxu0 0.0
        %3272 = vmatprep.subr.mxu0 0.0
        %3273 = vmatpush1.msra.mxu0 0.0
        %3274 = vmatprep.subr.mxu0 0.0
        %3275 = vmatpush1.msra.mxu0 0.0
        %3276 = vmatprep.subr.mxu0 0.0
        %3277 = vmatpush1.msra.mxu0 0.0
        %3278 = vmatprep.subr.mxu0 0.0
        %3279 = vmatpush1.msra.mxu0 0.0
        %3280 = vmatprep.mubr.f32.mxu0 0.0
        %3281 = vmatmul.mubr.f32.gmra.mrb[0].mxu0 %v3128
        %v3282 = vpop.f32.mrb[0].mxu0
        %v3283 = vadd.f32 %v3199, %v3282
        %v3284 = vpop.f32.mrb[0].mxu0
        %v3285 = vadd.f32 %v3203, %v3284
        %3286 = vmatprep.mubr.f32.mxu0 0.0
        %3287 = vmatmul.mubr.f32.gmra.mrb[0].mxu0 %v3129
        %v3288 = vpop.f32.mrb[0].mxu0
        %v3289 = vadd.f32 %v3199, %v3288
        %v3290 = vpop.f32.mrb[0].mxu0
        %v3291 = vadd.f32 %v3203, %v3290
        %3292 = vdwg.mxu0
        %3293 = vmatprep.subr.mxu0 %v3133
        %3294 = vmatpush1.msra.mxu0 %v3132
        %3295 = vmatprep.subr.mxu0 %v3137
        %3296 = vmatpush1.msra.mxu0 %v3136
        %3297 = vmatprep.subr.mxu0 %v3141
        %3298 = vmatpush1.msra.mxu0 %v3140
        %3299 = vmatprep.subr.mxu0 %v3145
        %3300 = vmatpush1.msra.mxu0 %v3144
        %3301 = vmatprep.subr.mxu0 %v3149
        %3302 = vmatpush1.msra.mxu0 %v3148
        %3303 = vmatprep.subr.mxu0 %v3153
        %3304 = vmatpush1.msra.mxu0 %v3152
        %3305 = vmatprep.subr.mxu0 %v3157
        %3306 = vmatpush1.msra.mxu0 %v3156
        %3307 = vmatprep.subr.mxu0 %v3161
        %3308 = vmatpush1.msra.mxu0 %v3160
        %3309 = vmatprep.subr.mxu0 %v3165
        %3310 = vmatpush1.msra.mxu0 %v3164
        %3311 = vmatprep.subr.mxu0 %v3169
        %3312 = vmatpush1.msra.mxu0 %v3168
        %3313 = vmatprep.subr.mxu0 %v3173
        %3314 = vmatpush1.msra.mxu0 %v3172
        %3315 = vmatprep.subr.mxu0 %v3177
        %3316 = vmatpush1.msra.mxu0 %v3176
        %3317 = vmatprep.subr.mxu0 %v3181
        %3318 = vmatpush1.msra.mxu0 %v3180
        %3319 = vmatprep.subr.mxu0 %v3185
        %3320 = vmatpush1.msra.mxu0 %v3184
        %3321 = vmatprep.subr.mxu0 %v3189
        %3322 = vmatpush1.msra.mxu0 %v3188
        %3323 = vmatprep.subr.mxu0 %v3193
        %3324 = vmatpush1.msra.mxu0 %v3192
        %3325 = vmatprep.subr.mxu0 0.0
        %3326 = vmatpush1.msra.mxu0 0.0
        %3327 = vmatprep.subr.mxu0 0.0
        %3328 = vmatpush1.msra.mxu0 0.0
        %3329 = vmatprep.subr.mxu0 0.0
        %3330 = vmatpush1.msra.mxu0 0.0
        %3331 = vmatprep.subr.mxu0 0.0
        %3332 = vmatpush1.msra.mxu0 0.0
        %3333 = vmatprep.subr.mxu0 0.0
        %3334 = vmatpush1.msra.mxu0 0.0
        %3335 = vmatprep.subr.mxu0 0.0
        %3336 = vmatpush1.msra.mxu0 0.0
        %3337 = vmatprep.subr.mxu0 0.0
        %3338 = vmatpush1.msra.mxu0 0.0
        %3339 = vmatprep.subr.mxu0 0.0
        %3340 = vmatpush1.msra.mxu0 0.0
        %3341 = vmatprep.subr.mxu0 0.0
        %3342 = vmatpush1.msra.mxu0 0.0
        %3343 = vmatprep.subr.mxu0 0.0
        %3344 = vmatpush1.msra.mxu0 0.0
        %3345 = vmatprep.subr.mxu0 0.0
        %3346 = vmatpush1.msra.mxu0 0.0
        %3347 = vmatprep.subr.mxu0 0.0
        %3348 = vmatpush1.msra.mxu0 0.0
        %3349 = vmatprep.subr.mxu0 0.0
        %3350 = vmatpush1.msra.mxu0 0.0
        %3351 = vmatprep.subr.mxu0 0.0
        %3352 = vmatpush1.msra.mxu0 0.0
        %3353 = vmatprep.subr.mxu0 0.0
        %3354 = vmatpush1.msra.mxu0 0.0
        %3355 = vmatprep.subr.mxu0 0.0
        %3356 = vmatpush1.msra.mxu0 0.0
        %3357 = vmatprep.mubr.f32.mxu0 0.0
        %3358 = vmatmul.mubr.f32.gmra.mrb[0].mxu0 %v3128
        %v3359 = vpop.f32.mrb[0].mxu0
        %v3360 = vadd.f32 %v3207, %v3359
        %v3361 = vpop.f32.mrb[0].mxu0
        %v3362 = vadd.f32 %v3211, %v3361
        %3363 = vmatprep.mubr.f32.mxu0 0.0
        %3364 = vmatmul.mubr.f32.gmra.mrb[0].mxu0 %v3129
        %v3365 = vpop.f32.mrb[0].mxu0
        %v3366 = vadd.f32 %v3207, %v3365
        %v3367 = vpop.f32.mrb[0].mxu0
        %v3368 = vadd.f32 %v3211, %v3367
        %3369 = vdwg.mxu0
        %v3370 = vmul.f32 %v3283, 1.702
        %v3371 = vmul.f32 %v3285, 1.702
        %v3372 = vmul.f32 %v3360, 1.702
        %v3373 = vmul.f32 %v3362, 1.702
        %v3374 = vmul.f32 %v3289, 1.702
        %v3375 = vmul.f32 %v3291, 1.702
        %v3376 = vmul.f32 %v3366, 1.702
        %v3377 = vmul.f32 %v3368, 1.702
        %v3378 = vxor.u32 %v3370, 2147483648
        %v3379 = vxor.u32 %v3371, 2147483648
        %v3380 = vxor.u32 %v3372, 2147483648
        %v3381 = vxor.u32 %v3373, 2147483648
        %v3382 = vxor.u32 %v3374, 2147483648
        %v3383 = vxor.u32 %v3375, 2147483648
        %v3384 = vxor.u32 %v3376, 2147483648
        %v3385 = vxor.u32 %v3377, 2147483648
        %v3386 = vmul.f32 %v3378, 1.442695
        %v3387 = vpow.pop %v3386
        %v3388 = vmul.f32 %v3379, 1.442695
        %v3389 = vpow.pop %v3388
        %v3390 = vmul.f32 %v3380, 1.442695
        %v3391 = vpow.pop %v3390
        %v3392 = vmul.f32 %v3381, 1.442695
        %v3393 = vpow.pop %v3392
        %v3394 = vmul.f32 %v3382, 1.442695
        %v3395 = vpow.pop %v3394
        %v3396 = vmul.f32 %v3383, 1.442695
        %v3397 = vpow.pop %v3396
        %v3398 = vmul.f32 %v3384, 1.442695
        %v3399 = vpow.pop %v3398
        %v3400 = vmul.f32 %v3385, 1.442695
        %v3401 = vpow.pop %v3400
        %v3402 = vadd.f32 %v3387, 1.0
        %v3403 = vadd.f32 %v3389, 1.0
        %v3404 = vadd.f32 %v3391, 1.0
        %v3405 = vadd.f32 %v3393, 1.0
        %v3406 = vadd.f32 %v3395, 1.0
        %v3407 = vadd.f32 %v3397, 1.0
        %v3408 = vadd.f32 %v3399, 1.0
        %v3409 = vadd.f32 %v3401, 1.0
        %v3410 = vrcp.pop %v3402
        %v3411 = vmul.f32 1.0, %v3410
        %v3412 = vrcp.pop %v3403
        %v3413 = vmul.f32 1.0, %v3412
        %v3414 = vrcp.pop %v3404
        %v3415 = vmul.f32 1.0, %v3414
        %v3416 = vrcp.pop %v3405
        %v3417 = vmul.f32 1.0, %v3416
        %v3418 = vrcp.pop %v3406
        %v3419 = vmul.f32 1.0, %v3418
        %v3420 = vrcp.pop %v3407
        %v3421 = vmul.f32 1.0, %v3420
        %v3422 = vrcp.pop %v3408
        %v3423 = vmul.f32 1.0, %v3422
        %v3424 = vrcp.pop %v3409
        %v3425 = vmul.f32 1.0, %v3424
        %v3426 = vmul.f32 %v3283, %v3411
        %v3427 = vmul.f32 %v3285, %v3413
        %v3428 = vmul.f32 %v3360, %v3415
        %v3429 = vmul.f32 %v3362, %v3417
        %v3430 = vmul.f32 %v3289, %v3419
        %v3431 = vmul.f32 %v3291, %v3421
        %v3432 = vmul.f32 %v3366, %v3423
        %v3433 = vmul.f32 %v3368, %v3425
        %v3434 = vld [vmem:[%s669] sm:$0xff]
        %v3435 = vld [vmem:[%s669 + $0x8] sm:$0xff]
        %v3436 = vld [vmem:[%s669 + $0x10] sm:$0xff]
        %v3437 = vld [vmem:[%s669 + $0x18] sm:$0xff]
        %v3438 = vld [vmem:[%s669 + $0x20] sm:$0xff]
        %v3439 = vld [vmem:[%s669 + $0x28] sm:$0xff]
        %v3440 = vld [vmem:[%s669 + $0x30] sm:$0xff]
        %v3441 = vld [vmem:[%s669 + $0x38] sm:$0xff]
        %v3442 = vld [vmem:[%s669 + $0x40] sm:$0xff]
        %v3443 = vld [vmem:[%s669 + $0x48] sm:$0xff]
        %v3444 = vld [vmem:[%s669 + $0x50] sm:$0xff]
        %v3445 = vld [vmem:[%s669 + $0x58] sm:$0xff]
        %v3446 = vld [vmem:[%s669 + $0x60] sm:$0xff]
        %v3447 = vld [vmem:[%s669 + $0x68] sm:$0xff]
        %v3448 = vld [vmem:[%s669 + $0x70] sm:$0xff]
        %v3449 = vld [vmem:[%s669 + $0x78] sm:$0xff]
        %v3450 = vld [vmem:[%s669 + $0x80] sm:$0xff]
        %v3451 = vld [vmem:[%s669 + $0x88] sm:$0xff]
        %v3452 = vld [vmem:[%s669 + $0x90] sm:$0xff]
        %v3453 = vld [vmem:[%s669 + $0x98] sm:$0xff]
        %v3454 = vld [vmem:[%s669 + $0xa0] sm:$0xff]
        %v3455 = vld [vmem:[%s669 + $0xa8] sm:$0xff]
        %v3456 = vld [vmem:[%s669 + $0xb0] sm:$0xff]
        %v3457 = vld [vmem:[%s669 + $0xb8] sm:$0xff]
        %v3458 = vld [vmem:[%s669 + $0xc0] sm:$0xff]
        %v3459 = vld [vmem:[%s669 + $0xc8] sm:$0xff]
        %v3460 = vld [vmem:[%s669 + $0xd0] sm:$0xff]
        %v3461 = vld [vmem:[%s669 + $0xd8] sm:$0xff]
        %v3462 = vld [vmem:[%s669 + $0xe0] sm:$0xff]
        %v3463 = vld [vmem:[%s669 + $0xe8] sm:$0xff]
        %v3464 = vld [vmem:[%s669 + $0xf0] sm:$0xff]
        %v3465 = vld [vmem:[%s669 + $0xf8] sm:$0xff]
        %v3466 = vld [vmem:[%s669 + $0x100] sm:$0xff]
        %v3467 = vld [vmem:[%s669 + $0x108] sm:$0xff]
        %v3468 = vld [vmem:[%s669 + $0x110] sm:$0xff]
        %v3469 = vld [vmem:[%s669 + $0x118] sm:$0xff]
        %v3470 = vld [vmem:[%s669 + $0x120] sm:$0xff]
        %v3471 = vld [vmem:[%s669 + $0x128] sm:$0xff]
        %v3472 = vld [vmem:[%s669 + $0x130] sm:$0xff]
        %v3473 = vld [vmem:[%s669 + $0x138] sm:$0xff]
        %v3474 = vld [vmem:[%s669 + $0x140] sm:$0xff]
        %v3475 = vld [vmem:[%s669 + $0x148] sm:$0xff]
        %v3476 = vld [vmem:[%s669 + $0x150] sm:$0xff]
        %v3477 = vld [vmem:[%s669 + $0x158] sm:$0xff]
        %v3478 = vld [vmem:[%s669 + $0x160] sm:$0xff]
        %v3479 = vld [vmem:[%s669 + $0x168] sm:$0xff]
        %v3480 = vld [vmem:[%s669 + $0x170] sm:$0xff]
        %v3481 = vld [vmem:[%s669 + $0x178] sm:$0xff]
        %v3482 = vld [vmem:[%s669 + $0x180] sm:$0xff]
        %v3483 = vld [vmem:[%s669 + $0x188] sm:$0xff]
        %v3484 = vld [vmem:[%s669 + $0x190] sm:$0xff]
        %v3485 = vld [vmem:[%s669 + $0x198] sm:$0xff]
        %v3486 = vld [vmem:[%s669 + $0x1a0] sm:$0xff]
        %v3487 = vld [vmem:[%s669 + $0x1a8] sm:$0xff]
        %v3488 = vld [vmem:[%s669 + $0x1b0] sm:$0xff]
        %v3489 = vld [vmem:[%s669 + $0x1b8] sm:$0xff]
        %v3490 = vld [vmem:[%s669 + $0x1c0] sm:$0xff]
        %v3491 = vld [vmem:[%s669 + $0x1c8] sm:$0xff]
        %v3492 = vld [vmem:[%s669 + $0x1d0] sm:$0xff]
        %v3493 = vld [vmem:[%s669 + $0x1d8] sm:$0xff]
        %v3494 = vld [vmem:[%s669 + $0x1e0] sm:$0xff]
        %v3495 = vld [vmem:[%s669 + $0x1e8] sm:$0xff]
        %v3496 = vld [vmem:[%s669 + $0x1f0] sm:$0xff]
        %v3497 = vld [vmem:[%s669 + $0x1f8] sm:$0xff]
        %v3498 = vld [vmem:[%s779] sm:$0x1]
        %v3500 = vlaneseq
        %v3501 = vshrl.u32 %v3500, 7
        %v3502 = vsub.s32 0, %v3501
        %v3503 = vrot.slane %v3498, %v3502
        %3505 = vmatprep.subr.mxu0 0.0
        %3506 = vmatpush1.msra.mxu0 %v3434
        %3507 = vmatprep.subr.mxu0 0.0
        %3508 = vmatpush1.msra.mxu0 %v3435
        %3509 = vmatprep.subr.mxu0 0.0
        %3510 = vmatpush1.msra.mxu0 %v3436
        %3511 = vmatprep.subr.mxu0 0.0
        %3512 = vmatpush1.msra.mxu0 %v3437
        %3513 = vmatprep.subr.mxu0 0.0
        %3514 = vmatpush1.msra.mxu0 %v3438
        %3515 = vmatprep.subr.mxu0 0.0
        %3516 = vmatpush1.msra.mxu0 %v3439
        %3517 = vmatprep.subr.mxu0 0.0
        %3518 = vmatpush1.msra.mxu0 %v3440
        %3519 = vmatprep.subr.mxu0 0.0
        %3520 = vmatpush1.msra.mxu0 %v3441
        %3521 = vmatprep.subr.mxu0 0.0
        %3522 = vmatpush1.msra.mxu0 %v3442
        %3523 = vmatprep.subr.mxu0 0.0
        %3524 = vmatpush1.msra.mxu0 %v3443
        %3525 = vmatprep.subr.mxu0 0.0
        %3526 = vmatpush1.msra.mxu0 %v3444
        %3527 = vmatprep.subr.mxu0 0.0
        %3528 = vmatpush1.msra.mxu0 %v3445
        %3529 = vmatprep.subr.mxu0 0.0
        %3530 = vmatpush1.msra.mxu0 %v3446
        %3531 = vmatprep.subr.mxu0 0.0
        %3532 = vmatpush1.msra.mxu0 %v3447
        %3533 = vmatprep.subr.mxu0 0.0
        %3534 = vmatpush1.msra.mxu0 %v3448
        %3535 = vmatprep.subr.mxu0 0.0
        %3536 = vmatpush1.msra.mxu0 %v3449
        %3537 = vmatprep.subr.mxu0 0.0
        %3538 = vmatpush1.msra.mxu0 %v3450
        %3539 = vmatprep.subr.mxu0 0.0
        %3540 = vmatpush1.msra.mxu0 %v3451
        %3541 = vmatprep.subr.mxu0 0.0
        %3542 = vmatpush1.msra.mxu0 %v3452
        %3543 = vmatprep.subr.mxu0 0.0
        %3544 = vmatpush1.msra.mxu0 %v3453
        %3545 = vmatprep.subr.mxu0 0.0
        %3546 = vmatpush1.msra.mxu0 %v3454
        %3547 = vmatprep.subr.mxu0 0.0
        %3548 = vmatpush1.msra.mxu0 %v3455
        %3549 = vmatprep.subr.mxu0 0.0
        %3550 = vmatpush1.msra.mxu0 %v3456
        %3551 = vmatprep.subr.mxu0 0.0
        %3552 = vmatpush1.msra.mxu0 %v3457
        %3553 = vmatprep.subr.mxu0 0.0
        %3554 = vmatpush1.msra.mxu0 %v3458
        %3555 = vmatprep.subr.mxu0 0.0
        %3556 = vmatpush1.msra.mxu0 %v3459
        %3557 = vmatprep.subr.mxu0 0.0
        %3558 = vmatpush1.msra.mxu0 %v3460
        %3559 = vmatprep.subr.mxu0 0.0
        %3560 = vmatpush1.msra.mxu0 %v3461
        %3561 = vmatprep.subr.mxu0 0.0
        %3562 = vmatpush1.msra.mxu0 %v3462
        %3563 = vmatprep.subr.mxu0 0.0
        %3564 = vmatpush1.msra.mxu0 %v3463
        %3565 = vmatprep.subr.mxu0 0.0
        %3566 = vmatpush1.msra.mxu0 %v3464
        %3567 = vmatprep.subr.mxu0 0.0
        %3568 = vmatpush1.msra.mxu0 %v3465
        %3569 = vmatprep.mubr.f32.mxu0 %v3427
        %3570 = vmatmul.mubr.f32.gmra.mrb[0].mxu0 %v3426
        %v3571 = vpop.f32.mrb[0].mxu0
        %v3572 = vadd.f32 %v3503, %v3571
        %v3573 = vpop.f32.mrb[0].mxu0
        %3574 = vmatprep.mubr.f32.mxu0 %v3431
        %3575 = vmatmul.mubr.f32.gmra.mrb[0].mxu0 %v3430
        %v3576 = vpop.f32.mrb[0].mxu0
        %v3577 = vadd.f32 %v3503, %v3576
        %v3578 = vpop.f32.mrb[0].mxu0
        %3579 = vdwg.mxu0
        %3580 = vmatprep.subr.mxu0 0.0
        %3581 = vmatpush1.msra.mxu0 %v3466
        %3582 = vmatprep.subr.mxu0 0.0
        %3583 = vmatpush1.msra.mxu0 %v3467
        %3584 = vmatprep.subr.mxu0 0.0
        %3585 = vmatpush1.msra.mxu0 %v3468
        %3586 = vmatprep.subr.mxu0 0.0
        %3587 = vmatpush1.msra.mxu0 %v3469
        %3588 = vmatprep.subr.mxu0 0.0
        %3589 = vmatpush1.msra.mxu0 %v3470
        %3590 = vmatprep.subr.mxu0 0.0
        %3591 = vmatpush1.msra.mxu0 %v3471
        %3592 = vmatprep.subr.mxu0 0.0
        %3593 = vmatpush1.msra.mxu0 %v3472
        %3594 = vmatprep.subr.mxu0 0.0
        %3595 = vmatpush1.msra.mxu0 %v3473
        %3596 = vmatprep.subr.mxu0 0.0
        %3597 = vmatpush1.msra.mxu0 %v3474
        %3598 = vmatprep.subr.mxu0 0.0
        %3599 = vmatpush1.msra.mxu0 %v3475
        %3600 = vmatprep.subr.mxu0 0.0
        %3601 = vmatpush1.msra.mxu0 %v3476
        %3602 = vmatprep.subr.mxu0 0.0
        %3603 = vmatpush1.msra.mxu0 %v3477
        %3604 = vmatprep.subr.mxu0 0.0
        %3605 = vmatpush1.msra.mxu0 %v3478
        %3606 = vmatprep.subr.mxu0 0.0
        %3607 = vmatpush1.msra.mxu0 %v3479
        %3608 = vmatprep.subr.mxu0 0.0
        %3609 = vmatpush1.msra.mxu0 %v3480
        %3610 = vmatprep.subr.mxu0 0.0
        %3611 = vmatpush1.msra.mxu0 %v3481
        %3612 = vmatprep.subr.mxu0 0.0
        %3613 = vmatpush1.msra.mxu0 %v3482
        %3614 = vmatprep.subr.mxu0 0.0
        %3615 = vmatpush1.msra.mxu0 %v3483
        %3616 = vmatprep.subr.mxu0 0.0
        %3617 = vmatpush1.msra.mxu0 %v3484
        %3618 = vmatprep.subr.mxu0 0.0
        %3619 = vmatpush1.msra.mxu0 %v3485
        %3620 = vmatprep.subr.mxu0 0.0
        %3621 = vmatpush1.msra.mxu0 %v3486
        %3622 = vmatprep.subr.mxu0 0.0
        %3623 = vmatpush1.msra.mxu0 %v3487
        %3624 = vmatprep.subr.mxu0 0.0
        %3625 = vmatpush1.msra.mxu0 %v3488
        %3626 = vmatprep.subr.mxu0 0.0
        %3627 = vmatpush1.msra.mxu0 %v3489
        %3628 = vmatprep.subr.mxu0 0.0
        %3629 = vmatpush1.msra.mxu0 %v3490
        %3630 = vmatprep.subr.mxu0 0.0
        %3631 = vmatpush1.msra.mxu0 %v3491
        %3632 = vmatprep.subr.mxu0 0.0
        %3633 = vmatpush1.msra.mxu0 %v3492
        %3634 = vmatprep.subr.mxu0 0.0
        %3635 = vmatpush1.msra.mxu0 %v3493
        %3636 = vmatprep.subr.mxu0 0.0
        %3637 = vmatpush1.msra.mxu0 %v3494
        %3638 = vmatprep.subr.mxu0 0.0
        %3639 = vmatpush1.msra.mxu0 %v3495
        %3640 = vmatprep.subr.mxu0 0.0
        %3641 = vmatpush1.msra.mxu0 %v3496
        %3642 = vmatprep.subr.mxu0 0.0
        %3643 = vmatpush1.msra.mxu0 %v3497
        %3644 = vmatprep.mubr.f32.mxu0 %v3429
        %3645 = vmatmul.mubr.f32.gmra.mrb[0].mxu0 %v3428
        %v3646 = vpop.f32.mrb[0].mxu0
        %v3647 = vadd.f32 %v3572, %v3646
        %v3648 = vpop.f32.mrb[0].mxu0
        %3649 = vmatprep.mubr.f32.mxu0 %v3433
        %3650 = vmatmul.mubr.f32.gmra.mrb[0].mxu0 %v3432
        %v3651 = vpop.f32.mrb[0].mxu0
        %v3652 = vadd.f32 %v3577, %v3651
        %v3653 = vpop.f32.mrb[0].mxu0
        %3654 = vdwg.mxu0
        %v3655 = vadd.f32 %v3088, %v3647
        %v3656 = vadd.f32 %v3089, %v3652
        %3657 = vst [vmem:[#allocation2] sm:$0xff] %v3655
        %3658 = vst [vmem:[#allocation2 + $0x8] sm:$0xff] %v3656
        %p3659 = scmp.eq.s32.totalorder %s44, 1
        // Predicated region
        $region105: #{tpu_custom_call.1} parent=71 // pred_check
          %p3660 = pneg %p3659
        $region106: #{tpu_custom_call.1} parent=71 // pred_check_branch
          %3662 = sbr.rel (%p3660) target = $region108
        $region107: #{tpu_custom_call.1} parent=71 // pred_region
          %3663 = vst [vmem:[%s759] sm:$0xff] %v3655
          %3664 = vst [vmem:[%s759 + $0x8] sm:$0xff] %v3656
        $region108: #{tpu_custom_call.1} parent=71 // pred_fallthru
          _
        %s3665 = sand.u32 %s397, 1
        %s3666 = scalar_lea.sflag [#allocation5], %s3665
        %s3667 = sand.u32 %s397, 1
        %s3668 = smul.addr %s3667, 16
        %s3669 = scalar_lea.vmem [#allocation15], %s3668
        // Predicated region
        $region109: #{tpu_custom_call.1} parent=71 // pred_check
          %p3670 = pneg %p407
        $region110: #{tpu_custom_call.1} parent=71 // pred_check_branch
          %3672 = sbr.rel (%p3670) target = $region112
        $region111: #{tpu_custom_call.1} parent=71 // pred_region
          %s3674 = ssub.s32 256, 256
          %3675 = vsyncadd %s3666, %s3674
          %s3676 = smul.addr %s43, 2
          %s3677 = smul.addr %s3676, 128
          %s3678 = scalar_lea.hbm %s13, %s3677
          %s3679 = sshll.u32 %s3669, 4
          %s3680 = int_to_ptr.vmem [resolvable:$true] %s3679
          %3685 = dma.vmem_to_hbm [thread:$0]  %s3680, 256, %s3678, %s3666, 128, 128, 8
        $region112: #{tpu_custom_call.1} parent=71 // pred_fallthru
          _
      $region72: #{tpu_custom_call.1} parent=5 // pred_fallthru
        _
      %p3686 = scmp.le.s32.totalorder 2, %s34
      // Predicated region
      $region113: #{tpu_custom_call.1} parent=5 // pred_check
        %p3687 = pneg %p3686
      $region114: #{tpu_custom_call.1} parent=5 // pred_check_branch
        %3689 = sbr.rel (%p3687) target = $region116
      $region115: #{tpu_custom_call.1} parent=5 // pred_region
        %s3690 = ssub.s32 %s34, 2
        // Predicated region
        $region117: #{tpu_custom_call.1} parent=115 // pred_check
          %p3691 = pneg %p413
        $region118: #{tpu_custom_call.1} parent=115 // pred_check_branch
          %3693 = sbr.rel (%p3691) target = $region120
        $region119: #{tpu_custom_call.1} parent=115 // pred_region
          %s3694 = sand.u32 %s398, 1
          %s3695 = scalar_lea.sflag [#allocation5], %s3694
          %s3696 = sand.u32 %s398, 1
          %s3697 = smul.addr %s3696, 16
          %s3698 = scalar_lea.vmem [#allocation15], %s3697
          %3699 = dma.done %s3695, 256
        $region120: #{tpu_custom_call.1} parent=115 // pred_fallthru
          _
      $region116: #{tpu_custom_call.1} parent=5 // pred_fallthru
        _
    $region6: #{tpu_custom_call.1} parent=1 // loop_footer
      %s38 = sadd.s32 1, %s34
    $region7: #{tpu_custom_call.1} parent=1 // loop_footer_branch
      %33 = sbr.rel target = $region3
    $region8: #{tpu_custom_call.1} parent=1 // loop_exit
      _
    %3700 = vsyncpa [#allocation4], 1
    %s3701 = scalar_lea.sflag [#allocation4], 1
    %3702 = vsyncpa %s3701, 1
    %3703 = vsyncpa [#allocation7], 1
    %s3704 = scalar_lea.sflag [#allocation7], 1
    %3705 = vsyncpa %s3704, 1
    %3706 = vsyncpa [#allocation10], 1
    %s3707 = scalar_lea.sflag [#allocation10], 1
    %3708 = vsyncpa %s3707, 1
    %3709 = vsyncpa [#allocation13], 1
    %s3710 = scalar_lea.sflag [#allocation13], 1
    %3711 = vsyncpa %s3710, 1
    %3712 = vsyncpa [#allocation5], 1
    %s3713 = scalar_lea.sflag [#allocation5], 1
    %3714 = vsyncpa %s3713, 1

</llo_original>
